<compile_context>
chip_gen: v6e
topology: v6e:2x2x1
jax: 0.10.0
libtpu: 0.0.40
codegen_flags: <defaults>
</compile_context>

<pallas_src>
import jax
import jax.numpy as jnp
from jax import lax
from jax.experimental import pallas as pl
from jax.experimental.pallas import tpu as pltpu


def _sigmoid(v):
    # exp -> EUP, approx reciprocal -> EUP: keeps the serial per-step chain off
    # the VALU divide.
    return pl.reciprocal(1.0 + jnp.exp(-v), approx=True)


def _bidir_recurrence(gx_f, gx_b, whh, h2, c2, fseq_ref, bseq_ref):
    """Fused forward+backward LSTM recurrence for one layer (batch = 1).

    gx_f / gx_b : (T, 4H) precomputed input projections (+ fused bias) per dir.
    whh         : (H, 8H) = [Whh_fwd^T | Whh_bwd^T] (lane-concatenated in init).
    h2, c2      : (2, H) carries; row 0 = forward, row 1 = backward.
    fseq_ref    : (T, H) ref receiving forward hidden states in time order.
    bseq_ref    : (T, H) ref receiving backward hidden states in time order.
    Returns final (h2, c2).
    """
    T, G = gx_f.shape
    H = G // 4
    row_is_fwd = lax.broadcasted_iota(jnp.int32, (2, 4 * H), 0) == 0

    # Fully unrolled: T is small & static; gives the scheduler cross-step
    # visibility and keeps every slice/store index static.
    for t in range(T):
        tb = T - 1 - t                                  # backward position
        gf = gx_f[t:t + 1, :]                           # (1, 4H)
        gb = gx_b[tb:tb + 1, :]                         # (1, 4H)
        gpre = jnp.where(row_is_fwd,
                         jnp.broadcast_to(gf, (2, 4 * H)),
                         jnp.broadcast_to(gb, (2, 4 * H)))
        # One MXU matmul drives both directions; select each direction's block.
        hw = jnp.dot(h2, whh, preferred_element_type=jnp.float32)      # (2, 8H)
        g = gpre + jnp.where(row_is_fwd, hw[:, :4 * H], hw[:, 4 * H:])  # (2, 4H)
        sg = _sigmoid(g)                                # full-width EUP
        th = jnp.tanh(g)                                # full-width EUP
        i_g = sg[:, 0:H]
        f_g = sg[:, H:2 * H]
        g_g = th[:, 2 * H:3 * H]
        o_g = sg[:, 3 * H:4 * H]
        c2 = f_g * c2 + i_g * g_g
        h2 = o_g * jnp.tanh(c2)
        fseq_ref[pl.ds(t, 1), :] = h2[0:1, :]
        bseq_ref[pl.ds(tb, 1), :] = h2[1:2, :]
    return h2, c2


def _bilstm_parser_kernel(words_ref, tags_ref,
                          ew0f_ref, et0f_ref, ew0b_ref, et0b_ref,
                          whh0_ref, b0_ref,
                          wih1f_ref, wih1b_ref, whh1_ref, b1_ref,
                          h0_ref, c0_ref,
                          hseqf_ref, hseqb_ref, hn_ref, cn_ref,
                          fseq0_ref, bseq0_ref):
    f32 = jnp.float32
    T = words_ref.shape[0]
    H = h0_ref.shape[1]
    Vp = ew0f_ref.shape[0]          # padded vocabulary size
    NTp = et0f_ref.shape[0]         # padded tag-vocabulary size

    # ---- Embedding lookup + concat + layer-0 input projection (fused) ------
    # x = [wordEmb | tagEmb] is only consumed by x @ Wih0^T, so gather directly
    # from the pre-projected tables (table @ Wih0^T, built once in __init__)
    # with one-hot MXU matmuls; x never materializes.
    w_oh = (words_ref[...] ==
            lax.broadcasted_iota(jnp.int32, (T, Vp), 1)).astype(f32)    # (T,Vp)
    t_oh = (tags_ref[...] ==
            lax.broadcasted_iota(jnp.int32, (T, NTp), 1)).astype(f32)   # (T,NTp)

    b0 = b0_ref[...]
    b1 = b1_ref[...]
    h0 = h0_ref[...]
    c0 = c0_ref[...]

    gx0_f = (jnp.dot(w_oh, ew0f_ref[...], preferred_element_type=f32)
             + jnp.dot(t_oh, et0f_ref[...], preferred_element_type=f32)
             + b0[0:1, :])
    gx0_b = (jnp.dot(w_oh, ew0b_ref[...], preferred_element_type=f32)
             + jnp.dot(t_oh, et0b_ref[...], preferred_element_type=f32)
             + b0[1:2, :])

    # ---- Layer 0 (both directions fused) ------------------------------------
    h2, c2 = _bidir_recurrence(gx0_f, gx0_b, whh0_ref[...],
                               h0[0:2, :], c0[0:2, :], fseq0_ref, bseq0_ref)
    hn_ref[pl.ds(0, 2), :] = h2
    cn_ref[pl.ds(0, 2), :] = c2

    # ---- Layer 1 (input = layer-0 sequence, kept resident in VMEM) ----------
    xf = fseq0_ref[...]                     # (T, H) forward half of layer-0 out
    xb = bseq0_ref[...]                     # (T, H) backward half
    gx1_f = (jnp.dot(xf, wih1f_ref[pl.ds(0, H), :], preferred_element_type=f32)
             + jnp.dot(xb, wih1f_ref[pl.ds(H, H), :], preferred_element_type=f32)
             + b1[0:1, :])
    gx1_b = (jnp.dot(xf, wih1b_ref[pl.ds(0, H), :], preferred_element_type=f32)
             + jnp.dot(xb, wih1b_ref[pl.ds(H, H), :], preferred_element_type=f32)
             + b1[1:2, :])
    h2, c2 = _bidir_recurrence(gx1_f, gx1_b, whh1_ref[...],
                               h0[2:4, :], c0[2:4, :], hseqf_ref, hseqb_ref)
    hn_ref[pl.ds(2, 2), :] = h2
    cn_ref[pl.ds(2, 2), :] = c2


def _full_spec(shape):
    nd = len(shape)
    return pl.BlockSpec(shape, lambda i, _nd=nd: (0,) * _nd)


@jax.jit
def bilstm_parser_forward(words, tags, p):
    """Runs the fused embedding + 2-layer BiLSTM kernel.

    words, tags : (T,) int ids.   p : dict of pre-packed parameters.
    Returns (hVector (T, 1, 2H), hN (4, 1, H), cN (4, 1, H)).
    """
    T = words.shape[0]
    H = p["h0"].shape[-1]
    w2 = words.reshape(T, 1).astype(jnp.int32)
    t2 = tags.reshape(T, 1).astype(jnp.int32)
    h0 = p["h0"].reshape(4, H)
    c0 = p["c0"].reshape(4, H)

    out_shape = (
        jax.ShapeDtypeStruct((T, H), jnp.float32),   # top-layer forward h-seq
        jax.ShapeDtypeStruct((T, H), jnp.float32),   # top-layer backward h-seq
        jax.ShapeDtypeStruct((4, H), jnp.float32),   # final hidden states
        jax.ShapeDtypeStruct((4, H), jnp.float32),   # final cell states
    )
    operands = (w2, t2, p["ew0f"], p["et0f"], p["ew0b"], p["et0b"],
                p["whh0"], p["b0"], p["wih1f"], p["wih1b"], p["whh1"], p["b1"],
                h0, c0)
    hseq_f, hseq_b, h_n, c_n = pl.pallas_call(
        _bilstm_parser_kernel,
        out_shape=out_shape,
        grid=(1,),
        in_specs=[_full_spec(x.shape) for x in operands],
        out_specs=tuple(_full_spec(s.shape) for s in out_shape),
        scratch_shapes=[pltpu.VMEM((T, H), jnp.float32),   # layer-0 fwd seq
                        pltpu.VMEM((T, H), jnp.float32)],  # layer-0 bwd seq
        compiler_params=pltpu.CompilerParams(
            dimension_semantics=("arbitrary",)),
    )(*operands)

    h_vector = jnp.concatenate([hseq_f, hseq_b], axis=1).reshape(T, 1, 2 * H)
    return h_vector, h_n.reshape(4, 1, H), c_n.reshape(4, 1, H)


def _round_up(x, m):
    return ((x + m - 1) // m) * m


class DependencyParseModel:
    """JAX/Pallas re-implementation of the PyTorch module's forward pass."""

    def __init__(self, word_embeddings_dim, tag_embeddings_dim, vocabulary_size,
                 tag_uniqueCount, label_uniqueCount, key):
        del label_uniqueCount  # unused in forward (matches the PyTorch module)
        self.input_size = word_embeddings_dim + tag_embeddings_dim
        self.hidden_size = self.input_size
        self.n_layers = 2
        self.n_directions = 2
        self.batch = 1
        H = self.hidden_size
        Dw, Dt = word_embeddings_dim, tag_embeddings_dim

        keys = jax.random.split(key, 4 + 4 * self.n_layers * self.n_directions)
        k_iter = iter(keys)

        # Embedding tables (nn.Embedding init ~ N(0, 1); deterministic here).
        self.word_table = jax.random.normal(
            next(k_iter), (vocabulary_size, Dw), jnp.float32)
        self.tag_table = jax.random.normal(
            next(k_iter), (tag_uniqueCount, Dt), jnp.float32)

        # LSTM parameters, PyTorch shapes: w_ih (4H, in), w_hh (4H, H), b (4H,)
        scale = 1.0 / (H ** 0.5)
        raw = {}
        for layer in range(self.n_layers):
            in_sz = self.input_size if layer == 0 else 2 * H
            for direction in range(self.n_directions):
                kw = jax.random.split(next(k_iter), 4)
                w_ih = jax.random.uniform(kw[0], (4 * H, in_sz), jnp.float32,
                                          -scale, scale)
                w_hh = jax.random.uniform(kw[1], (4 * H, H), jnp.float32,
                                          -scale, scale)
                b_ih = jax.random.uniform(kw[2], (4 * H,), jnp.float32,
                                          -scale, scale)
                b_hh = jax.random.uniform(kw[3], (4 * H,), jnp.float32,
                                          -scale, scale)
                raw[(layer, direction)] = (w_ih, w_hh, b_ih, b_hh)

        # ---- One-time packing (hoisted out of forward, per perf review) -----
        # Pad the tiny tables along the vocab axis so the in-kernel one-hot
        # gather matmuls are fully aligned, and pre-fold them with the layer-0
        # input weights (the concatenated embedding x is only consumed there).
        Vp = _round_up(vocabulary_size, 128)
        NTp = _round_up(tag_uniqueCount, 128)
        wtab_p = jnp.zeros((Vp, Dw), jnp.float32).at[:vocabulary_size].set(
            self.word_table)
        ttab_p = jnp.zeros((NTp, Dt), jnp.float32).at[:tag_uniqueCount].set(
            self.tag_table)

        def prep_layer0(direction):
            w_ih, w_hh, b_ih, b_hh = raw[(0, direction)]
            wihT = w_ih.T                           # (I, 4H): rows 0:Dw = word
            ew = wtab_p @ wihT[0:Dw, :]             # (Vp, 4H)
            et = ttab_p @ wihT[Dw:, :]              # (NTp, 4H)
            return ew, et, w_hh.T, b_ih + b_hh

        ew0f, et0f, whh0f, bias0f = prep_layer0(0)
        ew0b, et0b, whh0b, bias0b = prep_layer0(1)

        def prep_layer1(direction):
            w_ih, w_hh, b_ih, b_hh = raw[(1, direction)]
            return w_ih.T, w_hh.T, b_ih + b_hh      # (2H,4H), (H,4H), (4H,)

        wih1f, whh1f, bias1f = prep_layer1(0)
        wih1b, whh1b, bias1b = prep_layer1(1)

        self.params = {
            "ew0f": ew0f, "et0f": et0f, "ew0b": ew0b, "et0b": et0b,
            # [Whh_fwd^T | Whh_bwd^T]: one (2,H)@(H,8H) matmul per step covers
            # both directions of the recurrence.
            "whh0": jnp.concatenate([whh0f, whh0b], axis=1),     # (H, 8H)
            "whh1": jnp.concatenate([whh1f, whh1b], axis=1),     # (H, 8H)
            "b0": jnp.stack([bias0f, bias0b]),                   # (2, 4H)
            "b1": jnp.stack([bias1f, bias1b]),                   # (2, 4H)
            "wih1f": wih1f, "wih1b": wih1b,                      # (2H, 4H)
        }

        # initHiddenCellState(): randn(nLayers*nDirections, batch, hiddenSize)
        self.hidden = jax.random.normal(
            next(k_iter), (self.n_layers * self.n_directions, self.batch, H),
            jnp.float32)
        self.cell = jax.random.normal(
            next(k_iter), (self.n_layers * self.n_directions, self.batch, H),
            jnp.float32)

    def forward(self, words_tensor, tags_tensor):
        p = dict(self.params)
        p["h0"] = self.hidden
        p["c0"] = self.cell
        h_vector, h_n, c_n = bilstm_parser_forward(words_tensor, tags_tensor, p)
        self.hidden, self.cell = h_n, c_n
        return h_vector                                          # (T, 1, 2H)


if __name__ == "__main__":
    key = jax.random.PRNGKey(0)
    k_model, k_words, k_tags = jax.random.split(key, 3)

    WORD_DIM = 16
    TAG_DIM = 16
    VOCAB = 50
    TAG_COUNT = 12
    LABEL_COUNT = 5   # unused in forward
    SEQ_LEN = 8

    model = DependencyParseModel(WORD_DIM, TAG_DIM, VOCAB, TAG_COUNT,
                                 LABEL_COUNT, k_model)

    words = jax.random.randint(k_words, (SEQ_LEN,), 0, VOCAB, dtype=jnp.int32)
    tags = jax.random.randint(k_tags, (SEQ_LEN,), 0, TAG_COUNT, dtype=jnp.int32)

    h_vector = model.forward(words, tags)
    h_vector = jax.block_until_ready(h_vector)

    assert h_vector.shape == (SEQ_LEN, 1, 2 * model.hidden_size)
    assert h_vector.dtype == jnp.float32
    assert bool(jnp.all(jnp.isfinite(h_vector)))
    print("KERNEL_OK")
</pallas_src>

<mosaic_0001>
module attributes {stable_mosaic.version = 11 : i64} {
  func.func @_bilstm_parser_kernel(%arg0: i32, %arg1: memref<8x1xi32, #tpu.memory_space<vmem>>, %arg2: memref<8x1xi32, #tpu.memory_space<vmem>>, %arg3: memref<128x128xf32, #tpu.memory_space<vmem>>, %arg4: memref<128x128xf32, #tpu.memory_space<vmem>>, %arg5: memref<128x128xf32, #tpu.memory_space<vmem>>, %arg6: memref<128x128xf32, #tpu.memory_space<vmem>>, %arg7: memref<32x256xf32, #tpu.memory_space<vmem>>, %arg8: memref<2x128xf32, #tpu.memory_space<vmem>>, %arg9: memref<64x128xf32, #tpu.memory_space<vmem>>, %arg10: memref<64x128xf32, #tpu.memory_space<vmem>>, %arg11: memref<32x256xf32, #tpu.memory_space<vmem>>, %arg12: memref<2x128xf32, #tpu.memory_space<vmem>>, %arg13: memref<4x32xf32, #tpu.memory_space<vmem>>, %arg14: memref<4x32xf32, #tpu.memory_space<vmem>>, %arg15: memref<8x32xf32, #tpu.memory_space<vmem>>, %arg16: memref<8x32xf32, #tpu.memory_space<vmem>>, %arg17: memref<4x32xf32, #tpu.memory_space<vmem>>, %arg18: memref<4x32xf32, #tpu.memory_space<vmem>>, %arg19: memref<8x32xf32, #tpu.memory_space<vmem>>, %arg20: memref<8x32xf32, #tpu.memory_space<vmem>>) attributes {dimension_semantics = [#tpu.dimension_semantics<arbitrary>], iteration_bounds = array<i64: 1>, scalar_prefetch = 0 : i64, scratch_operands = 2 : i64, tpu.core_type = #tpu.core_type<tc>, window_params = [{pipeline_mode = #tpu.pipeline_mode<synchronous>, transform_indices = @transform_0, window_bounds = array<i64: 8, 1>}, {pipeline_mode = #tpu.pipeline_mode<synchronous>, transform_indices = @transform_1, window_bounds = array<i64: 8, 1>}, {pipeline_mode = #tpu.pipeline_mode<synchronous>, transform_indices = @transform_2, window_bounds = array<i64: 128, 128>}, {pipeline_mode = #tpu.pipeline_mode<synchronous>, transform_indices = @transform_3, window_bounds = array<i64: 128, 128>}, {pipeline_mode = #tpu.pipeline_mode<synchronous>, transform_indices = @transform_4, window_bounds = array<i64: 128, 128>}, {pipeline_mode = #tpu.pipeline_mode<synchronous>, transform_indices = @transform_5, window_bounds = array<i64: 128, 128>}, {pipeline_mode = #tpu.pipeline_mode<synchronous>, transform_indices = @transform_6, window_bounds = array<i64: 32, 256>}, {pipeline_mode = #tpu.pipeline_mode<synchronous>, transform_indices = @transform_7, window_bounds = array<i64: 2, 128>}, {pipeline_mode = #tpu.pipeline_mode<synchronous>, transform_indices = @transform_8, window_bounds = array<i64: 64, 128>}, {pipeline_mode = #tpu.pipeline_mode<synchronous>, transform_indices = @transform_9, window_bounds = array<i64: 64, 128>}, {pipeline_mode = #tpu.pipeline_mode<synchronous>, transform_indices = @transform_10, window_bounds = array<i64: 32, 256>}, {pipeline_mode = #tpu.pipeline_mode<synchronous>, transform_indices = @transform_11, window_bounds = array<i64: 2, 128>}, {pipeline_mode = #tpu.pipeline_mode<synchronous>, transform_indices = @transform_12, window_bounds = array<i64: 4, 32>}, {pipeline_mode = #tpu.pipeline_mode<synchronous>, transform_indices = @transform_13, window_bounds = array<i64: 4, 32>}, {pipeline_mode = #tpu.pipeline_mode<synchronous>, transform_indices = @transform_14, window_bounds = array<i64: 8, 32>}, {pipeline_mode = #tpu.pipeline_mode<synchronous>, transform_indices = @transform_15, window_bounds = array<i64: 8, 32>}, {pipeline_mode = #tpu.pipeline_mode<synchronous>, transform_indices = @transform_16, window_bounds = array<i64: 4, 32>}, {pipeline_mode = #tpu.pipeline_mode<synchronous>, transform_indices = @transform_17, window_bounds = array<i64: 4, 32>}]} {
    %c0 = arith.constant 0 : index
    %c0_0 = arith.constant 0 : index
    %0 = vector.load %arg1[%c0, %c0_0] : memref<8x1xi32, #tpu.memory_space<vmem>>, vector<8x1xi32>
    %1 = tpu.iota {dimensions = array<i32: 1>} : vector<8x128xi32>
    %2 = vector.broadcast %0 : vector<8x1xi32> to vector<8x128xi32>
    %3 = arith.cmpi eq, %2, %1 : vector<8x128xi32>
    %4 = arith.extui %3 : vector<8x128xi1> to vector<8x128xi32>
    %5 = arith.sitofp %4 : vector<8x128xi32> to vector<8x128xf32>
    %c0_1 = arith.constant 0 : index
    %c0_2 = arith.constant 0 : index
    %6 = vector.load %arg2[%c0_1, %c0_2] : memref<8x1xi32, #tpu.memory_space<vmem>>, vector<8x1xi32>
    %7 = tpu.iota {dimensions = array<i32: 1>} : vector<8x128xi32>
    %8 = vector.broadcast %6 : vector<8x1xi32> to vector<8x128xi32>
    %9 = arith.cmpi eq, %8, %7 : vector<8x128xi32>
    %10 = arith.extui %9 : vector<8x128xi1> to vector<8x128xi32>
    %11 = arith.sitofp %10 : vector<8x128xi32> to vector<8x128xf32>
    %c0_3 = arith.constant 0 : index
    %c0_4 = arith.constant 0 : index
    %12 = vector.load %arg8[%c0_3, %c0_4] : memref<2x128xf32, #tpu.memory_space<vmem>>, vector<2x128xf32>
    %c0_5 = arith.constant 0 : index
    %c0_6 = arith.constant 0 : index
    %13 = vector.load %arg12[%c0_5, %c0_6] : memref<2x128xf32, #tpu.memory_space<vmem>>, vector<2x128xf32>
    %c0_7 = arith.constant 0 : index
    %c0_8 = arith.constant 0 : index
    %14 = vector.load %arg13[%c0_7, %c0_8] : memref<4x32xf32, #tpu.memory_space<vmem>>, vector<4x32xf32>
    %c0_9 = arith.constant 0 : index
    %c0_10 = arith.constant 0 : index
    %15 = vector.load %arg14[%c0_9, %c0_10] : memref<4x32xf32, #tpu.memory_space<vmem>>, vector<4x32xf32>
    %c0_11 = arith.constant 0 : index
    %c0_12 = arith.constant 0 : index
    %16 = vector.load %arg3[%c0_11, %c0_12] : memref<128x128xf32, #tpu.memory_space<vmem>>, vector<128x128xf32>
    %cst = arith.constant dense<0.000000e+00> : vector<8x128xf32>
    %17 = tpu.matmul %5, %16, %cst {dimension_numbers = #tpu.dot_dimension_numbers<[1], [0], [0], [1], [0, 0, 1, 1], [], []>} : vector<8x128xf32>, vector<128x128xf32>, vector<8x128xf32> -> vector<8x128xf32>
    %c0_13 = arith.constant 0 : index
    %c0_14 = arith.constant 0 : index
    %18 = vector.load %arg4[%c0_13, %c0_14] : memref<128x128xf32, #tpu.memory_space<vmem>>, vector<128x128xf32>
    %cst_15 = arith.constant dense<0.000000e+00> : vector<8x128xf32>
    %19 = tpu.matmul %11, %18, %cst_15 {dimension_numbers = #tpu.dot_dimension_numbers<[1], [0], [0], [1], [0, 0, 1, 1], [], []>} : vector<8x128xf32>, vector<128x128xf32>, vector<8x128xf32> -> vector<8x128xf32>
    %20 = arith.addf %17, %19 : vector<8x128xf32>
    %21 = vector.extract_strided_slice %12 {offsets = [0, 0], sizes = [1, 128], strides = [1, 1]} : vector<2x128xf32> to vector<1x128xf32>
    %22 = vector.broadcast %21 : vector<1x128xf32> to vector<8x128xf32>
    %23 = arith.addf %20, %22 : vector<8x128xf32>
    %c0_16 = arith.constant 0 : index
    %c0_17 = arith.constant 0 : index
    %24 = vector.load %arg5[%c0_16, %c0_17] : memref<128x128xf32, #tpu.memory_space<vmem>>, vector<128x128xf32>
    %cst_18 = arith.constant dense<0.000000e+00> : vector<8x128xf32>
    %25 = tpu.matmul %5, %24, %cst_18 {dimension_numbers = #tpu.dot_dimension_numbers<[1], [0], [0], [1], [0, 0, 1, 1], [], []>} : vector<8x128xf32>, vector<128x128xf32>, vector<8x128xf32> -> vector<8x128xf32>
    %c0_19 = arith.constant 0 : index
    %c0_20 = arith.constant 0 : index
    %26 = vector.load %arg6[%c0_19, %c0_20] : memref<128x128xf32, #tpu.memory_space<vmem>>, vector<128x128xf32>
    %cst_21 = arith.constant dense<0.000000e+00> : vector<8x128xf32>
    %27 = tpu.matmul %11, %26, %cst_21 {dimension_numbers = #tpu.dot_dimension_numbers<[1], [0], [0], [1], [0, 0, 1, 1], [], []>} : vector<8x128xf32>, vector<128x128xf32>, vector<8x128xf32> -> vector<8x128xf32>
    %28 = arith.addf %25, %27 : vector<8x128xf32>
    %29 = vector.extract_strided_slice %12 {offsets = [1, 0], sizes = [1, 128], strides = [1, 1]} : vector<2x128xf32> to vector<1x128xf32>
    %30 = vector.broadcast %29 : vector<1x128xf32> to vector<8x128xf32>
    %31 = arith.addf %28, %30 : vector<8x128xf32>
    %c0_22 = arith.constant 0 : index
    %c0_23 = arith.constant 0 : index
    %32 = vector.load %arg7[%c0_22, %c0_23] : memref<32x256xf32, #tpu.memory_space<vmem>>, vector<32x256xf32>
    %33 = vector.extract_strided_slice %14 {offsets = [0, 0], sizes = [2, 32], strides = [1, 1]} : vector<4x32xf32> to vector<2x32xf32>
    %34 = vector.extract_strided_slice %15 {offsets = [0, 0], sizes = [2, 32], strides = [1, 1]} : vector<4x32xf32> to vector<2x32xf32>
    %35 = tpu.iota {dimensions = array<i32: 0>} : vector<2x128xi32>
    %c0_i32 = arith.constant 0 : i32
    %36 = vector.broadcast %c0_i32 : i32 to vector<2x128xi32>
    %37 = arith.cmpi eq, %35, %36 : vector<2x128xi32>
    %38 = vector.extract_strided_slice %23 {offsets = [0, 0], sizes = [1, 128], strides = [1, 1]} : vector<8x128xf32> to vector<1x128xf32>
    %39 = vector.extract_strided_slice %31 {offsets = [7, 0], sizes = [1, 128], strides = [1, 1]} : vector<8x128xf32> to vector<1x128xf32>
    %40 = vector.shape_cast %38 : vector<1x128xf32> to vector<1x128xf32>
    %41 = vector.broadcast %40 : vector<1x128xf32> to vector<2x128xf32>
    %42 = vector.shape_cast %39 : vector<1x128xf32> to vector<1x128xf32>
    %43 = vector.broadcast %42 : vector<1x128xf32> to vector<2x128xf32>
    %44 = arith.select %37, %41, %43 : vector<2x128xi1>, vector<2x128xf32>
    %cst_24 = arith.constant dense<0.000000e+00> : vector<2x256xf32>
    %45 = tpu.matmul %33, %32, %cst_24 {dimension_numbers = #tpu.dot_dimension_numbers<[1], [0], [0], [1], [0, 0, 1, 1], [], []>} : vector<2x32xf32>, vector<32x256xf32>, vector<2x256xf32> -> vector<2x256xf32>
    %46 = vector.extract_strided_slice %45 {offsets = [0, 0], sizes = [2, 128], strides = [1, 1]} : vector<2x256xf32> to vector<2x128xf32>
    %47 = vector.extract_strided_slice %45 {offsets = [0, 128], sizes = [2, 128], strides = [1, 1]} : vector<2x256xf32> to vector<2x128xf32>
    %48 = arith.select %37, %46, %47 : vector<2x128xi1>, vector<2x128xf32>
    %49 = arith.addf %44, %48 : vector<2x128xf32>
    %cst_25 = arith.constant 0.000000e+00 : f32
    %50 = vector.broadcast %cst_25 : f32 to vector<2x128xf32>
    %51 = arith.subf %50, %49 : vector<2x128xf32>
    %52 = math.exp %51 : vector<2x128xf32>
    %cst_26 = arith.constant 1.000000e+00 : f32
    %53 = vector.broadcast %cst_26 : f32 to vector<2x128xf32>
    %54 = arith.addf %53, %52 : vector<2x128xf32>
    %55 = tpu.reciprocal %54 {approx = true} : vector<2x128xf32> -> vector<2x128xf32>
    %56 = math.tanh %49 : vector<2x128xf32>
    %57 = vector.extract_strided_slice %55 {offsets = [0, 0], sizes = [2, 32], strides = [1, 1]} : vector<2x128xf32> to vector<2x32xf32>
    %58 = vector.extract_strided_slice %55 {offsets = [0, 32], sizes = [2, 32], strides = [1, 1]} : vector<2x128xf32> to vector<2x32xf32>
    %59 = vector.extract_strided_slice %56 {offsets = [0, 64], sizes = [2, 32], strides = [1, 1]} : vector<2x128xf32> to vector<2x32xf32>
    %60 = vector.extract_strided_slice %55 {offsets = [0, 96], sizes = [2, 32], strides = [1, 1]} : vector<2x128xf32> to vector<2x32xf32>
    %61 = arith.mulf %58, %34 : vector<2x32xf32>
    %62 = arith.mulf %57, %59 : vector<2x32xf32>
    %63 = arith.addf %61, %62 : vector<2x32xf32>
    %64 = math.tanh %63 : vector<2x32xf32>
    %65 = arith.mulf %60, %64 : vector<2x32xf32>
    %66 = vector.extract_strided_slice %65 {offsets = [0, 0], sizes = [1, 32], strides = [1, 1]} : vector<2x32xf32> to vector<1x32xf32>
    %c0_27 = arith.constant 0 : index
    %c0_28 = arith.constant 0 : index
    %67 = vector.load %arg19[%c0_27, %c0_28] : memref<8x32xf32, #tpu.memory_space<vmem>>, vector<1x32xf32>
    tpu.vector_store %arg19[%c0_27, %c0_28], %66 {strides = array<i32>} : memref<8x32xf32, #tpu.memory_space<vmem>>, vector<1x32xf32>,
    %68 = vector.extract_strided_slice %65 {offsets = [1, 0], sizes = [1, 32], strides = [1, 1]} : vector<2x32xf32> to vector<1x32xf32>
    %c7 = arith.constant 7 : index
    %c0_29 = arith.constant 0 : index
    %69 = vector.load %arg20[%c7, %c0_29] : memref<8x32xf32, #tpu.memory_space<vmem>>, vector<1x32xf32>
    tpu.vector_store %arg20[%c7, %c0_29], %68 {strides = array<i32>} : memref<8x32xf32, #tpu.memory_space<vmem>>, vector<1x32xf32>,
    %70 = vector.extract_strided_slice %23 {offsets = [1, 0], sizes = [1, 128], strides = [1, 1]} : vector<8x128xf32> to vector<1x128xf32>
    %71 = vector.extract_strided_slice %31 {offsets = [6, 0], sizes = [1, 128], strides = [1, 1]} : vector<8x128xf32> to vector<1x128xf32>
    %72 = vector.shape_cast %70 : vector<1x128xf32> to vector<1x128xf32>
    %73 = vector.broadcast %72 : vector<1x128xf32> to vector<2x128xf32>
    %74 = vector.shape_cast %71 : vector<1x128xf32> to vector<1x128xf32>
    %75 = vector.broadcast %74 : vector<1x128xf32> to vector<2x128xf32>
    %76 = arith.select %37, %73, %75 : vector<2x128xi1>, vector<2x128xf32>
    %cst_30 = arith.constant dense<0.000000e+00> : vector<2x256xf32>
    %77 = tpu.matmul %65, %32, %cst_30 {dimension_numbers = #tpu.dot_dimension_numbers<[1], [0], [0], [1], [0, 0, 1, 1], [], []>} : vector<2x32xf32>, vector<32x256xf32>, vector<2x256xf32> -> vector<2x256xf32>
    %78 = vector.extract_strided_slice %77 {offsets = [0, 0], sizes = [2, 128], strides = [1, 1]} : vector<2x256xf32> to vector<2x128xf32>
    %79 = vector.extract_strided_slice %77 {offsets = [0, 128], sizes = [2, 128], strides = [1, 1]} : vector<2x256xf32> to vector<2x128xf32>
    %80 = arith.select %37, %78, %79 : vector<2x128xi1>, vector<2x128xf32>
    %81 = arith.addf %76, %80 : vector<2x128xf32>
    %cst_31 = arith.constant 0.000000e+00 : f32
    %82 = vector.broadcast %cst_31 : f32 to vector<2x128xf32>
    %83 = arith.subf %82, %81 : vector<2x128xf32>
    %84 = math.exp %83 : vector<2x128xf32>
    %cst_32 = arith.constant 1.000000e+00 : f32
    %85 = vector.broadcast %cst_32 : f32 to vector<2x128xf32>
    %86 = arith.addf %85, %84 : vector<2x128xf32>
    %87 = tpu.reciprocal %86 {approx = true} : vector<2x128xf32> -> vector<2x128xf32>
    %88 = math.tanh %81 : vector<2x128xf32>
    %89 = vector.extract_strided_slice %87 {offsets = [0, 0], sizes = [2, 32], strides = [1, 1]} : vector<2x128xf32> to vector<2x32xf32>
    %90 = vector.extract_strided_slice %87 {offsets = [0, 32], sizes = [2, 32], strides = [1, 1]} : vector<2x128xf32> to vector<2x32xf32>
    %91 = vector.extract_strided_slice %88 {offsets = [0, 64], sizes = [2, 32], strides = [1, 1]} : vector<2x128xf32> to vector<2x32xf32>
    %92 = vector.extract_strided_slice %87 {offsets = [0, 96], sizes = [2, 32], strides = [1, 1]} : vector<2x128xf32> to vector<2x32xf32>
    %93 = arith.mulf %90, %63 : vector<2x32xf32>
    %94 = arith.mulf %89, %91 : vector<2x32xf32>
    %95 = arith.addf %93, %94 : vector<2x32xf32>
    %96 = math.tanh %95 : vector<2x32xf32>
    %97 = arith.mulf %92, %96 : vector<2x32xf32>
    %98 = vector.extract_strided_slice %97 {offsets = [0, 0], sizes = [1, 32], strides = [1, 1]} : vector<2x32xf32> to vector<1x32xf32>
    %c1 = arith.constant 1 : index
    %c0_33 = arith.constant 0 : index
    %99 = vector.load %arg19[%c1, %c0_33] : memref<8x32xf32, #tpu.memory_space<vmem>>, vector<1x32xf32>
    tpu.vector_store %arg19[%c1, %c0_33], %98 {strides = array<i32>} : memref<8x32xf32, #tpu.memory_space<vmem>>, vector<1x32xf32>,
    %100 = vector.extract_strided_slice %97 {offsets = [1, 0], sizes = [1, 32], strides = [1, 1]} : vector<2x32xf32> to vector<1x32xf32>
    %c6 = arith.constant 6 : index
    %c0_34 = arith.constant 0 : index
    %101 = vector.load %arg20[%c6, %c0_34] : memref<8x32xf32, #tpu.memory_space<vmem>>, vector<1x32xf32>
    tpu.vector_store %arg20[%c6, %c0_34], %100 {strides = array<i32>} : memref<8x32xf32, #tpu.memory_space<vmem>>, vector<1x32xf32>,
    %102 = vector.extract_strided_slice %23 {offsets = [2, 0], sizes = [1, 128], strides = [1, 1]} : vector<8x128xf32> to vector<1x128xf32>
    %103 = vector.extract_strided_slice %31 {offsets = [5, 0], sizes = [1, 128], strides = [1, 1]} : vector<8x128xf32> to vector<1x128xf32>
    %104 = vector.shape_cast %102 : vector<1x128xf32> to vector<1x128xf32>
    %105 = vector.broadcast %104 : vector<1x128xf32> to vector<2x128xf32>
    %106 = vector.shape_cast %103 : vector<1x128xf32> to vector<1x128xf32>
    %107 = vector.broadcast %106 : vector<1x128xf32> to vector<2x128xf32>
    %108 = arith.select %37, %105, %107 : vector<2x128xi1>, vector<2x128xf32>
    %cst_35 = arith.constant dense<0.000000e+00> : vector<2x256xf32>
    %109 = tpu.matmul %97, %32, %cst_35 {dimension_numbers = #tpu.dot_dimension_numbers<[1], [0], [0], [1], [0, 0, 1, 1], [], []>} : vector<2x32xf32>, vector<32x256xf32>, vector<2x256xf32> -> vector<2x256xf32>
    %110 = vector.extract_strided_slice %109 {offsets = [0, 0], sizes = [2, 128], strides = [1, 1]} : vector<2x256xf32> to vector<2x128xf32>
    %111 = vector.extract_strided_slice %109 {offsets = [0, 128], sizes = [2, 128], strides = [1, 1]} : vector<2x256xf32> to vector<2x128xf32>
    %112 = arith.select %37, %110, %111 : vector<2x128xi1>, vector<2x128xf32>
    %113 = arith.addf %108, %112 : vector<2x128xf32>
    %cst_36 = arith.constant 0.000000e+00 : f32
    %114 = vector.broadcast %cst_36 : f32 to vector<2x128xf32>
    %115 = arith.subf %114, %113 : vector<2x128xf32>
    %116 = math.exp %115 : vector<2x128xf32>
    %cst_37 = arith.constant 1.000000e+00 : f32
    %117 = vector.broadcast %cst_37 : f32 to vector<2x128xf32>
    %118 = arith.addf %117, %116 : vector<2x128xf32>
    %119 = tpu.reciprocal %118 {approx = true} : vector<2x128xf32> -> vector<2x128xf32>
    %120 = math.tanh %113 : vector<2x128xf32>
    %121 = vector.extract_strided_slice %119 {offsets = [0, 0], sizes = [2, 32], strides = [1, 1]} : vector<2x128xf32> to vector<2x32xf32>
    %122 = vector.extract_strided_slice %119 {offsets = [0, 32], sizes = [2, 32], strides = [1, 1]} : vector<2x128xf32> to vector<2x32xf32>
    %123 = vector.extract_strided_slice %120 {offsets = [0, 64], sizes = [2, 32], strides = [1, 1]} : vector<2x128xf32> to vector<2x32xf32>
    %124 = vector.extract_strided_slice %119 {offsets = [0, 96], sizes = [2, 32], strides = [1, 1]} : vector<2x128xf32> to vector<2x32xf32>
    %125 = arith.mulf %122, %95 : vector<2x32xf32>
    %126 = arith.mulf %121, %123 : vector<2x32xf32>
    %127 = arith.addf %125, %126 : vector<2x32xf32>
    %128 = math.tanh %127 : vector<2x32xf32>
    %129 = arith.mulf %124, %128 : vector<2x32xf32>
    %130 = vector.extract_strided_slice %129 {offsets = [0, 0], sizes = [1, 32], strides = [1, 1]} : vector<2x32xf32> to vector<1x32xf32>
    %c2 = arith.constant 2 : index
    %c0_38 = arith.constant 0 : index
    %131 = vector.load %arg19[%c2, %c0_38] : memref<8x32xf32, #tpu.memory_space<vmem>>, vector<1x32xf32>
    tpu.vector_store %arg19[%c2, %c0_38], %130 {strides = array<i32>} : memref<8x32xf32, #tpu.memory_space<vmem>>, vector<1x32xf32>,
    %132 = vector.extract_strided_slice %129 {offsets = [1, 0], sizes = [1, 32], strides = [1, 1]} : vector<2x32xf32> to vector<1x32xf32>
    %c5 = arith.constant 5 : index
    %c0_39 = arith.constant 0 : index
    %133 = vector.load %arg20[%c5, %c0_39] : memref<8x32xf32, #tpu.memory_space<vmem>>, vector<1x32xf32>
    tpu.vector_store %arg20[%c5, %c0_39], %132 {strides = array<i32>} : memref<8x32xf32, #tpu.memory_space<vmem>>, vector<1x32xf32>,
    %134 = vector.extract_strided_slice %23 {offsets = [3, 0], sizes = [1, 128], strides = [1, 1]} : vector<8x128xf32> to vector<1x128xf32>
    %135 = vector.extract_strided_slice %31 {offsets = [4, 0], sizes = [1, 128], strides = [1, 1]} : vector<8x128xf32> to vector<1x128xf32>
    %136 = vector.shape_cast %134 : vector<1x128xf32> to vector<1x128xf32>
    %137 = vector.broadcast %136 : vector<1x128xf32> to vector<2x128xf32>
    %138 = vector.shape_cast %135 : vector<1x128xf32> to vector<1x128xf32>
    %139 = vector.broadcast %138 : vector<1x128xf32> to vector<2x128xf32>
    %140 = arith.select %37, %137, %139 : vector<2x128xi1>, vector<2x128xf32>
    %cst_40 = arith.constant dense<0.000000e+00> : vector<2x256xf32>
    %141 = tpu.matmul %129, %32, %cst_40 {dimension_numbers = #tpu.dot_dimension_numbers<[1], [0], [0], [1], [0, 0, 1, 1], [], []>} : vector<2x32xf32>, vector<32x256xf32>, vector<2x256xf32> -> vector<2x256xf32>
    %142 = vector.extract_strided_slice %141 {offsets = [0, 0], sizes = [2, 128], strides = [1, 1]} : vector<2x256xf32> to vector<2x128xf32>
    %143 = vector.extract_strided_slice %141 {offsets = [0, 128], sizes = [2, 128], strides = [1, 1]} : vector<2x256xf32> to vector<2x128xf32>
    %144 = arith.select %37, %142, %143 : vector<2x128xi1>, vector<2x128xf32>
    %145 = arith.addf %140, %144 : vector<2x128xf32>
    %cst_41 = arith.constant 0.000000e+00 : f32
    %146 = vector.broadcast %cst_41 : f32 to vector<2x128xf32>
    %147 = arith.subf %146, %145 : vector<2x128xf32>
    %148 = math.exp %147 : vector<2x128xf32>
    %cst_42 = arith.constant 1.000000e+00 : f32
    %149 = vector.broadcast %cst_42 : f32 to vector<2x128xf32>
    %150 = arith.addf %149, %148 : vector<2x128xf32>
    %151 = tpu.reciprocal %150 {approx = true} : vector<2x128xf32> -> vector<2x128xf32>
    %152 = math.tanh %145 : vector<2x128xf32>
    %153 = vector.extract_strided_slice %151 {offsets = [0, 0], sizes = [2, 32], strides = [1, 1]} : vector<2x128xf32> to vector<2x32xf32>
    %154 = vector.extract_strided_slice %151 {offsets = [0, 32], sizes = [2, 32], strides = [1, 1]} : vector<2x128xf32> to vector<2x32xf32>
    %155 = vector.extract_strided_slice %152 {offsets = [0, 64], sizes = [2, 32], strides = [1, 1]} : vector<2x128xf32> to vector<2x32xf32>
    %156 = vector.extract_strided_slice %151 {offsets = [0, 96], sizes = [2, 32], strides = [1, 1]} : vector<2x128xf32> to vector<2x32xf32>
    %157 = arith.mulf %154, %127 : vector<2x32xf32>
    %158 = arith.mulf %153, %155 : vector<2x32xf32>
    %159 = arith.addf %157, %158 : vector<2x32xf32>
    %160 = math.tanh %159 : vector<2x32xf32>
    %161 = arith.mulf %156, %160 : vector<2x32xf32>
    %162 = vector.extract_strided_slice %161 {offsets = [0, 0], sizes = [1, 32], strides = [1, 1]} : vector<2x32xf32> to vector<1x32xf32>
    %c3 = arith.constant 3 : index
    %c0_43 = arith.constant 0 : index
    %163 = vector.load %arg19[%c3, %c0_43] : memref<8x32xf32, #tpu.memory_space<vmem>>, vector<1x32xf32>
    tpu.vector_store %arg19[%c3, %c0_43], %162 {strides = array<i32>} : memref<8x32xf32, #tpu.memory_space<vmem>>, vector<1x32xf32>,
    %164 = vector.extract_strided_slice %161 {offsets = [1, 0], sizes = [1, 32], strides = [1, 1]} : vector<2x32xf32> to vector<1x32xf32>
    %c4 = arith.constant 4 : index
    %c0_44 = arith.constant 0 : index
    %165 = vector.load %arg20[%c4, %c0_44] : memref<8x32xf32, #tpu.memory_space<vmem>>, vector<1x32xf32>
    tpu.vector_store %arg20[%c4, %c0_44], %164 {strides = array<i32>} : memref<8x32xf32, #tpu.memory_space<vmem>>, vector<1x32xf32>,
    %166 = vector.extract_strided_slice %23 {offsets = [4, 0], sizes = [1, 128], strides = [1, 1]} : vector<8x128xf32> to vector<1x128xf32>
    %167 = vector.extract_strided_slice %31 {offsets = [3, 0], sizes = [1, 128], strides = [1, 1]} : vector<8x128xf32> to vector<1x128xf32>
    %168 = vector.shape_cast %166 : vector<1x128xf32> to vector<1x128xf32>
    %169 = vector.broadcast %168 : vector<1x128xf32> to vector<2x128xf32>
    %170 = vector.shape_cast %167 : vector<1x128xf32> to vector<1x128xf32>
    %171 = vector.broadcast %170 : vector<1x128xf32> to vector<2x128xf32>
    %172 = arith.select %37, %169, %171 : vector<2x128xi1>, vector<2x128xf32>
    %cst_45 = arith.constant dense<0.000000e+00> : vector<2x256xf32>
    %173 = tpu.matmul %161, %32, %cst_45 {dimension_numbers = #tpu.dot_dimension_numbers<[1], [0], [0], [1], [0, 0, 1, 1], [], []>} : vector<2x32xf32>, vector<32x256xf32>, vector<2x256xf32> -> vector<2x256xf32>
    %174 = vector.extract_strided_slice %173 {offsets = [0, 0], sizes = [2, 128], strides = [1, 1]} : vector<2x256xf32> to vector<2x128xf32>
    %175 = vector.extract_strided_slice %173 {offsets = [0, 128], sizes = [2, 128], strides = [1, 1]} : vector<2x256xf32> to vector<2x128xf32>
    %176 = arith.select %37, %174, %175 : vector<2x128xi1>, vector<2x128xf32>
    %177 = arith.addf %172, %176 : vector<2x128xf32>
    %cst_46 = arith.constant 0.000000e+00 : f32
    %178 = vector.broadcast %cst_46 : f32 to vector<2x128xf32>
    %179 = arith.subf %178, %177 : vector<2x128xf32>
    %180 = math.exp %179 : vector<2x128xf32>
    %cst_47 = arith.constant 1.000000e+00 : f32
    %181 = vector.broadcast %cst_47 : f32 to vector<2x128xf32>
    %182 = arith.addf %181, %180 : vector<2x128xf32>
    %183 = tpu.reciprocal %182 {approx = true} : vector<2x128xf32> -> vector<2x128xf32>
    %184 = math.tanh %177 : vector<2x128xf32>
    %185 = vector.extract_strided_slice %183 {offsets = [0, 0], sizes = [2, 32], strides = [1, 1]} : vector<2x128xf32> to vector<2x32xf32>
    %186 = vector.extract_strided_slice %183 {offsets = [0, 32], sizes = [2, 32], strides = [1, 1]} : vector<2x128xf32> to vector<2x32xf32>
    %187 = vector.extract_strided_slice %184 {offsets = [0, 64], sizes = [2, 32], strides = [1, 1]} : vector<2x128xf32> to vector<2x32xf32>
    %188 = vector.extract_strided_slice %183 {offsets = [0, 96], sizes = [2, 32], strides = [1, 1]} : vector<2x128xf32> to vector<2x32xf32>
    %189 = arith.mulf %186, %159 : vector<2x32xf32>
    %190 = arith.mulf %185, %187 : vector<2x32xf32>
    %191 = arith.addf %189, %190 : vector<2x32xf32>
    %192 = math.tanh %191 : vector<2x32xf32>
    %193 = arith.mulf %188, %192 : vector<2x32xf32>
    %194 = vector.extract_strided_slice %193 {offsets = [0, 0], sizes = [1, 32], strides = [1, 1]} : vector<2x32xf32> to vector<1x32xf32>
    %c4_48 = arith.constant 4 : index
    %c0_49 = arith.constant 0 : index
    %195 = vector.load %arg19[%c4_48, %c0_49] : memref<8x32xf32, #tpu.memory_space<vmem>>, vector<1x32xf32>
    tpu.vector_store %arg19[%c4_48, %c0_49], %194 {strides = array<i32>} : memref<8x32xf32, #tpu.memory_space<vmem>>, vector<1x32xf32>,
    %196 = vector.extract_strided_slice %193 {offsets = [1, 0], sizes = [1, 32], strides = [1, 1]} : vector<2x32xf32> to vector<1x32xf32>
    %c3_50 = arith.constant 3 : index
    %c0_51 = arith.constant 0 : index
    %197 = vector.load %arg20[%c3_50, %c0_51] : memref<8x32xf32, #tpu.memory_space<vmem>>, vector<1x32xf32>
    tpu.vector_store %arg20[%c3_50, %c0_51], %196 {strides = array<i32>} : memref<8x32xf32, #tpu.memory_space<vmem>>, vector<1x32xf32>,
    %198 = vector.extract_strided_slice %23 {offsets = [5, 0], sizes = [1, 128], strides = [1, 1]} : vector<8x128xf32> to vector<1x128xf32>
    %199 = vector.extract_strided_slice %31 {offsets = [2, 0], sizes = [1, 128], strides = [1, 1]} : vector<8x128xf32> to vector<1x128xf32>
    %200 = vector.shape_cast %198 : vector<1x128xf32> to vector<1x128xf32>
    %201 = vector.broadcast %200 : vector<1x128xf32> to vector<2x128xf32>
    %202 = vector.shape_cast %199 : vector<1x128xf32> to vector<1x128xf32>
    %203 = vector.broadcast %202 : vector<1x128xf32> to vector<2x128xf32>
    %204 = arith.select %37, %201, %203 : vector<2x128xi1>, vector<2x128xf32>
    %cst_52 = arith.constant dense<0.000000e+00> : vector<2x256xf32>
    %205 = tpu.matmul %193, %32, %cst_52 {dimension_numbers = #tpu.dot_dimension_numbers<[1], [0], [0], [1], [0, 0, 1, 1], [], []>} : vector<2x32xf32>, vector<32x256xf32>, vector<2x256xf32> -> vector<2x256xf32>
    %206 = vector.extract_strided_slice %205 {offsets = [0, 0], sizes = [2, 128], strides = [1, 1]} : vector<2x256xf32> to vector<2x128xf32>
    %207 = vector.extract_strided_slice %205 {offsets = [0, 128], sizes = [2, 128], strides = [1, 1]} : vector<2x256xf32> to vector<2x128xf32>
    %208 = arith.select %37, %206, %207 : vector<2x128xi1>, vector<2x128xf32>
    %209 = arith.addf %204, %208 : vector<2x128xf32>
    %cst_53 = arith.constant 0.000000e+00 : f32
    %210 = vector.broadcast %cst_53 : f32 to vector<2x128xf32>
    %211 = arith.subf %210, %209 : vector<2x128xf32>
    %212 = math.exp %211 : vector<2x128xf32>
    %cst_54 = arith.constant 1.000000e+00 : f32
    %213 = vector.broadcast %cst_54 : f32 to vector<2x128xf32>
    %214 = arith.addf %213, %212 : vector<2x128xf32>
    %215 = tpu.reciprocal %214 {approx = true} : vector<2x128xf32> -> vector<2x128xf32>
    %216 = math.tanh %209 : vector<2x128xf32>
    %217 = vector.extract_strided_slice %215 {offsets = [0, 0], sizes = [2, 32], strides = [1, 1]} : vector<2x128xf32> to vector<2x32xf32>
    %218 = vector.extract_strided_slice %215 {offsets = [0, 32], sizes = [2, 32], strides = [1, 1]} : vector<2x128xf32> to vector<2x32xf32>
    %219 = vector.extract_strided_slice %216 {offsets = [0, 64], sizes = [2, 32], strides = [1, 1]} : vector<2x128xf32> to vector<2x32xf32>
    %220 = vector.extract_strided_slice %215 {offsets = [0, 96], sizes = [2, 32], strides = [1, 1]} : vector<2x128xf32> to vector<2x32xf32>
    %221 = arith.mulf %218, %191 : vector<2x32xf32>
    %222 = arith.mulf %217, %219 : vector<2x32xf32>
    %223 = arith.addf %221, %222 : vector<2x32xf32>
    %224 = math.tanh %223 : vector<2x32xf32>
    %225 = arith.mulf %220, %224 : vector<2x32xf32>
    %226 = vector.extract_strided_slice %225 {offsets = [0, 0], sizes = [1, 32], strides = [1, 1]} : vector<2x32xf32> to vector<1x32xf32>
    %c5_55 = arith.constant 5 : index
    %c0_56 = arith.constant 0 : index
    %227 = vector.load %arg19[%c5_55, %c0_56] : memref<8x32xf32, #tpu.memory_space<vmem>>, vector<1x32xf32>
    tpu.vector_store %arg19[%c5_55, %c0_56], %226 {strides = array<i32>} : memref<8x32xf32, #tpu.memory_space<vmem>>, vector<1x32xf32>,
    %228 = vector.extract_strided_slice %225 {offsets = [1, 0], sizes = [1, 32], strides = [1, 1]} : vector<2x32xf32> to vector<1x32xf32>
    %c2_57 = arith.constant 2 : index
    %c0_58 = arith.constant 0 : index
    %229 = vector.load %arg20[%c2_57, %c0_58] : memref<8x32xf32, #tpu.memory_space<vmem>>, vector<1x32xf32>
    tpu.vector_store %arg20[%c2_57, %c0_58], %228 {strides = array<i32>} : memref<8x32xf32, #tpu.memory_space<vmem>>, vector<1x32xf32>,
    %230 = vector.extract_strided_slice %23 {offsets = [6, 0], sizes = [1, 128], strides = [1, 1]} : vector<8x128xf32> to vector<1x128xf32>
    %231 = vector.extract_strided_slice %31 {offsets = [1, 0], sizes = [1, 128], strides = [1, 1]} : vector<8x128xf32> to vector<1x128xf32>
    %232 = vector.shape_cast %230 : vector<1x128xf32> to vector<1x128xf32>
    %233 = vector.broadcast %232 : vector<1x128xf32> to vector<2x128xf32>
    %234 = vector.shape_cast %231 : vector<1x128xf32> to vector<1x128xf32>
    %235 = vector.broadcast %234 : vector<1x128xf32> to vector<2x128xf32>
    %236 = arith.select %37, %233, %235 : vector<2x128xi1>, vector<2x128xf32>
    %cst_59 = arith.constant dense<0.000000e+00> : vector<2x256xf32>
    %237 = tpu.matmul %225, %32, %cst_59 {dimension_numbers = #tpu.dot_dimension_numbers<[1], [0], [0], [1], [0, 0, 1, 1], [], []>} : vector<2x32xf32>, vector<32x256xf32>, vector<2x256xf32> -> vector<2x256xf32>
    %238 = vector.extract_strided_slice %237 {offsets = [0, 0], sizes = [2, 128], strides = [1, 1]} : vector<2x256xf32> to vector<2x128xf32>
    %239 = vector.extract_strided_slice %237 {offsets = [0, 128], sizes = [2, 128], strides = [1, 1]} : vector<2x256xf32> to vector<2x128xf32>
    %240 = arith.select %37, %238, %239 : vector<2x128xi1>, vector<2x128xf32>
    %241 = arith.addf %236, %240 : vector<2x128xf32>
    %cst_60 = arith.constant 0.000000e+00 : f32
    %242 = vector.broadcast %cst_60 : f32 to vector<2x128xf32>
    %243 = arith.subf %242, %241 : vector<2x128xf32>
    %244 = math.exp %243 : vector<2x128xf32>
    %cst_61 = arith.constant 1.000000e+00 : f32
    %245 = vector.broadcast %cst_61 : f32 to vector<2x128xf32>
    %246 = arith.addf %245, %244 : vector<2x128xf32>
    %247 = tpu.reciprocal %246 {approx = true} : vector<2x128xf32> -> vector<2x128xf32>
    %248 = math.tanh %241 : vector<2x128xf32>
    %249 = vector.extract_strided_slice %247 {offsets = [0, 0], sizes = [2, 32], strides = [1, 1]} : vector<2x128xf32> to vector<2x32xf32>
    %250 = vector.extract_strided_slice %247 {offsets = [0, 32], sizes = [2, 32], strides = [1, 1]} : vector<2x128xf32> to vector<2x32xf32>
    %251 = vector.extract_strided_slice %248 {offsets = [0, 64], sizes = [2, 32], strides = [1, 1]} : vector<2x128xf32> to vector<2x32xf32>
    %252 = vector.extract_strided_slice %247 {offsets = [0, 96], sizes = [2, 32], strides = [1, 1]} : vector<2x128xf32> to vector<2x32xf32>
    %253 = arith.mulf %250, %223 : vector<2x32xf32>
    %254 = arith.mulf %249, %251 : vector<2x32xf32>
    %255 = arith.addf %253, %254 : vector<2x32xf32>
    %256 = math.tanh %255 : vector<2x32xf32>
    %257 = arith.mulf %252, %256 : vector<2x32xf32>
    %258 = vector.extract_strided_slice %257 {offsets = [0, 0], sizes = [1, 32], strides = [1, 1]} : vector<2x32xf32> to vector<1x32xf32>
    %c6_62 = arith.constant 6 : index
    %c0_63 = arith.constant 0 : index
    %259 = vector.load %arg19[%c6_62, %c0_63] : memref<8x32xf32, #tpu.memory_space<vmem>>, vector<1x32xf32>
    tpu.vector_store %arg19[%c6_62, %c0_63], %258 {strides = array<i32>} : memref<8x32xf32, #tpu.memory_space<vmem>>, vector<1x32xf32>,
    %260 = vector.extract_strided_slice %257 {offsets = [1, 0], sizes = [1, 32], strides = [1, 1]} : vector<2x32xf32> to vector<1x32xf32>
    %c1_64 = arith.constant 1 : index
    %c0_65 = arith.constant 0 : index
    %261 = vector.load %arg20[%c1_64, %c0_65] : memref<8x32xf32, #tpu.memory_space<vmem>>, vector<1x32xf32>
    tpu.vector_store %arg20[%c1_64, %c0_65], %260 {strides = array<i32>} : memref<8x32xf32, #tpu.memory_space<vmem>>, vector<1x32xf32>,
    %262 = vector.extract_strided_slice %23 {offsets = [7, 0], sizes = [1, 128], strides = [1, 1]} : vector<8x128xf32> to vector<1x128xf32>
    %263 = vector.extract_strided_slice %31 {offsets = [0, 0], sizes = [1, 128], strides = [1, 1]} : vector<8x128xf32> to vector<1x128xf32>
    %264 = vector.shape_cast %262 : vector<1x128xf32> to vector<1x128xf32>
    %265 = vector.broadcast %264 : vector<1x128xf32> to vector<2x128xf32>
    %266 = vector.shape_cast %263 : vector<1x128xf32> to vector<1x128xf32>
    %267 = vector.broadcast %266 : vector<1x128xf32> to vector<2x128xf32>
    %268 = arith.select %37, %265, %267 : vector<2x128xi1>, vector<2x128xf32>
    %cst_66 = arith.constant dense<0.000000e+00> : vector<2x256xf32>
    %269 = tpu.matmul %257, %32, %cst_66 {dimension_numbers = #tpu.dot_dimension_numbers<[1], [0], [0], [1], [0, 0, 1, 1], [], []>} : vector<2x32xf32>, vector<32x256xf32>, vector<2x256xf32> -> vector<2x256xf32>
    %270 = vector.extract_strided_slice %269 {offsets = [0, 0], sizes = [2, 128], strides = [1, 1]} : vector<2x256xf32> to vector<2x128xf32>
    %271 = vector.extract_strided_slice %269 {offsets = [0, 128], sizes = [2, 128], strides = [1, 1]} : vector<2x256xf32> to vector<2x128xf32>
    %272 = arith.select %37, %270, %271 : vector<2x128xi1>, vector<2x128xf32>
    %273 = arith.addf %268, %272 : vector<2x128xf32>
    %cst_67 = arith.constant 0.000000e+00 : f32
    %274 = vector.broadcast %cst_67 : f32 to vector<2x128xf32>
    %275 = arith.subf %274, %273 : vector<2x128xf32>
    %276 = math.exp %275 : vector<2x128xf32>
    %cst_68 = arith.constant 1.000000e+00 : f32
    %277 = vector.broadcast %cst_68 : f32 to vector<2x128xf32>
    %278 = arith.addf %277, %276 : vector<2x128xf32>
    %279 = tpu.reciprocal %278 {approx = true} : vector<2x128xf32> -> vector<2x128xf32>
    %280 = math.tanh %273 : vector<2x128xf32>
    %281 = vector.extract_strided_slice %279 {offsets = [0, 0], sizes = [2, 32], strides = [1, 1]} : vector<2x128xf32> to vector<2x32xf32>
    %282 = vector.extract_strided_slice %279 {offsets = [0, 32], sizes = [2, 32], strides = [1, 1]} : vector<2x128xf32> to vector<2x32xf32>
    %283 = vector.extract_strided_slice %280 {offsets = [0, 64], sizes = [2, 32], strides = [1, 1]} : vector<2x128xf32> to vector<2x32xf32>
    %284 = vector.extract_strided_slice %279 {offsets = [0, 96], sizes = [2, 32], strides = [1, 1]} : vector<2x128xf32> to vector<2x32xf32>
    %285 = arith.mulf %282, %255 : vector<2x32xf32>
    %286 = arith.mulf %281, %283 : vector<2x32xf32>
    %287 = arith.addf %285, %286 : vector<2x32xf32>
    %288 = math.tanh %287 : vector<2x32xf32>
    %289 = arith.mulf %284, %288 : vector<2x32xf32>
    %290 = vector.extract_strided_slice %289 {offsets = [0, 0], sizes = [1, 32], strides = [1, 1]} : vector<2x32xf32> to vector<1x32xf32>
    %c7_69 = arith.constant 7 : index
    %c0_70 = arith.constant 0 : index
    %291 = vector.load %arg19[%c7_69, %c0_70] : memref<8x32xf32, #tpu.memory_space<vmem>>, vector<1x32xf32>
    tpu.vector_store %arg19[%c7_69, %c0_70], %290 {strides = array<i32>} : memref<8x32xf32, #tpu.memory_space<vmem>>, vector<1x32xf32>,
    %292 = vector.extract_strided_slice %289 {offsets = [1, 0], sizes = [1, 32], strides = [1, 1]} : vector<2x32xf32> to vector<1x32xf32>
    %c0_71 = arith.constant 0 : index
    %c0_72 = arith.constant 0 : index
    %293 = vector.load %arg20[%c0_71, %c0_72] : memref<8x32xf32, #tpu.memory_space<vmem>>, vector<1x32xf32>
    tpu.vector_store %arg20[%c0_71, %c0_72], %292 {strides = array<i32>} : memref<8x32xf32, #tpu.memory_space<vmem>>, vector<1x32xf32>,
    %c0_73 = arith.constant 0 : index
    %c0_74 = arith.constant 0 : index
    %294 = vector.load %arg17[%c0_73, %c0_74] : memref<4x32xf32, #tpu.memory_space<vmem>>, vector<2x32xf32>
    tpu.vector_store %arg17[%c0_73, %c0_74], %289 {strides = array<i32>} : memref<4x32xf32, #tpu.memory_space<vmem>>, vector<2x32xf32>,
    %c0_75 = arith.constant 0 : index
    %c0_76 = arith.constant 0 : index
    %295 = vector.load %arg18[%c0_75, %c0_76] : memref<4x32xf32, #tpu.memory_space<vmem>>, vector<2x32xf32>
    tpu.vector_store %arg18[%c0_75, %c0_76], %287 {strides = array<i32>} : memref<4x32xf32, #tpu.memory_space<vmem>>, vector<2x32xf32>,
    %c0_77 = arith.constant 0 : index
    %c0_78 = arith.constant 0 : index
    %296 = vector.load %arg19[%c0_77, %c0_78] : memref<8x32xf32, #tpu.memory_space<vmem>>, vector<8x32xf32>
    %c0_79 = arith.constant 0 : index
    %c0_80 = arith.constant 0 : index
    %297 = vector.load %arg20[%c0_79, %c0_80] : memref<8x32xf32, #tpu.memory_space<vmem>>, vector<8x32xf32>
    %c0_81 = arith.constant 0 : index
    %c0_82 = arith.constant 0 : index
    %298 = vector.load %arg9[%c0_81, %c0_82] : memref<64x128xf32, #tpu.memory_space<vmem>>, vector<32x128xf32>
    %cst_83 = arith.constant dense<0.000000e+00> : vector<8x128xf32>
    %299 = tpu.matmul %296, %298, %cst_83 {dimension_numbers = #tpu.dot_dimension_numbers<[1], [0], [0], [1], [0, 0, 1, 1], [], []>} : vector<8x32xf32>, vector<32x128xf32>, vector<8x128xf32> -> vector<8x128xf32>
    %c32 = arith.constant 32 : index
    %c0_84 = arith.constant 0 : index
    %300 = vector.load %arg9[%c32, %c0_84] : memref<64x128xf32, #tpu.memory_space<vmem>>, vector<32x128xf32>
    %cst_85 = arith.constant dense<0.000000e+00> : vector<8x128xf32>
    %301 = tpu.matmul %297, %300, %cst_85 {dimension_numbers = #tpu.dot_dimension_numbers<[1], [0], [0], [1], [0, 0, 1, 1], [], []>} : vector<8x32xf32>, vector<32x128xf32>, vector<8x128xf32> -> vector<8x128xf32>
    %302 = arith.addf %299, %301 : vector<8x128xf32>
    %303 = vector.extract_strided_slice %13 {offsets = [0, 0], sizes = [1, 128], strides = [1, 1]} : vector<2x128xf32> to vector<1x128xf32>
    %304 = vector.broadcast %303 : vector<1x128xf32> to vector<8x128xf32>
    %305 = arith.addf %302, %304 : vector<8x128xf32>
    %c0_86 = arith.constant 0 : index
    %c0_87 = arith.constant 0 : index
    %306 = vector.load %arg10[%c0_86, %c0_87] : memref<64x128xf32, #tpu.memory_space<vmem>>, vector<32x128xf32>
    %cst_88 = arith.constant dense<0.000000e+00> : vector<8x128xf32>
    %307 = tpu.matmul %296, %306, %cst_88 {dimension_numbers = #tpu.dot_dimension_numbers<[1], [0], [0], [1], [0, 0, 1, 1], [], []>} : vector<8x32xf32>, vector<32x128xf32>, vector<8x128xf32> -> vector<8x128xf32>
    %c32_89 = arith.constant 32 : index
    %c0_90 = arith.constant 0 : index
    %308 = vector.load %arg10[%c32_89, %c0_90] : memref<64x128xf32, #tpu.memory_space<vmem>>, vector<32x128xf32>
    %cst_91 = arith.constant dense<0.000000e+00> : vector<8x128xf32>
    %309 = tpu.matmul %297, %308, %cst_91 {dimension_numbers = #tpu.dot_dimension_numbers<[1], [0], [0], [1], [0, 0, 1, 1], [], []>} : vector<8x32xf32>, vector<32x128xf32>, vector<8x128xf32> -> vector<8x128xf32>
    %310 = arith.addf %307, %309 : vector<8x128xf32>
    %311 = vector.extract_strided_slice %13 {offsets = [1, 0], sizes = [1, 128], strides = [1, 1]} : vector<2x128xf32> to vector<1x128xf32>
    %312 = vector.broadcast %311 : vector<1x128xf32> to vector<8x128xf32>
    %313 = arith.addf %310, %312 : vector<8x128xf32>
    %c0_92 = arith.constant 0 : index
    %c0_93 = arith.constant 0 : index
    %314 = vector.load %arg11[%c0_92, %c0_93] : memref<32x256xf32, #tpu.memory_space<vmem>>, vector<32x256xf32>
    %315 = vector.extract_strided_slice %14 {offsets = [2, 0], sizes = [2, 32], strides = [1, 1]} : vector<4x32xf32> to vector<2x32xf32>
    %316 = vector.extract_strided_slice %15 {offsets = [2, 0], sizes = [2, 32], strides = [1, 1]} : vector<4x32xf32> to vector<2x32xf32>
    %317 = tpu.iota {dimensions = array<i32: 0>} : vector<2x128xi32>
    %c0_i32_94 = arith.constant 0 : i32
    %318 = vector.broadcast %c0_i32_94 : i32 to vector<2x128xi32>
    %319 = arith.cmpi eq, %317, %318 : vector<2x128xi32>
    %320 = vector.extract_strided_slice %305 {offsets = [0, 0], sizes = [1, 128], strides = [1, 1]} : vector<8x128xf32> to vector<1x128xf32>
    %321 = vector.extract_strided_slice %313 {offsets = [7, 0], sizes = [1, 128], strides = [1, 1]} : vector<8x128xf32> to vector<1x128xf32>
    %322 = vector.shape_cast %320 : vector<1x128xf32> to vector<1x128xf32>
    %323 = vector.broadcast %322 : vector<1x128xf32> to vector<2x128xf32>
    %324 = vector.shape_cast %321 : vector<1x128xf32> to vector<1x128xf32>
    %325 = vector.broadcast %324 : vector<1x128xf32> to vector<2x128xf32>
    %326 = arith.select %319, %323, %325 : vector<2x128xi1>, vector<2x128xf32>
    %cst_95 = arith.constant dense<0.000000e+00> : vector<2x256xf32>
    %327 = tpu.matmul %315, %314, %cst_95 {dimension_numbers = #tpu.dot_dimension_numbers<[1], [0], [0], [1], [0, 0, 1, 1], [], []>} : vector<2x32xf32>, vector<32x256xf32>, vector<2x256xf32> -> vector<2x256xf32>
    %328 = vector.extract_strided_slice %327 {offsets = [0, 0], sizes = [2, 128], strides = [1, 1]} : vector<2x256xf32> to vector<2x128xf32>
    %329 = vector.extract_strided_slice %327 {offsets = [0, 128], sizes = [2, 128], strides = [1, 1]} : vector<2x256xf32> to vector<2x128xf32>
    %330 = arith.select %319, %328, %329 : vector<2x128xi1>, vector<2x128xf32>
    %331 = arith.addf %326, %330 : vector<2x128xf32>
    %cst_96 = arith.constant 0.000000e+00 : f32
    %332 = vector.broadcast %cst_96 : f32 to vector<2x128xf32>
    %333 = arith.subf %332, %331 : vector<2x128xf32>
    %334 = math.exp %333 : vector<2x128xf32>
    %cst_97 = arith.constant 1.000000e+00 : f32
    %335 = vector.broadcast %cst_97 : f32 to vector<2x128xf32>
    %336 = arith.addf %335, %334 : vector<2x128xf32>
    %337 = tpu.reciprocal %336 {approx = true} : vector<2x128xf32> -> vector<2x128xf32>
    %338 = math.tanh %331 : vector<2x128xf32>
    %339 = vector.extract_strided_slice %337 {offsets = [0, 0], sizes = [2, 32], strides = [1, 1]} : vector<2x128xf32> to vector<2x32xf32>
    %340 = vector.extract_strided_slice %337 {offsets = [0, 32], sizes = [2, 32], strides = [1, 1]} : vector<2x128xf32> to vector<2x32xf32>
    %341 = vector.extract_strided_slice %338 {offsets = [0, 64], sizes = [2, 32], strides = [1, 1]} : vector<2x128xf32> to vector<2x32xf32>
    %342 = vector.extract_strided_slice %337 {offsets = [0, 96], sizes = [2, 32], strides = [1, 1]} : vector<2x128xf32> to vector<2x32xf32>
    %343 = arith.mulf %340, %316 : vector<2x32xf32>
    %344 = arith.mulf %339, %341 : vector<2x32xf32>
    %345 = arith.addf %343, %344 : vector<2x32xf32>
    %346 = math.tanh %345 : vector<2x32xf32>
    %347 = arith.mulf %342, %346 : vector<2x32xf32>
    %348 = vector.extract_strided_slice %347 {offsets = [0, 0], sizes = [1, 32], strides = [1, 1]} : vector<2x32xf32> to vector<1x32xf32>
    %c0_98 = arith.constant 0 : index
    %c0_99 = arith.constant 0 : index
    %349 = vector.load %arg15[%c0_98, %c0_99] : memref<8x32xf32, #tpu.memory_space<vmem>>, vector<1x32xf32>
    tpu.vector_store %arg15[%c0_98, %c0_99], %348 {strides = array<i32>} : memref<8x32xf32, #tpu.memory_space<vmem>>, vector<1x32xf32>,
    %350 = vector.extract_strided_slice %347 {offsets = [1, 0], sizes = [1, 32], strides = [1, 1]} : vector<2x32xf32> to vector<1x32xf32>
    %c7_100 = arith.constant 7 : index
    %c0_101 = arith.constant 0 : index
    %351 = vector.load %arg16[%c7_100, %c0_101] : memref<8x32xf32, #tpu.memory_space<vmem>>, vector<1x32xf32>
    tpu.vector_store %arg16[%c7_100, %c0_101], %350 {strides = array<i32>} : memref<8x32xf32, #tpu.memory_space<vmem>>, vector<1x32xf32>,
    %352 = vector.extract_strided_slice %305 {offsets = [1, 0], sizes = [1, 128], strides = [1, 1]} : vector<8x128xf32> to vector<1x128xf32>
    %353 = vector.extract_strided_slice %313 {offsets = [6, 0], sizes = [1, 128], strides = [1, 1]} : vector<8x128xf32> to vector<1x128xf32>
    %354 = vector.shape_cast %352 : vector<1x128xf32> to vector<1x128xf32>
    %355 = vector.broadcast %354 : vector<1x128xf32> to vector<2x128xf32>
    %356 = vector.shape_cast %353 : vector<1x128xf32> to vector<1x128xf32>
    %357 = vector.broadcast %356 : vector<1x128xf32> to vector<2x128xf32>
    %358 = arith.select %319, %355, %357 : vector<2x128xi1>, vector<2x128xf32>
    %cst_102 = arith.constant dense<0.000000e+00> : vector<2x256xf32>
    %359 = tpu.matmul %347, %314, %cst_102 {dimension_numbers = #tpu.dot_dimension_numbers<[1], [0], [0], [1], [0, 0, 1, 1], [], []>} : vector<2x32xf32>, vector<32x256xf32>, vector<2x256xf32> -> vector<2x256xf32>
    %360 = vector.extract_strided_slice %359 {offsets = [0, 0], sizes = [2, 128], strides = [1, 1]} : vector<2x256xf32> to vector<2x128xf32>
    %361 = vector.extract_strided_slice %359 {offsets = [0, 128], sizes = [2, 128], strides = [1, 1]} : vector<2x256xf32> to vector<2x128xf32>
    %362 = arith.select %319, %360, %361 : vector<2x128xi1>, vector<2x128xf32>
    %363 = arith.addf %358, %362 : vector<2x128xf32>
    %cst_103 = arith.constant 0.000000e+00 : f32
    %364 = vector.broadcast %cst_103 : f32 to vector<2x128xf32>
    %365 = arith.subf %364, %363 : vector<2x128xf32>
    %366 = math.exp %365 : vector<2x128xf32>
    %cst_104 = arith.constant 1.000000e+00 : f32
    %367 = vector.broadcast %cst_104 : f32 to vector<2x128xf32>
    %368 = arith.addf %367, %366 : vector<2x128xf32>
    %369 = tpu.reciprocal %368 {approx = true} : vector<2x128xf32> -> vector<2x128xf32>
    %370 = math.tanh %363 : vector<2x128xf32>
    %371 = vector.extract_strided_slice %369 {offsets = [0, 0], sizes = [2, 32], strides = [1, 1]} : vector<2x128xf32> to vector<2x32xf32>
    %372 = vector.extract_strided_slice %369 {offsets = [0, 32], sizes = [2, 32], strides = [1, 1]} : vector<2x128xf32> to vector<2x32xf32>
    %373 = vector.extract_strided_slice %370 {offsets = [0, 64], sizes = [2, 32], strides = [1, 1]} : vector<2x128xf32> to vector<2x32xf32>
    %374 = vector.extract_strided_slice %369 {offsets = [0, 96], sizes = [2, 32], strides = [1, 1]} : vector<2x128xf32> to vector<2x32xf32>
    %375 = arith.mulf %372, %345 : vector<2x32xf32>
    %376 = arith.mulf %371, %373 : vector<2x32xf32>
    %377 = arith.addf %375, %376 : vector<2x32xf32>
    %378 = math.tanh %377 : vector<2x32xf32>
    %379 = arith.mulf %374, %378 : vector<2x32xf32>
    %380 = vector.extract_strided_slice %379 {offsets = [0, 0], sizes = [1, 32], strides = [1, 1]} : vector<2x32xf32> to vector<1x32xf32>
    %c1_105 = arith.constant 1 : index
    %c0_106 = arith.constant 0 : index
    %381 = vector.load %arg15[%c1_105, %c0_106] : memref<8x32xf32, #tpu.memory_space<vmem>>, vector<1x32xf32>
    tpu.vector_store %arg15[%c1_105, %c0_106], %380 {strides = array<i32>} : memref<8x32xf32, #tpu.memory_space<vmem>>, vector<1x32xf32>,
    %382 = vector.extract_strided_slice %379 {offsets = [1, 0], sizes = [1, 32], strides = [1, 1]} : vector<2x32xf32> to vector<1x32xf32>
    %c6_107 = arith.constant 6 : index
    %c0_108 = arith.constant 0 : index
    %383 = vector.load %arg16[%c6_107, %c0_108] : memref<8x32xf32, #tpu.memory_space<vmem>>, vector<1x32xf32>
    tpu.vector_store %arg16[%c6_107, %c0_108], %382 {strides = array<i32>} : memref<8x32xf32, #tpu.memory_space<vmem>>, vector<1x32xf32>,
    %384 = vector.extract_strided_slice %305 {offsets = [2, 0], sizes = [1, 128], strides = [1, 1]} : vector<8x128xf32> to vector<1x128xf32>
    %385 = vector.extract_strided_slice %313 {offsets = [5, 0], sizes = [1, 128], strides = [1, 1]} : vector<8x128xf32> to vector<1x128xf32>
    %386 = vector.shape_cast %384 : vector<1x128xf32> to vector<1x128xf32>
    %387 = vector.broadcast %386 : vector<1x128xf32> to vector<2x128xf32>
    %388 = vector.shape_cast %385 : vector<1x128xf32> to vector<1x128xf32>
    %389 = vector.broadcast %388 : vector<1x128xf32> to vector<2x128xf32>
    %390 = arith.select %319, %387, %389 : vector<2x128xi1>, vector<2x128xf32>
    %cst_109 = arith.constant dense<0.000000e+00> : vector<2x256xf32>
    %391 = tpu.matmul %379, %314, %cst_109 {dimension_numbers = #tpu.dot_dimension_numbers<[1], [0], [0], [1], [0, 0, 1, 1], [], []>} : vector<2x32xf32>, vector<32x256xf32>, vector<2x256xf32> -> vector<2x256xf32>
    %392 = vector.extract_strided_slice %391 {offsets = [0, 0], sizes = [2, 128], strides = [1, 1]} : vector<2x256xf32> to vector<2x128xf32>
    %393 = vector.extract_strided_slice %391 {offsets = [0, 128], sizes = [2, 128], strides = [1, 1]} : vector<2x256xf32> to vector<2x128xf32>
    %394 = arith.select %319, %392, %393 : vector<2x128xi1>, vector<2x128xf32>
    %395 = arith.addf %390, %394 : vector<2x128xf32>
    %cst_110 = arith.constant 0.000000e+00 : f32
    %396 = vector.broadcast %cst_110 : f32 to vector<2x128xf32>
    %397 = arith.subf %396, %395 : vector<2x128xf32>
    %398 = math.exp %397 : vector<2x128xf32>
    %cst_111 = arith.constant 1.000000e+00 : f32
    %399 = vector.broadcast %cst_111 : f32 to vector<2x128xf32>
    %400 = arith.addf %399, %398 : vector<2x128xf32>
    %401 = tpu.reciprocal %400 {approx = true} : vector<2x128xf32> -> vector<2x128xf32>
    %402 = math.tanh %395 : vector<2x128xf32>
    %403 = vector.extract_strided_slice %401 {offsets = [0, 0], sizes = [2, 32], strides = [1, 1]} : vector<2x128xf32> to vector<2x32xf32>
    %404 = vector.extract_strided_slice %401 {offsets = [0, 32], sizes = [2, 32], strides = [1, 1]} : vector<2x128xf32> to vector<2x32xf32>
    %405 = vector.extract_strided_slice %402 {offsets = [0, 64], sizes = [2, 32], strides = [1, 1]} : vector<2x128xf32> to vector<2x32xf32>
    %406 = vector.extract_strided_slice %401 {offsets = [0, 96], sizes = [2, 32], strides = [1, 1]} : vector<2x128xf32> to vector<2x32xf32>
    %407 = arith.mulf %404, %377 : vector<2x32xf32>
    %408 = arith.mulf %403, %405 : vector<2x32xf32>
    %409 = arith.addf %407, %408 : vector<2x32xf32>
    %410 = math.tanh %409 : vector<2x32xf32>
    %411 = arith.mulf %406, %410 : vector<2x32xf32>
    %412 = vector.extract_strided_slice %411 {offsets = [0, 0], sizes = [1, 32], strides = [1, 1]} : vector<2x32xf32> to vector<1x32xf32>
    %c2_112 = arith.constant 2 : index
    %c0_113 = arith.constant 0 : index
    %413 = vector.load %arg15[%c2_112, %c0_113] : memref<8x32xf32, #tpu.memory_space<vmem>>, vector<1x32xf32>
    tpu.vector_store %arg15[%c2_112, %c0_113], %412 {strides = array<i32>} : memref<8x32xf32, #tpu.memory_space<vmem>>, vector<1x32xf32>,
    %414 = vector.extract_strided_slice %411 {offsets = [1, 0], sizes = [1, 32], strides = [1, 1]} : vector<2x32xf32> to vector<1x32xf32>
    %c5_114 = arith.constant 5 : index
    %c0_115 = arith.constant 0 : index
    %415 = vector.load %arg16[%c5_114, %c0_115] : memref<8x32xf32, #tpu.memory_space<vmem>>, vector<1x32xf32>
    tpu.vector_store %arg16[%c5_114, %c0_115], %414 {strides = array<i32>} : memref<8x32xf32, #tpu.memory_space<vmem>>, vector<1x32xf32>,
    %416 = vector.extract_strided_slice %305 {offsets = [3, 0], sizes = [1, 128], strides = [1, 1]} : vector<8x128xf32> to vector<1x128xf32>
    %417 = vector.extract_strided_slice %313 {offsets = [4, 0], sizes = [1, 128], strides = [1, 1]} : vector<8x128xf32> to vector<1x128xf32>
    %418 = vector.shape_cast %416 : vector<1x128xf32> to vector<1x128xf32>
    %419 = vector.broadcast %418 : vector<1x128xf32> to vector<2x128xf32>
    %420 = vector.shape_cast %417 : vector<1x128xf32> to vector<1x128xf32>
    %421 = vector.broadcast %420 : vector<1x128xf32> to vector<2x128xf32>
    %422 = arith.select %319, %419, %421 : vector<2x128xi1>, vector<2x128xf32>
    %cst_116 = arith.constant dense<0.000000e+00> : vector<2x256xf32>
    %423 = tpu.matmul %411, %314, %cst_116 {dimension_numbers = #tpu.dot_dimension_numbers<[1], [0], [0], [1], [0, 0, 1, 1], [], []>} : vector<2x32xf32>, vector<32x256xf32>, vector<2x256xf32> -> vector<2x256xf32>
    %424 = vector.extract_strided_slice %423 {offsets = [0, 0], sizes = [2, 128], strides = [1, 1]} : vector<2x256xf32> to vector<2x128xf32>
    %425 = vector.extract_strided_slice %423 {offsets = [0, 128], sizes = [2, 128], strides = [1, 1]} : vector<2x256xf32> to vector<2x128xf32>
    %426 = arith.select %319, %424, %425 : vector<2x128xi1>, vector<2x128xf32>
    %427 = arith.addf %422, %426 : vector<2x128xf32>
    %cst_117 = arith.constant 0.000000e+00 : f32
    %428 = vector.broadcast %cst_117 : f32 to vector<2x128xf32>
    %429 = arith.subf %428, %427 : vector<2x128xf32>
    %430 = math.exp %429 : vector<2x128xf32>
    %cst_118 = arith.constant 1.000000e+00 : f32
    %431 = vector.broadcast %cst_118 : f32 to vector<2x128xf32>
    %432 = arith.addf %431, %430 : vector<2x128xf32>
    %433 = tpu.reciprocal %432 {approx = true} : vector<2x128xf32> -> vector<2x128xf32>
    %434 = math.tanh %427 : vector<2x128xf32>
    %435 = vector.extract_strided_slice %433 {offsets = [0, 0], sizes = [2, 32], strides = [1, 1]} : vector<2x128xf32> to vector<2x32xf32>
    %436 = vector.extract_strided_slice %433 {offsets = [0, 32], sizes = [2, 32], strides = [1, 1]} : vector<2x128xf32> to vector<2x32xf32>
    %437 = vector.extract_strided_slice %434 {offsets = [0, 64], sizes = [2, 32], strides = [1, 1]} : vector<2x128xf32> to vector<2x32xf32>
    %438 = vector.extract_strided_slice %433 {offsets = [0, 96], sizes = [2, 32], strides = [1, 1]} : vector<2x128xf32> to vector<2x32xf32>
    %439 = arith.mulf %436, %409 : vector<2x32xf32>
    %440 = arith.mulf %435, %437 : vector<2x32xf32>
    %441 = arith.addf %439, %440 : vector<2x32xf32>
    %442 = math.tanh %441 : vector<2x32xf32>
    %443 = arith.mulf %438, %442 : vector<2x32xf32>
    %444 = vector.extract_strided_slice %443 {offsets = [0, 0], sizes = [1, 32], strides = [1, 1]} : vector<2x32xf32> to vector<1x32xf32>
    %c3_119 = arith.constant 3 : index
    %c0_120 = arith.constant 0 : index
    %445 = vector.load %arg15[%c3_119, %c0_120] : memref<8x32xf32, #tpu.memory_space<vmem>>, vector<1x32xf32>
    tpu.vector_store %arg15[%c3_119, %c0_120], %444 {strides = array<i32>} : memref<8x32xf32, #tpu.memory_space<vmem>>, vector<1x32xf32>,
    %446 = vector.extract_strided_slice %443 {offsets = [1, 0], sizes = [1, 32], strides = [1, 1]} : vector<2x32xf32> to vector<1x32xf32>
    %c4_121 = arith.constant 4 : index
    %c0_122 = arith.constant 0 : index
    %447 = vector.load %arg16[%c4_121, %c0_122] : memref<8x32xf32, #tpu.memory_space<vmem>>, vector<1x32xf32>
    tpu.vector_store %arg16[%c4_121, %c0_122], %446 {strides = array<i32>} : memref<8x32xf32, #tpu.memory_space<vmem>>, vector<1x32xf32>,
    %448 = vector.extract_strided_slice %305 {offsets = [4, 0], sizes = [1, 128], strides = [1, 1]} : vector<8x128xf32> to vector<1x128xf32>
    %449 = vector.extract_strided_slice %313 {offsets = [3, 0], sizes = [1, 128], strides = [1, 1]} : vector<8x128xf32> to vector<1x128xf32>
    %450 = vector.shape_cast %448 : vector<1x128xf32> to vector<1x128xf32>
    %451 = vector.broadcast %450 : vector<1x128xf32> to vector<2x128xf32>
    %452 = vector.shape_cast %449 : vector<1x128xf32> to vector<1x128xf32>
    %453 = vector.broadcast %452 : vector<1x128xf32> to vector<2x128xf32>
    %454 = arith.select %319, %451, %453 : vector<2x128xi1>, vector<2x128xf32>
    %cst_123 = arith.constant dense<0.000000e+00> : vector<2x256xf32>
    %455 = tpu.matmul %443, %314, %cst_123 {dimension_numbers = #tpu.dot_dimension_numbers<[1], [0], [0], [1], [0, 0, 1, 1], [], []>} : vector<2x32xf32>, vector<32x256xf32>, vector<2x256xf32> -> vector<2x256xf32>
    %456 = vector.extract_strided_slice %455 {offsets = [0, 0], sizes = [2, 128], strides = [1, 1]} : vector<2x256xf32> to vector<2x128xf32>
    %457 = vector.extract_strided_slice %455 {offsets = [0, 128], sizes = [2, 128], strides = [1, 1]} : vector<2x256xf32> to vector<2x128xf32>
    %458 = arith.select %319, %456, %457 : vector<2x128xi1>, vector<2x128xf32>
    %459 = arith.addf %454, %458 : vector<2x128xf32>
    %cst_124 = arith.constant 0.000000e+00 : f32
    %460 = vector.broadcast %cst_124 : f32 to vector<2x128xf32>
    %461 = arith.subf %460, %459 : vector<2x128xf32>
    %462 = math.exp %461 : vector<2x128xf32>
    %cst_125 = arith.constant 1.000000e+00 : f32
    %463 = vector.broadcast %cst_125 : f32 to vector<2x128xf32>
    %464 = arith.addf %463, %462 : vector<2x128xf32>
    %465 = tpu.reciprocal %464 {approx = true} : vector<2x128xf32> -> vector<2x128xf32>
    %466 = math.tanh %459 : vector<2x128xf32>
    %467 = vector.extract_strided_slice %465 {offsets = [0, 0], sizes = [2, 32], strides = [1, 1]} : vector<2x128xf32> to vector<2x32xf32>
    %468 = vector.extract_strided_slice %465 {offsets = [0, 32], sizes = [2, 32], strides = [1, 1]} : vector<2x128xf32> to vector<2x32xf32>
    %469 = vector.extract_strided_slice %466 {offsets = [0, 64], sizes = [2, 32], strides = [1, 1]} : vector<2x128xf32> to vector<2x32xf32>
    %470 = vector.extract_strided_slice %465 {offsets = [0, 96], sizes = [2, 32], strides = [1, 1]} : vector<2x128xf32> to vector<2x32xf32>
    %471 = arith.mulf %468, %441 : vector<2x32xf32>
    %472 = arith.mulf %467, %469 : vector<2x32xf32>
    %473 = arith.addf %471, %472 : vector<2x32xf32>
    %474 = math.tanh %473 : vector<2x32xf32>
    %475 = arith.mulf %470, %474 : vector<2x32xf32>
    %476 = vector.extract_strided_slice %475 {offsets = [0, 0], sizes = [1, 32], strides = [1, 1]} : vector<2x32xf32> to vector<1x32xf32>
    %c4_126 = arith.constant 4 : index
    %c0_127 = arith.constant 0 : index
    %477 = vector.load %arg15[%c4_126, %c0_127] : memref<8x32xf32, #tpu.memory_space<vmem>>, vector<1x32xf32>
    tpu.vector_store %arg15[%c4_126, %c0_127], %476 {strides = array<i32>} : memref<8x32xf32, #tpu.memory_space<vmem>>, vector<1x32xf32>,
    %478 = vector.extract_strided_slice %475 {offsets = [1, 0], sizes = [1, 32], strides = [1, 1]} : vector<2x32xf32> to vector<1x32xf32>
    %c3_128 = arith.constant 3 : index
    %c0_129 = arith.constant 0 : index
    %479 = vector.load %arg16[%c3_128, %c0_129] : memref<8x32xf32, #tpu.memory_space<vmem>>, vector<1x32xf32>
    tpu.vector_store %arg16[%c3_128, %c0_129], %478 {strides = array<i32>} : memref<8x32xf32, #tpu.memory_space<vmem>>, vector<1x32xf32>,
    %480 = vector.extract_strided_slice %305 {offsets = [5, 0], sizes = [1, 128], strides = [1, 1]} : vector<8x128xf32> to vector<1x128xf32>
    %481 = vector.extract_strided_slice %313 {offsets = [2, 0], sizes = [1, 128], strides = [1, 1]} : vector<8x128xf32> to vector<1x128xf32>
    %482 = vector.shape_cast %480 : vector<1x128xf32> to vector<1x128xf32>
    %483 = vector.broadcast %482 : vector<1x128xf32> to vector<2x128xf32>
    %484 = vector.shape_cast %481 : vector<1x128xf32> to vector<1x128xf32>
    %485 = vector.broadcast %484 : vector<1x128xf32> to vector<2x128xf32>
    %486 = arith.select %319, %483, %485 : vector<2x128xi1>, vector<2x128xf32>
    %cst_130 = arith.constant dense<0.000000e+00> : vector<2x256xf32>
    %487 = tpu.matmul %475, %314, %cst_130 {dimension_numbers = #tpu.dot_dimension_numbers<[1], [0], [0], [1], [0, 0, 1, 1], [], []>} : vector<2x32xf32>, vector<32x256xf32>, vector<2x256xf32> -> vector<2x256xf32>
    %488 = vector.extract_strided_slice %487 {offsets = [0, 0], sizes = [2, 128], strides = [1, 1]} : vector<2x256xf32> to vector<2x128xf32>
    %489 = vector.extract_strided_slice %487 {offsets = [0, 128], sizes = [2, 128], strides = [1, 1]} : vector<2x256xf32> to vector<2x128xf32>
    %490 = arith.select %319, %488, %489 : vector<2x128xi1>, vector<2x128xf32>
    %491 = arith.addf %486, %490 : vector<2x128xf32>
    %cst_131 = arith.constant 0.000000e+00 : f32
    %492 = vector.broadcast %cst_131 : f32 to vector<2x128xf32>
    %493 = arith.subf %492, %491 : vector<2x128xf32>
    %494 = math.exp %493 : vector<2x128xf32>
    %cst_132 = arith.constant 1.000000e+00 : f32
    %495 = vector.broadcast %cst_132 : f32 to vector<2x128xf32>
    %496 = arith.addf %495, %494 : vector<2x128xf32>
    %497 = tpu.reciprocal %496 {approx = true} : vector<2x128xf32> -> vector<2x128xf32>
    %498 = math.tanh %491 : vector<2x128xf32>
    %499 = vector.extract_strided_slice %497 {offsets = [0, 0], sizes = [2, 32], strides = [1, 1]} : vector<2x128xf32> to vector<2x32xf32>
    %500 = vector.extract_strided_slice %497 {offsets = [0, 32], sizes = [2, 32], strides = [1, 1]} : vector<2x128xf32> to vector<2x32xf32>
    %501 = vector.extract_strided_slice %498 {offsets = [0, 64], sizes = [2, 32], strides = [1, 1]} : vector<2x128xf32> to vector<2x32xf32>
    %502 = vector.extract_strided_slice %497 {offsets = [0, 96], sizes = [2, 32], strides = [1, 1]} : vector<2x128xf32> to vector<2x32xf32>
    %503 = arith.mulf %500, %473 : vector<2x32xf32>
    %504 = arith.mulf %499, %501 : vector<2x32xf32>
    %505 = arith.addf %503, %504 : vector<2x32xf32>
    %506 = math.tanh %505 : vector<2x32xf32>
    %507 = arith.mulf %502, %506 : vector<2x32xf32>
    %508 = vector.extract_strided_slice %507 {offsets = [0, 0], sizes = [1, 32], strides = [1, 1]} : vector<2x32xf32> to vector<1x32xf32>
    %c5_133 = arith.constant 5 : index
    %c0_134 = arith.constant 0 : index
    %509 = vector.load %arg15[%c5_133, %c0_134] : memref<8x32xf32, #tpu.memory_space<vmem>>, vector<1x32xf32>
    tpu.vector_store %arg15[%c5_133, %c0_134], %508 {strides = array<i32>} : memref<8x32xf32, #tpu.memory_space<vmem>>, vector<1x32xf32>,
    %510 = vector.extract_strided_slice %507 {offsets = [1, 0], sizes = [1, 32], strides = [1, 1]} : vector<2x32xf32> to vector<1x32xf32>
    %c2_135 = arith.constant 2 : index
    %c0_136 = arith.constant 0 : index
    %511 = vector.load %arg16[%c2_135, %c0_136] : memref<8x32xf32, #tpu.memory_space<vmem>>, vector<1x32xf32>
    tpu.vector_store %arg16[%c2_135, %c0_136], %510 {strides = array<i32>} : memref<8x32xf32, #tpu.memory_space<vmem>>, vector<1x32xf32>,
    %512 = vector.extract_strided_slice %305 {offsets = [6, 0], sizes = [1, 128], strides = [1, 1]} : vector<8x128xf32> to vector<1x128xf32>
    %513 = vector.extract_strided_slice %313 {offsets = [1, 0], sizes = [1, 128], strides = [1, 1]} : vector<8x128xf32> to vector<1x128xf32>
    %514 = vector.shape_cast %512 : vector<1x128xf32> to vector<1x128xf32>
    %515 = vector.broadcast %514 : vector<1x128xf32> to vector<2x128xf32>
    %516 = vector.shape_cast %513 : vector<1x128xf32> to vector<1x128xf32>
    %517 = vector.broadcast %516 : vector<1x128xf32> to vector<2x128xf32>
    %518 = arith.select %319, %515, %517 : vector<2x128xi1>, vector<2x128xf32>
    %cst_137 = arith.constant dense<0.000000e+00> : vector<2x256xf32>
    %519 = tpu.matmul %507, %314, %cst_137 {dimension_numbers = #tpu.dot_dimension_numbers<[1], [0], [0], [1], [0, 0, 1, 1], [], []>} : vector<2x32xf32>, vector<32x256xf32>, vector<2x256xf32> -> vector<2x256xf32>
    %520 = vector.extract_strided_slice %519 {offsets = [0, 0], sizes = [2, 128], strides = [1, 1]} : vector<2x256xf32> to vector<2x128xf32>
    %521 = vector.extract_strided_slice %519 {offsets = [0, 128], sizes = [2, 128], strides = [1, 1]} : vector<2x256xf32> to vector<2x128xf32>
    %522 = arith.select %319, %520, %521 : vector<2x128xi1>, vector<2x128xf32>
    %523 = arith.addf %518, %522 : vector<2x128xf32>
    %cst_138 = arith.constant 0.000000e+00 : f32
    %524 = vector.broadcast %cst_138 : f32 to vector<2x128xf32>
    %525 = arith.subf %524, %523 : vector<2x128xf32>
    %526 = math.exp %525 : vector<2x128xf32>
    %cst_139 = arith.constant 1.000000e+00 : f32
    %527 = vector.broadcast %cst_139 : f32 to vector<2x128xf32>
    %528 = arith.addf %527, %526 : vector<2x128xf32>
    %529 = tpu.reciprocal %528 {approx = true} : vector<2x128xf32> -> vector<2x128xf32>
    %530 = math.tanh %523 : vector<2x128xf32>
    %531 = vector.extract_strided_slice %529 {offsets = [0, 0], sizes = [2, 32], strides = [1, 1]} : vector<2x128xf32> to vector<2x32xf32>
    %532 = vector.extract_strided_slice %529 {offsets = [0, 32], sizes = [2, 32], strides = [1, 1]} : vector<2x128xf32> to vector<2x32xf32>
    %533 = vector.extract_strided_slice %530 {offsets = [0, 64], sizes = [2, 32], strides = [1, 1]} : vector<2x128xf32> to vector<2x32xf32>
    %534 = vector.extract_strided_slice %529 {offsets = [0, 96], sizes = [2, 32], strides = [1, 1]} : vector<2x128xf32> to vector<2x32xf32>
    %535 = arith.mulf %532, %505 : vector<2x32xf32>
    %536 = arith.mulf %531, %533 : vector<2x32xf32>
    %537 = arith.addf %535, %536 : vector<2x32xf32>
    %538 = math.tanh %537 : vector<2x32xf32>
    %539 = arith.mulf %534, %538 : vector<2x32xf32>
    %540 = vector.extract_strided_slice %539 {offsets = [0, 0], sizes = [1, 32], strides = [1, 1]} : vector<2x32xf32> to vector<1x32xf32>
    %c6_140 = arith.constant 6 : index
    %c0_141 = arith.constant 0 : index
    %541 = vector.load %arg15[%c6_140, %c0_141] : memref<8x32xf32, #tpu.memory_space<vmem>>, vector<1x32xf32>
    tpu.vector_store %arg15[%c6_140, %c0_141], %540 {strides = array<i32>} : memref<8x32xf32, #tpu.memory_space<vmem>>, vector<1x32xf32>,
    %542 = vector.extract_strided_slice %539 {offsets = [1, 0], sizes = [1, 32], strides = [1, 1]} : vector<2x32xf32> to vector<1x32xf32>
    %c1_142 = arith.constant 1 : index
    %c0_143 = arith.constant 0 : index
    %543 = vector.load %arg16[%c1_142, %c0_143] : memref<8x32xf32, #tpu.memory_space<vmem>>, vector<1x32xf32>
    tpu.vector_store %arg16[%c1_142, %c0_143], %542 {strides = array<i32>} : memref<8x32xf32, #tpu.memory_space<vmem>>, vector<1x32xf32>,
    %544 = vector.extract_strided_slice %305 {offsets = [7, 0], sizes = [1, 128], strides = [1, 1]} : vector<8x128xf32> to vector<1x128xf32>
    %545 = vector.extract_strided_slice %313 {offsets = [0, 0], sizes = [1, 128], strides = [1, 1]} : vector<8x128xf32> to vector<1x128xf32>
    %546 = vector.shape_cast %544 : vector<1x128xf32> to vector<1x128xf32>
    %547 = vector.broadcast %546 : vector<1x128xf32> to vector<2x128xf32>
    %548 = vector.shape_cast %545 : vector<1x128xf32> to vector<1x128xf32>
    %549 = vector.broadcast %548 : vector<1x128xf32> to vector<2x128xf32>
    %550 = arith.select %319, %547, %549 : vector<2x128xi1>, vector<2x128xf32>
    %cst_144 = arith.constant dense<0.000000e+00> : vector<2x256xf32>
    %551 = tpu.matmul %539, %314, %cst_144 {dimension_numbers = #tpu.dot_dimension_numbers<[1], [0], [0], [1], [0, 0, 1, 1], [], []>} : vector<2x32xf32>, vector<32x256xf32>, vector<2x256xf32> -> vector<2x256xf32>
    %552 = vector.extract_strided_slice %551 {offsets = [0, 0], sizes = [2, 128], strides = [1, 1]} : vector<2x256xf32> to vector<2x128xf32>
    %553 = vector.extract_strided_slice %551 {offsets = [0, 128], sizes = [2, 128], strides = [1, 1]} : vector<2x256xf32> to vector<2x128xf32>
    %554 = arith.select %319, %552, %553 : vector<2x128xi1>, vector<2x128xf32>
    %555 = arith.addf %550, %554 : vector<2x128xf32>
    %cst_145 = arith.constant 0.000000e+00 : f32
    %556 = vector.broadcast %cst_145 : f32 to vector<2x128xf32>
    %557 = arith.subf %556, %555 : vector<2x128xf32>
    %558 = math.exp %557 : vector<2x128xf32>
    %cst_146 = arith.constant 1.000000e+00 : f32
    %559 = vector.broadcast %cst_146 : f32 to vector<2x128xf32>
    %560 = arith.addf %559, %558 : vector<2x128xf32>
    %561 = tpu.reciprocal %560 {approx = true} : vector<2x128xf32> -> vector<2x128xf32>
    %562 = math.tanh %555 : vector<2x128xf32>
    %563 = vector.extract_strided_slice %561 {offsets = [0, 0], sizes = [2, 32], strides = [1, 1]} : vector<2x128xf32> to vector<2x32xf32>
    %564 = vector.extract_strided_slice %561 {offsets = [0, 32], sizes = [2, 32], strides = [1, 1]} : vector<2x128xf32> to vector<2x32xf32>
    %565 = vector.extract_strided_slice %562 {offsets = [0, 64], sizes = [2, 32], strides = [1, 1]} : vector<2x128xf32> to vector<2x32xf32>
    %566 = vector.extract_strided_slice %561 {offsets = [0, 96], sizes = [2, 32], strides = [1, 1]} : vector<2x128xf32> to vector<2x32xf32>
    %567 = arith.mulf %564, %537 : vector<2x32xf32>
    %568 = arith.mulf %563, %565 : vector<2x32xf32>
    %569 = arith.addf %567, %568 : vector<2x32xf32>
    %570 = math.tanh %569 : vector<2x32xf32>
    %571 = arith.mulf %566, %570 : vector<2x32xf32>
    %572 = vector.extract_strided_slice %571 {offsets = [0, 0], sizes = [1, 32], strides = [1, 1]} : vector<2x32xf32> to vector<1x32xf32>
    %c7_147 = arith.constant 7 : index
    %c0_148 = arith.constant 0 : index
    %573 = vector.load %arg15[%c7_147, %c0_148] : memref<8x32xf32, #tpu.memory_space<vmem>>, vector<1x32xf32>
    tpu.vector_store %arg15[%c7_147, %c0_148], %572 {strides = array<i32>} : memref<8x32xf32, #tpu.memory_space<vmem>>, vector<1x32xf32>,
    %574 = vector.extract_strided_slice %571 {offsets = [1, 0], sizes = [1, 32], strides = [1, 1]} : vector<2x32xf32> to vector<1x32xf32>
    %c0_149 = arith.constant 0 : index
    %c0_150 = arith.constant 0 : index
    %575 = vector.load %arg16[%c0_149, %c0_150] : memref<8x32xf32, #tpu.memory_space<vmem>>, vector<1x32xf32>
    tpu.vector_store %arg16[%c0_149, %c0_150], %574 {strides = array<i32>} : memref<8x32xf32, #tpu.memory_space<vmem>>, vector<1x32xf32>,
    %c2_151 = arith.constant 2 : index
    %c0_152 = arith.constant 0 : index
    %576 = vector.load %arg17[%c2_151, %c0_152] : memref<4x32xf32, #tpu.memory_space<vmem>>, vector<2x32xf32>
    tpu.vector_store %arg17[%c2_151, %c0_152], %571 {strides = array<i32>} : memref<4x32xf32, #tpu.memory_space<vmem>>, vector<2x32xf32>,
    %c2_153 = arith.constant 2 : index
    %c0_154 = arith.constant 0 : index
    %577 = vector.load %arg18[%c2_153, %c0_154] : memref<4x32xf32, #tpu.memory_space<vmem>>, vector<2x32xf32>
    tpu.vector_store %arg18[%c2_153, %c0_154], %569 {strides = array<i32>} : memref<4x32xf32, #tpu.memory_space<vmem>>, vector<2x32xf32>,
    return
  }
  func.func @transform_0(%arg0: i32) -> (i32, i32) {
    %c0_i32 = arith.constant 0 : i32
    %c0_i32_0 = arith.constant 0 : i32
    %c0_i32_1 = arith.constant 0 : i32
    return %c0_i32, %c0_i32_0 : i32, i32
  }
  func.func @transform_1(%arg0: i32) -> (i32, i32) {
    %c0_i32 = arith.constant 0 : i32
    %c0_i32_0 = arith.constant 0 : i32
    %c0_i32_1 = arith.constant 0 : i32
    return %c0_i32, %c0_i32_0 : i32, i32
  }
  func.func @transform_2(%arg0: i32) -> (i32, i32) {
    %c0_i32 = arith.constant 0 : i32
    %c0_i32_0 = arith.constant 0 : i32
    %c0_i32_1 = arith.constant 0 : i32
    return %c0_i32, %c0_i32_0 : i32, i32
  }
  func.func @transform_3(%arg0: i32) -> (i32, i32) {
    %c0_i32 = arith.constant 0 : i32
    %c0_i32_0 = arith.constant 0 : i32
    %c0_i32_1 = arith.constant 0 : i32
    return %c0_i32, %c0_i32_0 : i32, i32
  }
  func.func @transform_4(%arg0: i32) -> (i32, i32) {
    %c0_i32 = arith.constant 0 : i32
    %c0_i32_0 = arith.constant 0 : i32
    %c0_i32_1 = arith.constant 0 : i32
    return %c0_i32, %c0_i32_0 : i32, i32
  }
  func.func @transform_5(%arg0: i32) -> (i32, i32) {
    %c0_i32 = arith.constant 0 : i32
    %c0_i32_0 = arith.constant 0 : i32
    %c0_i32_1 = arith.constant 0 : i32
    return %c0_i32, %c0_i32_0 : i32, i32
  }
  func.func @transform_6(%arg0: i32) -> (i32, i32) {
    %c0_i32 = arith.constant 0 : i32
    %c0_i32_0 = arith.constant 0 : i32
    %c0_i32_1 = arith.constant 0 : i32
    return %c0_i32, %c0_i32_0 : i32, i32
  }
  func.func @transform_7(%arg0: i32) -> (i32, i32) {
    %c0_i32 = arith.constant 0 : i32
    %c0_i32_0 = arith.constant 0 : i32
    %c0_i32_1 = arith.constant 0 : i32
    return %c0_i32, %c0_i32_0 : i32, i32
  }
  func.func @transform_8(%arg0: i32) -> (i32, i32) {
    %c0_i32 = arith.constant 0 : i32
    %c0_i32_0 = arith.constant 0 : i32
    %c0_i32_1 = arith.constant 0 : i32
    return %c0_i32, %c0_i32_0 : i32, i32
  }
  func.func @transform_9(%arg0: i32) -> (i32, i32) {
    %c0_i32 = arith.constant 0 : i32
    %c0_i32_0 = arith.constant 0 : i32
    %c0_i32_1 = arith.constant 0 : i32
    return %c0_i32, %c0_i32_0 : i32, i32
  }
  func.func @transform_10(%arg0: i32) -> (i32, i32) {
    %c0_i32 = arith.constant 0 : i32
    %c0_i32_0 = arith.constant 0 : i32
    %c0_i32_1 = arith.constant 0 : i32
    return %c0_i32, %c0_i32_0 : i32, i32
  }
  func.func @transform_11(%arg0: i32) -> (i32, i32) {
    %c0_i32 = arith.constant 0 : i32
    %c0_i32_0 = arith.constant 0 : i32
    %c0_i32_1 = arith.constant 0 : i32
    return %c0_i32, %c0_i32_0 : i32, i32
  }
  func.func @transform_12(%arg0: i32) -> (i32, i32) {
    %c0_i32 = arith.constant 0 : i32
    %c0_i32_0 = arith.constant 0 : i32
    %c0_i32_1 = arith.constant 0 : i32
    return %c0_i32, %c0_i32_0 : i32, i32
  }
  func.func @transform_13(%arg0: i32) -> (i32, i32) {
    %c0_i32 = arith.constant 0 : i32
    %c0_i32_0 = arith.constant 0 : i32
    %c0_i32_1 = arith.constant 0 : i32
    return %c0_i32, %c0_i32_0 : i32, i32
  }
  func.func @transform_14(%arg0: i32) -> (i32, i32) {
    %c0_i32 = arith.constant 0 : i32
    %c0_i32_0 = arith.constant 0 : i32
    %c0_i32_1 = arith.constant 0 : i32
    return %c0_i32, %c0_i32_0 : i32, i32
  }
  func.func @transform_15(%arg0: i32) -> (i32, i32) {
    %c0_i32 = arith.constant 0 : i32
    %c0_i32_0 = arith.constant 0 : i32
    %c0_i32_1 = arith.constant 0 : i32
    return %c0_i32, %c0_i32_0 : i32, i32
  }
  func.func @transform_16(%arg0: i32) -> (i32, i32) {
    %c0_i32 = arith.constant 0 : i32
    %c0_i32_0 = arith.constant 0 : i32
    %c0_i32_1 = arith.constant 0 : i32
    return %c0_i32, %c0_i32_0 : i32, i32
  }
  func.func @transform_17(%arg0: i32) -> (i32, i32) {
    %c0_i32 = arith.constant 0 : i32
    %c0_i32_0 = arith.constant 0 : i32
    %c0_i32_1 = arith.constant 0 : i32
    return %c0_i32, %c0_i32_0 : i32, i32
  }
}

</mosaic_0001>

<llo_original>
// kernel: bilstm_parser_forward.1
$region0: #{bilstm_parser_forward.1}
  #allocation0 [shape = 'u32[]', space=smem, size = 0x4, offset = 0x4, fixed_abs, tag = 'smem constant byte address 0x4 - core index']
  #allocation1 [shape = 'u32[144,128]{1,0:T(1,128)}', space=vmem, size = 0x12000, scoped, tag = 'internal scratch']
  #allocation2 [shape = 'f32[8,32]{1,0:T(8,128)}', space=vmem, size = 0x1000, scoped, tag = 'scratch operand']
  #allocation3 [shape = 'f32[8,32]{1,0:T(8,128)}', space=vmem, size = 0x1000, scoped, tag = 'scratch operand']
  %s0 = inlined_call_operand.vmem [shape: s32[8,1], index: 0, kind: input, shape index: {}]
  %s1 = inlined_call_operand.vmem [shape: s32[8,1], index: 1, kind: input, shape index: {}]
  %s2 = inlined_call_operand.hbm [shape: f32[128,128], index: 2, kind: input, shape index: {}]
  %s3 = inlined_call_operand.hbm [shape: f32[128,128], index: 3, kind: input, shape index: {}]
  %s4 = inlined_call_operand.hbm [shape: f32[128,128], index: 4, kind: input, shape index: {}]
  %s5 = inlined_call_operand.hbm [shape: f32[128,128], index: 5, kind: input, shape index: {}]
  %s6 = inlined_call_operand.hbm [shape: f32[32,256], index: 6, kind: input, shape index: {}]
  %s7 = inlined_call_operand.vmem [shape: f32[2,128], index: 7, kind: input, shape index: {}]
  %s8 = inlined_call_operand.hbm [shape: f32[64,128], index: 8, kind: input, shape index: {}]
  %s9 = inlined_call_operand.hbm [shape: f32[64,128], index: 9, kind: input, shape index: {}]
  %s10 = inlined_call_operand.hbm [shape: f32[32,256], index: 10, kind: input, shape index: {}]
  %s11 = inlined_call_operand.vmem [shape: f32[2,128], index: 11, kind: input, shape index: {}]
  %s12 = inlined_call_operand.vmem [shape: f32[4,32], index: 12, kind: input, shape index: {}]
  %s13 = inlined_call_operand.vmem [shape: f32[4,32], index: 13, kind: input, shape index: {}]
  %s14 = inlined_call_operand.vmem [shape: f32[8,32], index: 14, kind: output, shape index: {0}]
  %s15 = inlined_call_operand.vmem [shape: f32[8,32], index: 15, kind: output, shape index: {1}]
  %s16 = inlined_call_operand.hbm [shape: f32[4,32], index: 16, kind: output, shape index: {2}]
  %s17 = inlined_call_operand.hbm [shape: f32[4,32], index: 17, kind: output, shape index: {3}]
  %18 = xla_tuple %s14, %s15, %s16, %s17
  %s19 = sld [smem:[#allocation0]]
  $region122: #{bilstm_parser_forward.1} parent=0
    _
  %s21 = ssub.s32 1, %s19
  %s22 = scalar_select 0, %s21, %s19
  $region1: #{bilstm_parser_forward.1} parent=0
    #allocation4 [shape = 'u8[65536]{0}', space=vmem, size = 0x10000, scoped, tag = 'input window, operand 2, single buffered']
    #allocation5 [shape = 's32[1]{0}', space=sflag, size = 0x4, scoped, tag = 'scoped memory for bilstm_parser_forward.1']
    #allocation6 [shape = 's32[1]{0}', space=sflag, size = 0x4, scoped, tag = 'scoped memory for bilstm_parser_forward.1']
    #allocation7 [shape = 'u8[65536]{0}', space=vmem, size = 0x10000, scoped, tag = 'input window, operand 3, single buffered']
    #allocation8 [shape = 's32[1]{0}', space=sflag, size = 0x4, scoped, tag = 'scoped memory for bilstm_parser_forward.1']
    #allocation9 [shape = 'u8[65536]{0}', space=vmem, size = 0x10000, scoped, tag = 'input window, operand 4, single buffered']
    #allocation10 [shape = 'u8[65536]{0}', space=vmem, size = 0x10000, scoped, tag = 'input window, operand 5, single buffered']
    #allocation11 [shape = 's32[1]{0}', space=sflag, size = 0x4, scoped, tag = 'scoped memory for bilstm_parser_forward.1']
    #allocation12 [shape = 'u8[32768]{0}', space=vmem, size = 0x8000, scoped, tag = 'input window, operand 6, single buffered']
    #allocation13 [shape = 'u8[32768]{0}', space=vmem, size = 0x8000, scoped, tag = 'input window, operand 8, single buffered']
    #allocation14 [shape = 's32[1]{0}', space=sflag, size = 0x4, scoped, tag = 'scoped memory for bilstm_parser_forward.1']
    #allocation15 [shape = 'u8[32768]{0}', space=vmem, size = 0x8000, scoped, tag = 'input window, operand 9, single buffered']
    #allocation16 [shape = 'u8[32768]{0}', space=vmem, size = 0x8000, scoped, tag = 'input window, operand 10, single buffered']
    #allocation17 [shape = 's32[1]{0}', space=sflag, size = 0x4, scoped, tag = 'scoped memory for bilstm_parser_forward.1']
    #allocation18 [shape = 'u8[2048]{0}', space=vmem, size = 0x800, scoped, tag = 'output window, operand 2, single buffered']
    #allocation19 [shape = 'u8[2048]{0}', space=vmem, size = 0x800, scoped, tag = 'output window, operand 3, single buffered']
    #allocation20 [shape = 's32[1]{0}', space=sflag, size = 0x4, scoped, tag = 'scoped memory for bilstm_parser_forward.1']
    %23 = vsyncpa [#allocation5], 0
    %24 = vsyncpa [#allocation8], 0
    %25 = vsyncpa [#allocation11], 0
    %26 = vsyncpa [#allocation14], 0
    %27 = vsyncpa [#allocation17], 0
    %28 = vsyncpa [#allocation6], 0
    %29 = vsyncpa [#allocation20], 0
    // Predicated region
    $region2: #{bilstm_parser_forward.1} parent=1 // pred_check
      _
    $region3: #{bilstm_parser_forward.1} parent=1 // pred_check_branch
      %31 = sbr.rel (0) target = $region5
    $region4: #{bilstm_parser_forward.1} parent=1 // pred_region
      _
    $region5: #{bilstm_parser_forward.1} parent=1 // pred_fallthru
      _
    // Predicated region
    $region6: #{bilstm_parser_forward.1} parent=1 // pred_check
      _
    $region7: #{bilstm_parser_forward.1} parent=1 // pred_check_branch
      %33 = sbr.rel (0) target = $region9
    $region8: #{bilstm_parser_forward.1} parent=1 // pred_region
      _
    $region9: #{bilstm_parser_forward.1} parent=1 // pred_fallthru
      _
    // Predicated region
    $region10: #{bilstm_parser_forward.1} parent=1 // pred_check
      _
    $region11: #{bilstm_parser_forward.1} parent=1 // pred_check_branch
      %35 = sbr.rel (0) target = $region13
    $region12: #{bilstm_parser_forward.1} parent=1 // pred_region
      %s37 = ssub.s32 2048, 2048
      %38 = vsyncadd [#allocation5], %s37
      %s39 = sshll.u32 [#allocation4], 4
      %s40 = int_to_ptr.vmem [resolvable:$true] %s39
      %45 = dma.hbm_to_vmem [thread:$0]  %s2, 2048, %s40, [#allocation5], 128, 128, 8
    $region13: #{bilstm_parser_forward.1} parent=1 // pred_fallthru
      _
    // Predicated region
    $region14: #{bilstm_parser_forward.1} parent=1 // pred_check
      _
    $region15: #{bilstm_parser_forward.1} parent=1 // pred_check_branch
      %47 = sbr.rel (0) target = $region17
    $region16: #{bilstm_parser_forward.1} parent=1 // pred_region
      %s49 = ssub.s32 2048, 2048
      %50 = vsyncadd [#allocation8], %s49
      %s51 = sshll.u32 [#allocation7], 4
      %s52 = int_to_ptr.vmem [resolvable:$true] %s51
      %57 = dma.hbm_to_vmem [thread:$0]  %s3, 2048, %s52, [#allocation8], 128, 128, 8
    $region17: #{bilstm_parser_forward.1} parent=1 // pred_fallthru
      _
    // Predicated region
    $region18: #{bilstm_parser_forward.1} parent=1 // pred_check
      _
    $region19: #{bilstm_parser_forward.1} parent=1 // pred_check_branch
      %59 = sbr.rel (0) target = $region21
    $region20: #{bilstm_parser_forward.1} parent=1 // pred_region
      %s61 = ssub.s32 2048, 2048
      %62 = vsyncadd [#allocation8], %s61
      %s63 = sshll.u32 [#allocation9], 4
      %s64 = int_to_ptr.vmem [resolvable:$true] %s63
      %69 = dma.hbm_to_vmem [thread:$0]  %s4, 2048, %s64, [#allocation8], 128, 128, 8
    $region21: #{bilstm_parser_forward.1} parent=1 // pred_fallthru
      _
    // Predicated region
    $region22: #{bilstm_parser_forward.1} parent=1 // pred_check
      _
    $region23: #{bilstm_parser_forward.1} parent=1 // pred_check_branch
      %71 = sbr.rel (0) target = $region25
    $region24: #{bilstm_parser_forward.1} parent=1 // pred_region
      %s73 = ssub.s32 2048, 2048
      %74 = vsyncadd [#allocation11], %s73
      %s75 = sshll.u32 [#allocation10], 4
      %s76 = int_to_ptr.vmem [resolvable:$true] %s75
      %81 = dma.hbm_to_vmem [thread:$0]  %s5, 2048, %s76, [#allocation11], 128, 128, 8
    $region25: #{bilstm_parser_forward.1} parent=1 // pred_fallthru
      _
    // Predicated region
    $region26: #{bilstm_parser_forward.1} parent=1 // pred_check
      _
    $region27: #{bilstm_parser_forward.1} parent=1 // pred_check_branch
      %83 = sbr.rel (0) target = $region29
    $region28: #{bilstm_parser_forward.1} parent=1 // pred_region
      %s85 = ssub.s32 1024, 1024
      %86 = vsyncadd [#allocation11], %s85
      %s87 = sshll.u32 [#allocation12], 4
      %s88 = int_to_ptr.vmem [resolvable:$true] %s87
      %93 = dma.hbm_to_vmem [thread:$0]  %s6, 1024, %s88, [#allocation11], 256, 256, 16
    $region29: #{bilstm_parser_forward.1} parent=1 // pred_fallthru
      _
    // Predicated region
    $region30: #{bilstm_parser_forward.1} parent=1 // pred_check
      _
    $region31: #{bilstm_parser_forward.1} parent=1 // pred_check_branch
      %95 = sbr.rel (0) target = $region33
    $region32: #{bilstm_parser_forward.1} parent=1 // pred_region
      _
    $region33: #{bilstm_parser_forward.1} parent=1 // pred_fallthru
      _
    // Predicated region
    $region34: #{bilstm_parser_forward.1} parent=1 // pred_check
      _
    $region35: #{bilstm_parser_forward.1} parent=1 // pred_check_branch
      %97 = sbr.rel (0) target = $region37
    $region36: #{bilstm_parser_forward.1} parent=1 // pred_region
      %s99 = ssub.s32 1024, 1024
      %100 = vsyncadd [#allocation14], %s99
      %s101 = sshll.u32 [#allocation13], 4
      %s102 = int_to_ptr.vmem [resolvable:$true] %s101
      %107 = dma.hbm_to_vmem [thread:$0]  %s8, 1024, %s102, [#allocation14], 128, 128, 8
    $region37: #{bilstm_parser_forward.1} parent=1 // pred_fallthru
      _
    // Predicated region
    $region38: #{bilstm_parser_forward.1} parent=1 // pred_check
      _
    $region39: #{bilstm_parser_forward.1} parent=1 // pred_check_branch
      %109 = sbr.rel (0) target = $region41
    $region40: #{bilstm_parser_forward.1} parent=1 // pred_region
      %s111 = ssub.s32 1024, 1024
      %112 = vsyncadd [#allocation14], %s111
      %s113 = sshll.u32 [#allocation15], 4
      %s114 = int_to_ptr.vmem [resolvable:$true] %s113
      %119 = dma.hbm_to_vmem [thread:$0]  %s9, 1024, %s114, [#allocation14], 128, 128, 8
    $region41: #{bilstm_parser_forward.1} parent=1 // pred_fallthru
      _
    // Predicated region
    $region42: #{bilstm_parser_forward.1} parent=1 // pred_check
      _
    $region43: #{bilstm_parser_forward.1} parent=1 // pred_check_branch
      %121 = sbr.rel (0) target = $region45
    $region44: #{bilstm_parser_forward.1} parent=1 // pred_region
      %s123 = ssub.s32 1024, 1024
      %124 = vsyncadd [#allocation17], %s123
      %s125 = sshll.u32 [#allocation16], 4
      %s126 = int_to_ptr.vmem [resolvable:$true] %s125
      %131 = dma.hbm_to_vmem [thread:$0]  %s10, 1024, %s126, [#allocation17], 256, 256, 16
    $region45: #{bilstm_parser_forward.1} parent=1 // pred_fallthru
      _
    // Predicated region
    $region46: #{bilstm_parser_forward.1} parent=1 // pred_check
      _
    $region47: #{bilstm_parser_forward.1} parent=1 // pred_check_branch
      %133 = sbr.rel (0) target = $region49
    $region48: #{bilstm_parser_forward.1} parent=1 // pred_region
      _
    $region49: #{bilstm_parser_forward.1} parent=1 // pred_fallthru
      _
    // Predicated region
    $region50: #{bilstm_parser_forward.1} parent=1 // pred_check
      _
    $region51: #{bilstm_parser_forward.1} parent=1 // pred_check_branch
      %135 = sbr.rel (0) target = $region53
    $region52: #{bilstm_parser_forward.1} parent=1 // pred_region
      _
    $region53: #{bilstm_parser_forward.1} parent=1 // pred_fallthru
      _
    // Predicated region
    $region54: #{bilstm_parser_forward.1} parent=1 // pred_check
      _
    $region55: #{bilstm_parser_forward.1} parent=1 // pred_check_branch
      %137 = sbr.rel (0) target = $region57
    $region56: #{bilstm_parser_forward.1} parent=1 // pred_region
      _
    $region57: #{bilstm_parser_forward.1} parent=1 // pred_fallthru
      _
    // Predicated region
    $region58: #{bilstm_parser_forward.1} parent=1 // pred_check
      _
    $region59: #{bilstm_parser_forward.1} parent=1 // pred_check_branch
      %139 = sbr.rel (0) target = $region61
    $region60: #{bilstm_parser_forward.1} parent=1 // pred_region
      %140 = dma.done [#allocation5], 2048
    $region61: #{bilstm_parser_forward.1} parent=1 // pred_fallthru
      _
    // Predicated region
    $region62: #{bilstm_parser_forward.1} parent=1 // pred_check
      _
    $region63: #{bilstm_parser_forward.1} parent=1 // pred_check_branch
      %142 = sbr.rel (0) target = $region65
    $region64: #{bilstm_parser_forward.1} parent=1 // pred_region
      %143 = dma.done [#allocation8], 2048
    $region65: #{bilstm_parser_forward.1} parent=1 // pred_fallthru
      _
    // Predicated region
    $region66: #{bilstm_parser_forward.1} parent=1 // pred_check
      _
    $region67: #{bilstm_parser_forward.1} parent=1 // pred_check_branch
      %145 = sbr.rel (0) target = $region69
    $region68: #{bilstm_parser_forward.1} parent=1 // pred_region
      %146 = dma.done [#allocation8], 2048
    $region69: #{bilstm_parser_forward.1} parent=1 // pred_fallthru
      _
    // Predicated region
    $region70: #{bilstm_parser_forward.1} parent=1 // pred_check
      _
    $region71: #{bilstm_parser_forward.1} parent=1 // pred_check_branch
      %148 = sbr.rel (0) target = $region73
    $region72: #{bilstm_parser_forward.1} parent=1 // pred_region
      %149 = dma.done [#allocation11], 2048
    $region73: #{bilstm_parser_forward.1} parent=1 // pred_fallthru
      _
    // Predicated region
    $region74: #{bilstm_parser_forward.1} parent=1 // pred_check
      _
    $region75: #{bilstm_parser_forward.1} parent=1 // pred_check_branch
      %151 = sbr.rel (0) target = $region77
    $region76: #{bilstm_parser_forward.1} parent=1 // pred_region
      %152 = dma.done [#allocation11], 1024
    $region77: #{bilstm_parser_forward.1} parent=1 // pred_fallthru
      _
    // Predicated region
    $region78: #{bilstm_parser_forward.1} parent=1 // pred_check
      _
    $region79: #{bilstm_parser_forward.1} parent=1 // pred_check_branch
      %154 = sbr.rel (0) target = $region81
    $region80: #{bilstm_parser_forward.1} parent=1 // pred_region
      %155 = dma.done [#allocation14], 1024
    $region81: #{bilstm_parser_forward.1} parent=1 // pred_fallthru
      _
    // Predicated region
    $region82: #{bilstm_parser_forward.1} parent=1 // pred_check
      _
    $region83: #{bilstm_parser_forward.1} parent=1 // pred_check_branch
      %157 = sbr.rel (0) target = $region85
    $region84: #{bilstm_parser_forward.1} parent=1 // pred_region
      %158 = dma.done [#allocation14], 1024
    $region85: #{bilstm_parser_forward.1} parent=1 // pred_fallthru
      _
    // Predicated region
    $region86: #{bilstm_parser_forward.1} parent=1 // pred_check
      _
    $region87: #{bilstm_parser_forward.1} parent=1 // pred_check_branch
      %160 = sbr.rel (0) target = $region89
    $region88: #{bilstm_parser_forward.1} parent=1 // pred_region
      %161 = dma.done [#allocation17], 1024
    $region89: #{bilstm_parser_forward.1} parent=1 // pred_fallthru
      _
    %v162 = vld [vmem:[%s0] sm:$0xff]
    %v163 = vlaneseq
    %v164 = vand.u32 %v163, 127
    %165 = vset.pattern.permute.xlu0 0
    %166 = vperm.xlu0 %165, %v162
    %v167 = vpop.permute.xlu0 %166
    %vm168 = vcmp.eq.s32.totalorder %v167, %v164
    %v169 = vsel %vm168, 1, 0
    %v170 = vcvt.s32.f32 %v169
    %v171 = vld [vmem:[%s1] sm:$0xff]
    %172 = vset.pattern.permute.xlu0 0
    %173 = vperm.xlu0 %172, %v171
    %v174 = vpop.permute.xlu0 %173
    %vm175 = vcmp.eq.s32.totalorder %v174, %v164
    %v176 = vsel %vm175, 1, 0
    %v177 = vcvt.s32.f32 %v176
    %v178 = vld [vmem:[%s7] sm:$0x3]
    %v179 = vld [vmem:[%s11] sm:$0x3]
    %v180 = vld [vmem:[%s12] sm:$0xf]
    %v181 = vld [vmem:[%s13] sm:$0xf]
    %v182 = vld [vmem:[#allocation4] sm:$0xff]
    %v183 = vld [vmem:[#allocation4 + $0x8] sm:$0xff]
    %v184 = vld [vmem:[#allocation4 + $0x10] sm:$0xff]
    %v185 = vld [vmem:[#allocation4 + $0x18] sm:$0xff]
    %v186 = vld [vmem:[#allocation4 + $0x20] sm:$0xff]
    %v187 = vld [vmem:[#allocation4 + $0x28] sm:$0xff]
    %v188 = vld [vmem:[#allocation4 + $0x30] sm:$0xff]
    %v189 = vld [vmem:[#allocation4 + $0x38] sm:$0xff]
    %v190 = vld [vmem:[#allocation4 + $0x40] sm:$0xff]
    %v191 = vld [vmem:[#allocation4 + $0x48] sm:$0xff]
    %v192 = vld [vmem:[#allocation4 + $0x50] sm:$0xff]
    %v193 = vld [vmem:[#allocation4 + $0x58] sm:$0xff]
    %v194 = vld [vmem:[#allocation4 + $0x60] sm:$0xff]
    %v195 = vld [vmem:[#allocation4 + $0x68] sm:$0xff]
    %v196 = vld [vmem:[#allocation4 + $0x70] sm:$0xff]
    %v197 = vld [vmem:[#allocation4 + $0x78] sm:$0xff]
    %v198 = vld [vmem:[#allocation7] sm:$0xff]
    %v199 = vld [vmem:[#allocation7 + $0x8] sm:$0xff]
    %v200 = vld [vmem:[#allocation7 + $0x10] sm:$0xff]
    %v201 = vld [vmem:[#allocation7 + $0x18] sm:$0xff]
    %v202 = vld [vmem:[#allocation7 + $0x20] sm:$0xff]
    %v203 = vld [vmem:[#allocation7 + $0x28] sm:$0xff]
    %v204 = vld [vmem:[#allocation7 + $0x30] sm:$0xff]
    %v205 = vld [vmem:[#allocation7 + $0x38] sm:$0xff]
    %v206 = vld [vmem:[#allocation7 + $0x40] sm:$0xff]
    %v207 = vld [vmem:[#allocation7 + $0x48] sm:$0xff]
    %v208 = vld [vmem:[#allocation7 + $0x50] sm:$0xff]
    %v209 = vld [vmem:[#allocation7 + $0x58] sm:$0xff]
    %v210 = vld [vmem:[#allocation7 + $0x60] sm:$0xff]
    %v211 = vld [vmem:[#allocation7 + $0x68] sm:$0xff]
    %v212 = vld [vmem:[#allocation7 + $0x70] sm:$0xff]
    %v213 = vld [vmem:[#allocation7 + $0x78] sm:$0xff]
    %214 = vmatprep.subr.mxu0 0.0
    %215 = vmatpush1.msra.mxu0 %v213
    %216 = vmatprep.subr.mxu0 0.0
    %217 = vmatpush1.msra.mxu0 %v212
    %218 = vmatprep.subr.mxu0 0.0
    %219 = vmatpush1.msra.mxu0 %v211
    %220 = vmatprep.subr.mxu0 0.0
    %221 = vmatpush1.msra.mxu0 %v210
    %222 = vmatprep.subr.mxu0 0.0
    %223 = vmatpush1.msra.mxu0 %v209
    %224 = vmatprep.subr.mxu0 0.0
    %225 = vmatpush1.msra.mxu0 %v208
    %226 = vmatprep.subr.mxu0 0.0
    %227 = vmatpush1.msra.mxu0 %v207
    %228 = vmatprep.subr.mxu0 0.0
    %229 = vmatpush1.msra.mxu0 %v206
    %230 = vmatprep.subr.mxu0 0.0
    %231 = vmatpush1.msra.mxu0 %v205
    %232 = vmatprep.subr.mxu0 0.0
    %233 = vmatpush1.msra.mxu0 %v204
    %234 = vmatprep.subr.mxu0 0.0
    %235 = vmatpush1.msra.mxu0 %v203
    %236 = vmatprep.subr.mxu0 0.0
    %237 = vmatpush1.msra.mxu0 %v202
    %238 = vmatprep.subr.mxu0 0.0
    %239 = vmatpush1.msra.mxu0 %v201
    %240 = vmatprep.subr.mxu0 0.0
    %241 = vmatpush1.msra.mxu0 %v200
    %242 = vmatprep.subr.mxu0 0.0
    %243 = vmatpush1.msra.mxu0 %v199
    %244 = vmatprep.subr.mxu0 0.0
    %245 = vmatpush1.msra.mxu0 %v198
    %246 = vmatprep.subr.mxu0 0.0
    %247 = vmatpush2.msra.mxu0 0.0
    %248 = vmatprep.subr.mxu0 0.0
    %249 = vmatpush2.msra.mxu0 0.0
    %250 = vmatprep.subr.mxu0 0.0
    %251 = vmatpush2.msra.mxu0 0.0
    %252 = vmatprep.subr.mxu0 0.0
    %253 = vmatpush2.msra.mxu0 0.0
    %254 = vmatprep.subr.mxu0 0.0
    %255 = vmatpush2.msra.mxu0 0.0
    %256 = vmatprep.subr.mxu0 0.0
    %257 = vmatpush2.msra.mxu0 0.0
    %258 = vmatprep.subr.mxu0 0.0
    %259 = vmatpush2.msra.mxu0 0.0
    %260 = vmatprep.subr.mxu0 0.0
    %261 = vmatpush2.msra.mxu0 0.0
    %262 = vmatprep.subr.mxu0 0.0
    %263 = vmatpush2.msra.mxu0 0.0
    %264 = vmatprep.subr.mxu0 0.0
    %265 = vmatpush2.msra.mxu0 0.0
    %266 = vmatprep.subr.mxu0 0.0
    %267 = vmatpush2.msra.mxu0 0.0
    %268 = vmatprep.subr.mxu0 0.0
    %269 = vmatpush2.msra.mxu0 0.0
    %270 = vmatprep.subr.mxu0 0.0
    %271 = vmatpush2.msra.mxu0 0.0
    %272 = vmatprep.subr.mxu0 0.0
    %273 = vmatpush2.msra.mxu0 0.0
    %274 = vmatprep.subr.mxu0 0.0
    %275 = vmatpush2.msra.mxu0 0.0
    %276 = vmatprep.subr.mxu0 0.0
    %277 = vmatpush2.msra.mxu0 0.0
    %278 = vmatprep.mubr.f32.mxu0 0.0
    %279 = vmatmul.mubr.f32.gmra.mxu0 %v177
    %v280 = vpop.f32.mrf.mxu0
    %v281 = vadd.f32 0.0, %v280
    %v282 = vpop.f32.mrf.mxu0
    %283 = vdwg.mxu0
    %284 = vmatprep.subr.mxu0 0.0
    %285 = vmatpush1.msra.mxu0 %v197
    %286 = vmatprep.subr.mxu0 0.0
    %287 = vmatpush1.msra.mxu0 %v196
    %288 = vmatprep.subr.mxu0 0.0
    %289 = vmatpush1.msra.mxu0 %v195
    %290 = vmatprep.subr.mxu0 0.0
    %291 = vmatpush1.msra.mxu0 %v194
    %292 = vmatprep.subr.mxu0 0.0
    %293 = vmatpush1.msra.mxu0 %v193
    %294 = vmatprep.subr.mxu0 0.0
    %295 = vmatpush1.msra.mxu0 %v192
    %296 = vmatprep.subr.mxu0 0.0
    %297 = vmatpush1.msra.mxu0 %v191
    %298 = vmatprep.subr.mxu0 0.0
    %299 = vmatpush1.msra.mxu0 %v190
    %300 = vmatprep.subr.mxu0 0.0
    %301 = vmatpush1.msra.mxu0 %v189
    %302 = vmatprep.subr.mxu0 0.0
    %303 = vmatpush1.msra.mxu0 %v188
    %304 = vmatprep.subr.mxu0 0.0
    %305 = vmatpush1.msra.mxu0 %v187
    %306 = vmatprep.subr.mxu0 0.0
    %307 = vmatpush1.msra.mxu0 %v186
    %308 = vmatprep.subr.mxu0 0.0
    %309 = vmatpush1.msra.mxu0 %v185
    %310 = vmatprep.subr.mxu0 0.0
    %311 = vmatpush1.msra.mxu0 %v184
    %312 = vmatprep.subr.mxu0 0.0
    %313 = vmatpush1.msra.mxu0 %v183
    %314 = vmatprep.subr.mxu0 0.0
    %315 = vmatpush1.msra.mxu0 %v182
    %316 = vmatprep.subr.mxu0 0.0
    %317 = vmatpush2.msra.mxu0 0.0
    %318 = vmatprep.subr.mxu0 0.0
    %319 = vmatpush2.msra.mxu0 0.0
    %320 = vmatprep.subr.mxu0 0.0
    %321 = vmatpush2.msra.mxu0 0.0
    %322 = vmatprep.subr.mxu0 0.0
    %323 = vmatpush2.msra.mxu0 0.0
    %324 = vmatprep.subr.mxu0 0.0
    %325 = vmatpush2.msra.mxu0 0.0
    %326 = vmatprep.subr.mxu0 0.0
    %327 = vmatpush2.msra.mxu0 0.0
    %328 = vmatprep.subr.mxu0 0.0
    %329 = vmatpush2.msra.mxu0 0.0
    %330 = vmatprep.subr.mxu0 0.0
    %331 = vmatpush2.msra.mxu0 0.0
    %332 = vmatprep.subr.mxu0 0.0
    %333 = vmatpush2.msra.mxu0 0.0
    %334 = vmatprep.subr.mxu0 0.0
    %335 = vmatpush2.msra.mxu0 0.0
    %336 = vmatprep.subr.mxu0 0.0
    %337 = vmatpush2.msra.mxu0 0.0
    %338 = vmatprep.subr.mxu0 0.0
    %339 = vmatpush2.msra.mxu0 0.0
    %340 = vmatprep.subr.mxu0 0.0
    %341 = vmatpush2.msra.mxu0 0.0
    %342 = vmatprep.subr.mxu0 0.0
    %343 = vmatpush2.msra.mxu0 0.0
    %344 = vmatprep.subr.mxu0 0.0
    %345 = vmatpush2.msra.mxu0 0.0
    %346 = vmatprep.subr.mxu0 0.0
    %347 = vmatpush2.msra.mxu0 0.0
    %348 = vmatprep.mubr.f32.mxu0 0.0
    %349 = vmatmul.mubr.f32.gmra.mxu0 %v170
    %v350 = vpop.f32.mrf.mxu0
    %v351 = vadd.f32 %v281, %v350
    %v352 = vpop.f32.mrf.mxu0
    %353 = vdwg.mxu0
    %v354 = vlaneseq
    %v355 = vshrl.u32 %v354, 7
    %v356 = vsub.s32 0, %v355
    %v357 = vrot.slane %v178, %v356
    %v358 = vadd.f32 %v351, %v357
    %v359 = vld [vmem:[#allocation9] sm:$0xff]
    %v360 = vld [vmem:[#allocation9 + $0x8] sm:$0xff]
    %v361 = vld [vmem:[#allocation9 + $0x10] sm:$0xff]
    %v362 = vld [vmem:[#allocation9 + $0x18] sm:$0xff]
    %v363 = vld [vmem:[#allocation9 + $0x20] sm:$0xff]
    %v364 = vld [vmem:[#allocation9 + $0x28] sm:$0xff]
    %v365 = vld [vmem:[#allocation9 + $0x30] sm:$0xff]
    %v366 = vld [vmem:[#allocation9 + $0x38] sm:$0xff]
    %v367 = vld [vmem:[#allocation9 + $0x40] sm:$0xff]
    %v368 = vld [vmem:[#allocation9 + $0x48] sm:$0xff]
    %v369 = vld [vmem:[#allocation9 + $0x50] sm:$0xff]
    %v370 = vld [vmem:[#allocation9 + $0x58] sm:$0xff]
    %v371 = vld [vmem:[#allocation9 + $0x60] sm:$0xff]
    %v372 = vld [vmem:[#allocation9 + $0x68] sm:$0xff]
    %v373 = vld [vmem:[#allocation9 + $0x70] sm:$0xff]
    %v374 = vld [vmem:[#allocation9 + $0x78] sm:$0xff]
    %v375 = vld [vmem:[#allocation10] sm:$0xff]
    %v376 = vld [vmem:[#allocation10 + $0x8] sm:$0xff]
    %v377 = vld [vmem:[#allocation10 + $0x10] sm:$0xff]
    %v378 = vld [vmem:[#allocation10 + $0x18] sm:$0xff]
    %v379 = vld [vmem:[#allocation10 + $0x20] sm:$0xff]
    %v380 = vld [vmem:[#allocation10 + $0x28] sm:$0xff]
    %v381 = vld [vmem:[#allocation10 + $0x30] sm:$0xff]
    %v382 = vld [vmem:[#allocation10 + $0x38] sm:$0xff]
    %v383 = vld [vmem:[#allocation10 + $0x40] sm:$0xff]
    %v384 = vld [vmem:[#allocation10 + $0x48] sm:$0xff]
    %v385 = vld [vmem:[#allocation10 + $0x50] sm:$0xff]
    %v386 = vld [vmem:[#allocation10 + $0x58] sm:$0xff]
    %v387 = vld [vmem:[#allocation10 + $0x60] sm:$0xff]
    %v388 = vld [vmem:[#allocation10 + $0x68] sm:$0xff]
    %v389 = vld [vmem:[#allocation10 + $0x70] sm:$0xff]
    %v390 = vld [vmem:[#allocation10 + $0x78] sm:$0xff]
    %391 = vmatprep.subr.mxu0 0.0
    %392 = vmatpush1.msra.mxu0 %v390
    %393 = vmatprep.subr.mxu0 0.0
    %394 = vmatpush1.msra.mxu0 %v389
    %395 = vmatprep.subr.mxu0 0.0
    %396 = vmatpush1.msra.mxu0 %v388
    %397 = vmatprep.subr.mxu0 0.0
    %398 = vmatpush1.msra.mxu0 %v387
    %399 = vmatprep.subr.mxu0 0.0
    %400 = vmatpush1.msra.mxu0 %v386
    %401 = vmatprep.subr.mxu0 0.0
    %402 = vmatpush1.msra.mxu0 %v385
    %403 = vmatprep.subr.mxu0 0.0
    %404 = vmatpush1.msra.mxu0 %v384
    %405 = vmatprep.subr.mxu0 0.0
    %406 = vmatpush1.msra.mxu0 %v383
    %407 = vmatprep.subr.mxu0 0.0
    %408 = vmatpush1.msra.mxu0 %v382
    %409 = vmatprep.subr.mxu0 0.0
    %410 = vmatpush1.msra.mxu0 %v381
    %411 = vmatprep.subr.mxu0 0.0
    %412 = vmatpush1.msra.mxu0 %v380
    %413 = vmatprep.subr.mxu0 0.0
    %414 = vmatpush1.msra.mxu0 %v379
    %415 = vmatprep.subr.mxu0 0.0
    %416 = vmatpush1.msra.mxu0 %v378
    %417 = vmatprep.subr.mxu0 0.0
    %418 = vmatpush1.msra.mxu0 %v377
    %419 = vmatprep.subr.mxu0 0.0
    %420 = vmatpush1.msra.mxu0 %v376
    %421 = vmatprep.subr.mxu0 0.0
    %422 = vmatpush1.msra.mxu0 %v375
    %423 = vmatprep.subr.mxu0 0.0
    %424 = vmatpush2.msra.mxu0 0.0
    %425 = vmatprep.subr.mxu0 0.0
    %426 = vmatpush2.msra.mxu0 0.0
    %427 = vmatprep.subr.mxu0 0.0
    %428 = vmatpush2.msra.mxu0 0.0
    %429 = vmatprep.subr.mxu0 0.0
    %430 = vmatpush2.msra.mxu0 0.0
    %431 = vmatprep.subr.mxu0 0.0
    %432 = vmatpush2.msra.mxu0 0.0
    %433 = vmatprep.subr.mxu0 0.0
    %434 = vmatpush2.msra.mxu0 0.0
    %435 = vmatprep.subr.mxu0 0.0
    %436 = vmatpush2.msra.mxu0 0.0
    %437 = vmatprep.subr.mxu0 0.0
    %438 = vmatpush2.msra.mxu0 0.0
    %439 = vmatprep.subr.mxu0 0.0
    %440 = vmatpush2.msra.mxu0 0.0
    %441 = vmatprep.subr.mxu0 0.0
    %442 = vmatpush2.msra.mxu0 0.0
    %443 = vmatprep.subr.mxu0 0.0
    %444 = vmatpush2.msra.mxu0 0.0
    %445 = vmatprep.subr.mxu0 0.0
    %446 = vmatpush2.msra.mxu0 0.0
    %447 = vmatprep.subr.mxu0 0.0
    %448 = vmatpush2.msra.mxu0 0.0
    %449 = vmatprep.subr.mxu0 0.0
    %450 = vmatpush2.msra.mxu0 0.0
    %451 = vmatprep.subr.mxu0 0.0
    %452 = vmatpush2.msra.mxu0 0.0
    %453 = vmatprep.subr.mxu0 0.0
    %454 = vmatpush2.msra.mxu0 0.0
    %455 = vmatprep.mubr.f32.mxu0 0.0
    %456 = vmatmul.mubr.f32.gmra.mxu0 %v177
    %v457 = vpop.f32.mrf.mxu0
    %v458 = vadd.f32 0.0, %v457
    %v459 = vpop.f32.mrf.mxu0
    %460 = vdwg.mxu0
    %461 = vmatprep.subr.mxu0 0.0
    %462 = vmatpush1.msra.mxu0 %v374
    %463 = vmatprep.subr.mxu0 0.0
    %464 = vmatpush1.msra.mxu0 %v373
    %465 = vmatprep.subr.mxu0 0.0
    %466 = vmatpush1.msra.mxu0 %v372
    %467 = vmatprep.subr.mxu0 0.0
    %468 = vmatpush1.msra.mxu0 %v371
    %469 = vmatprep.subr.mxu0 0.0
    %470 = vmatpush1.msra.mxu0 %v370
    %471 = vmatprep.subr.mxu0 0.0
    %472 = vmatpush1.msra.mxu0 %v369
    %473 = vmatprep.subr.mxu0 0.0
    %474 = vmatpush1.msra.mxu0 %v368
    %475 = vmatprep.subr.mxu0 0.0
    %476 = vmatpush1.msra.mxu0 %v367
    %477 = vmatprep.subr.mxu0 0.0
    %478 = vmatpush1.msra.mxu0 %v366
    %479 = vmatprep.subr.mxu0 0.0
    %480 = vmatpush1.msra.mxu0 %v365
    %481 = vmatprep.subr.mxu0 0.0
    %482 = vmatpush1.msra.mxu0 %v364
    %483 = vmatprep.subr.mxu0 0.0
    %484 = vmatpush1.msra.mxu0 %v363
    %485 = vmatprep.subr.mxu0 0.0
    %486 = vmatpush1.msra.mxu0 %v362
    %487 = vmatprep.subr.mxu0 0.0
    %488 = vmatpush1.msra.mxu0 %v361
    %489 = vmatprep.subr.mxu0 0.0
    %490 = vmatpush1.msra.mxu0 %v360
    %491 = vmatprep.subr.mxu0 0.0
    %492 = vmatpush1.msra.mxu0 %v359
    %493 = vmatprep.subr.mxu0 0.0
    %494 = vmatpush2.msra.mxu0 0.0
    %495 = vmatprep.subr.mxu0 0.0
    %496 = vmatpush2.msra.mxu0 0.0
    %497 = vmatprep.subr.mxu0 0.0
    %498 = vmatpush2.msra.mxu0 0.0
    %499 = vmatprep.subr.mxu0 0.0
    %500 = vmatpush2.msra.mxu0 0.0
    %501 = vmatprep.subr.mxu0 0.0
    %502 = vmatpush2.msra.mxu0 0.0
    %503 = vmatprep.subr.mxu0 0.0
    %504 = vmatpush2.msra.mxu0 0.0
    %505 = vmatprep.subr.mxu0 0.0
    %506 = vmatpush2.msra.mxu0 0.0
    %507 = vmatprep.subr.mxu0 0.0
    %508 = vmatpush2.msra.mxu0 0.0
    %509 = vmatprep.subr.mxu0 0.0
    %510 = vmatpush2.msra.mxu0 0.0
    %511 = vmatprep.subr.mxu0 0.0
    %512 = vmatpush2.msra.mxu0 0.0
    %513 = vmatprep.subr.mxu0 0.0
    %514 = vmatpush2.msra.mxu0 0.0
    %515 = vmatprep.subr.mxu0 0.0
    %516 = vmatpush2.msra.mxu0 0.0
    %517 = vmatprep.subr.mxu0 0.0
    %518 = vmatpush2.msra.mxu0 0.0
    %519 = vmatprep.subr.mxu0 0.0
    %520 = vmatpush2.msra.mxu0 0.0
    %521 = vmatprep.subr.mxu0 0.0
    %522 = vmatpush2.msra.mxu0 0.0
    %523 = vmatprep.subr.mxu0 0.0
    %524 = vmatpush2.msra.mxu0 0.0
    %525 = vmatprep.mubr.f32.mxu0 0.0
    %526 = vmatmul.mubr.f32.gmra.mxu0 %v170
    %v527 = vpop.f32.mrf.mxu0
    %v528 = vadd.f32 %v458, %v527
    %v529 = vpop.f32.mrf.mxu0
    %530 = vdwg.mxu0
    %v531 = vlaneseq
    %v532 = vshrl.u32 %v531, 7
    %v533 = vsub.s32 1, %v532
    %v534 = vrot.slane %v178, %v533
    %v535 = vadd.f32 %v528, %v534
    %v536 = vld [vmem:[#allocation12] sm:$0xff]
    %v537 = vld [vmem:[#allocation12 + $0x8] sm:$0xff]
    %v538 = vld [vmem:[#allocation12 + $0x10] sm:$0xff]
    %v539 = vld [vmem:[#allocation12 + $0x18] sm:$0xff]
    %v540 = vld [vmem:[#allocation12 + $0x20] sm:$0xff]
    %v541 = vld [vmem:[#allocation12 + $0x28] sm:$0xff]
    %v542 = vld [vmem:[#allocation12 + $0x30] sm:$0xff]
    %v543 = vld [vmem:[#allocation12 + $0x38] sm:$0xff]
    %v544 = vlaneseq
    %v545 = vshrl.u32 %v544, 7
    %vm546 = vcmp.eq.s32.totalorder %v545, 0
    %v547 = vlaneseq
    %v548 = vshrl.u32 %v547, 7
    %v549 = vsub.s32 0, %v548
    %v550 = vrot.slane %v358, %v549
    %v551 = vlaneseq
    %v552 = vshrl.u32 %v551, 7
    %v553 = vsub.s32 7, %v552
    %v554 = vrot.slane %v535, %v553
    %v555 = vsel %vm546, %v550, %v554
    %vm556 = vcmask 261120
    %v558 = vsel %vm556, %v180, 0
    %560 = vmatprep.subr.mxu0 0.0
    %561 = vmatpush1.msra.mxu0 0.0
    %562 = vmatprep.subr.mxu0 0.0
    %563 = vmatpush1.msra.mxu0 0.0
    %564 = vmatprep.subr.mxu0 0.0
    %565 = vmatpush1.msra.mxu0 0.0
    %566 = vmatprep.subr.mxu0 0.0
    %567 = vmatpush1.msra.mxu0 0.0
    %568 = vmatprep.subr.mxu0 0.0
    %569 = vmatpush1.msra.mxu0 0.0
    %570 = vmatprep.subr.mxu0 0.0
    %571 = vmatpush1.msra.mxu0 0.0
    %572 = vmatprep.subr.mxu0 0.0
    %573 = vmatpush1.msra.mxu0 0.0
    %574 = vmatprep.subr.mxu0 0.0
    %575 = vmatpush1.msra.mxu0 0.0
    %576 = vmatprep.subr.mxu0 0.0
    %577 = vmatpush1.msra.mxu0 0.0
    %578 = vmatprep.subr.mxu0 0.0
    %579 = vmatpush1.msra.mxu0 0.0
    %580 = vmatprep.subr.mxu0 0.0
    %581 = vmatpush1.msra.mxu0 0.0
    %582 = vmatprep.subr.mxu0 0.0
    %583 = vmatpush1.msra.mxu0 0.0
    %584 = vmatprep.subr.mxu0 %v543
    %585 = vmatpush1.msra.mxu0 %v542
    %586 = vmatprep.subr.mxu0 %v541
    %587 = vmatpush1.msra.mxu0 %v540
    %588 = vmatprep.subr.mxu0 %v539
    %589 = vmatpush1.msra.mxu0 %v538
    %590 = vmatprep.subr.mxu0 %v537
    %591 = vmatpush1.msra.mxu0 %v536
    %592 = vmatprep.subr.mxu0 0.0
    %593 = vmatpush2.msra.mxu0 0.0
    %594 = vmatprep.subr.mxu0 0.0
    %595 = vmatpush2.msra.mxu0 0.0
    %596 = vmatprep.subr.mxu0 0.0
    %597 = vmatpush2.msra.mxu0 0.0
    %598 = vmatprep.subr.mxu0 0.0
    %599 = vmatpush2.msra.mxu0 0.0
    %600 = vmatprep.subr.mxu0 0.0
    %601 = vmatpush2.msra.mxu0 0.0
    %602 = vmatprep.subr.mxu0 0.0
    %603 = vmatpush2.msra.mxu0 0.0
    %604 = vmatprep.subr.mxu0 0.0
    %605 = vmatpush2.msra.mxu0 0.0
    %606 = vmatprep.subr.mxu0 0.0
    %607 = vmatpush2.msra.mxu0 0.0
    %608 = vmatprep.subr.mxu0 0.0
    %609 = vmatpush2.msra.mxu0 0.0
    %610 = vmatprep.subr.mxu0 0.0
    %611 = vmatpush2.msra.mxu0 0.0
    %612 = vmatprep.subr.mxu0 0.0
    %613 = vmatpush2.msra.mxu0 0.0
    %614 = vmatprep.subr.mxu0 0.0
    %615 = vmatpush2.msra.mxu0 0.0
    %616 = vmatprep.subr.mxu0 0.0
    %617 = vmatpush2.msra.mxu0 0.0
    %618 = vmatprep.subr.mxu0 0.0
    %619 = vmatpush2.msra.mxu0 0.0
    %620 = vmatprep.subr.mxu0 0.0
    %621 = vmatpush2.msra.mxu0 0.0
    %622 = vmatprep.subr.mxu0 0.0
    %623 = vmatpush2.msra.mxu0 0.0
    %624 = vmatprep.mubr.f32.mxu0 0.0
    %625 = vmatmul.mubr.f32.gmra.mxu0 %v558
    %v626 = vpop.f32.mrf.mxu0
    %v627 = vadd.f32 0.0, %v626
    %v628 = vpop.f32.mrf.mxu0
    %v629 = vadd.f32 0.0, %v628
    %630 = vdwg.mxu0
    %v631 = vsel %vm546, %v627, %v629
    %v632 = vadd.f32 %v555, %v631
    %v633 = vsub.f32 0.0, %v632
    %v634 = vmul.f32 %v633, 1.442695
    %v635 = vpow.pop %v634
    %v636 = vadd.f32 %v635, 1.0
    %v637 = vrcp.pop %v636
    %v638 = vtanh.pop %v632
    %640 = vrot.lane.b32.xlu0 %v181, 32
    %v641 = vpop.permute.xlu0 %640
    %v643 = vmul.f32 %v637, %v641
    %645 = vrot.lane.b32.xlu0 %v638, 64
    %v646 = vpop.permute.xlu0 %645
    %v648 = vmul.f32 %v637, %v646
    %650 = vrot.lane.b32.xlu0 %v648, 32
    %v651 = vpop.permute.xlu0 %650
    %v653 = vadd.f32 %v643, %v651
    %v654 = vtanh.pop %v653
    %656 = vrot.lane.b32.xlu0 %v654, 64
    %v657 = vpop.permute.xlu0 %656
    %v659 = vmul.f32 %v637, %v657
    %661 = vrot.lane.b32.xlu0 %v659, 32
    %v662 = vpop.permute.xlu0 %661
    %vm664 = vcmask 253952
    %665 = vst.msk [vmem:[#allocation2] sm:$0x1] %vm664, %v662
    %vm666 = vcmask 254977
    %667 = vst.msk [vmem:[#allocation3 + $0x6] sm:$0x2] %vm666, %v662
    %v668 = vlaneseq
    %v669 = vshrl.u32 %v668, 7
    %v670 = vsub.s32 1, %v669
    %v671 = vrot.slane %v358, %v670
    %v672 = vlaneseq
    %v673 = vshrl.u32 %v672, 7
    %v674 = vsub.s32 6, %v673
    %v675 = vrot.slane %v535, %v674
    %v676 = vsel %vm546, %v671, %v675
    %v677 = vsel %vm556, %v662, 0
    %679 = vmatprep.subr.mxu0 0.0
    %680 = vmatpush1.msra.mxu0 0.0
    %681 = vmatprep.subr.mxu0 0.0
    %682 = vmatpush1.msra.mxu0 0.0
    %683 = vmatprep.subr.mxu0 0.0
    %684 = vmatpush1.msra.mxu0 0.0
    %685 = vmatprep.subr.mxu0 0.0
    %686 = vmatpush1.msra.mxu0 0.0
    %687 = vmatprep.subr.mxu0 0.0
    %688 = vmatpush1.msra.mxu0 0.0
    %689 = vmatprep.subr.mxu0 0.0
    %690 = vmatpush1.msra.mxu0 0.0
    %691 = vmatprep.subr.mxu0 0.0
    %692 = vmatpush1.msra.mxu0 0.0
    %693 = vmatprep.subr.mxu0 0.0
    %694 = vmatpush1.msra.mxu0 0.0
    %695 = vmatprep.subr.mxu0 0.0
    %696 = vmatpush1.msra.mxu0 0.0
    %697 = vmatprep.subr.mxu0 0.0
    %698 = vmatpush1.msra.mxu0 0.0
    %699 = vmatprep.subr.mxu0 0.0
    %700 = vmatpush1.msra.mxu0 0.0
    %701 = vmatprep.subr.mxu0 0.0
    %702 = vmatpush1.msra.mxu0 0.0
    %703 = vmatprep.subr.mxu0 %v543
    %704 = vmatpush1.msra.mxu0 %v542
    %705 = vmatprep.subr.mxu0 %v541
    %706 = vmatpush1.msra.mxu0 %v540
    %707 = vmatprep.subr.mxu0 %v539
    %708 = vmatpush1.msra.mxu0 %v538
    %709 = vmatprep.subr.mxu0 %v537
    %710 = vmatpush1.msra.mxu0 %v536
    %711 = vmatprep.subr.mxu0 0.0
    %712 = vmatpush2.msra.mxu0 0.0
    %713 = vmatprep.subr.mxu0 0.0
    %714 = vmatpush2.msra.mxu0 0.0
    %715 = vmatprep.subr.mxu0 0.0
    %716 = vmatpush2.msra.mxu0 0.0
    %717 = vmatprep.subr.mxu0 0.0
    %718 = vmatpush2.msra.mxu0 0.0
    %719 = vmatprep.subr.mxu0 0.0
    %720 = vmatpush2.msra.mxu0 0.0
    %721 = vmatprep.subr.mxu0 0.0
    %722 = vmatpush2.msra.mxu0 0.0
    %723 = vmatprep.subr.mxu0 0.0
    %724 = vmatpush2.msra.mxu0 0.0
    %725 = vmatprep.subr.mxu0 0.0
    %726 = vmatpush2.msra.mxu0 0.0
    %727 = vmatprep.subr.mxu0 0.0
    %728 = vmatpush2.msra.mxu0 0.0
    %729 = vmatprep.subr.mxu0 0.0
    %730 = vmatpush2.msra.mxu0 0.0
    %731 = vmatprep.subr.mxu0 0.0
    %732 = vmatpush2.msra.mxu0 0.0
    %733 = vmatprep.subr.mxu0 0.0
    %734 = vmatpush2.msra.mxu0 0.0
    %735 = vmatprep.subr.mxu0 0.0
    %736 = vmatpush2.msra.mxu0 0.0
    %737 = vmatprep.subr.mxu0 0.0
    %738 = vmatpush2.msra.mxu0 0.0
    %739 = vmatprep.subr.mxu0 0.0
    %740 = vmatpush2.msra.mxu0 0.0
    %741 = vmatprep.subr.mxu0 0.0
    %742 = vmatpush2.msra.mxu0 0.0
    %743 = vmatprep.mubr.f32.mxu0 0.0
    %744 = vmatmul.mubr.f32.gmra.mxu0 %v677
    %v745 = vpop.f32.mrf.mxu0
    %v746 = vadd.f32 0.0, %v745
    %v747 = vpop.f32.mrf.mxu0
    %v748 = vadd.f32 0.0, %v747
    %749 = vdwg.mxu0
    %v750 = vsel %vm546, %v746, %v748
    %v751 = vadd.f32 %v676, %v750
    %v752 = vsub.f32 0.0, %v751
    %v753 = vmul.f32 %v752, 1.442695
    %v754 = vpow.pop %v753
    %v755 = vadd.f32 %v754, 1.0
    %v756 = vrcp.pop %v755
    %v757 = vtanh.pop %v751
    %v758 = vmul.f32 %v756, %v653
    %760 = vrot.lane.b32.xlu0 %v757, 64
    %v761 = vpop.permute.xlu0 %760
    %v763 = vmul.f32 %v756, %v761
    %765 = vrot.lane.b32.xlu0 %v763, 32
    %v766 = vpop.permute.xlu0 %765
    %v768 = vadd.f32 %v758, %v766
    %v769 = vtanh.pop %v768
    %771 = vrot.lane.b32.xlu0 %v769, 64
    %v772 = vpop.permute.xlu0 %771
    %v774 = vmul.f32 %v756, %v772
    %776 = vrot.lane.b32.xlu0 %v774, 32
    %v777 = vpop.permute.xlu0 %776
    %779 = vst.msk [vmem:[#allocation2 + $0x1] sm:$0x1] %vm664, %v777
    %780 = vst.msk [vmem:[#allocation3 + $0x5] sm:$0x2] %vm666, %v777
    %v781 = vlaneseq
    %v782 = vshrl.u32 %v781, 7
    %v783 = vsub.s32 2, %v782
    %v784 = vrot.slane %v358, %v783
    %v785 = vlaneseq
    %v786 = vshrl.u32 %v785, 7
    %v787 = vsub.s32 5, %v786
    %v788 = vrot.slane %v535, %v787
    %v789 = vsel %vm546, %v784, %v788
    %v790 = vsel %vm556, %v777, 0
    %792 = vmatprep.subr.mxu0 0.0
    %793 = vmatpush1.msra.mxu0 0.0
    %794 = vmatprep.subr.mxu0 0.0
    %795 = vmatpush1.msra.mxu0 0.0
    %796 = vmatprep.subr.mxu0 0.0
    %797 = vmatpush1.msra.mxu0 0.0
    %798 = vmatprep.subr.mxu0 0.0
    %799 = vmatpush1.msra.mxu0 0.0
    %800 = vmatprep.subr.mxu0 0.0
    %801 = vmatpush1.msra.mxu0 0.0
    %802 = vmatprep.subr.mxu0 0.0
    %803 = vmatpush1.msra.mxu0 0.0
    %804 = vmatprep.subr.mxu0 0.0
    %805 = vmatpush1.msra.mxu0 0.0
    %806 = vmatprep.subr.mxu0 0.0
    %807 = vmatpush1.msra.mxu0 0.0
    %808 = vmatprep.subr.mxu0 0.0
    %809 = vmatpush1.msra.mxu0 0.0
    %810 = vmatprep.subr.mxu0 0.0
    %811 = vmatpush1.msra.mxu0 0.0
    %812 = vmatprep.subr.mxu0 0.0
    %813 = vmatpush1.msra.mxu0 0.0
    %814 = vmatprep.subr.mxu0 0.0
    %815 = vmatpush1.msra.mxu0 0.0
    %816 = vmatprep.subr.mxu0 %v543
    %817 = vmatpush1.msra.mxu0 %v542
    %818 = vmatprep.subr.mxu0 %v541
    %819 = vmatpush1.msra.mxu0 %v540
    %820 = vmatprep.subr.mxu0 %v539
    %821 = vmatpush1.msra.mxu0 %v538
    %822 = vmatprep.subr.mxu0 %v537
    %823 = vmatpush1.msra.mxu0 %v536
    %824 = vmatprep.subr.mxu0 0.0
    %825 = vmatpush2.msra.mxu0 0.0
    %826 = vmatprep.subr.mxu0 0.0
    %827 = vmatpush2.msra.mxu0 0.0
    %828 = vmatprep.subr.mxu0 0.0
    %829 = vmatpush2.msra.mxu0 0.0
    %830 = vmatprep.subr.mxu0 0.0
    %831 = vmatpush2.msra.mxu0 0.0
    %832 = vmatprep.subr.mxu0 0.0
    %833 = vmatpush2.msra.mxu0 0.0
    %834 = vmatprep.subr.mxu0 0.0
    %835 = vmatpush2.msra.mxu0 0.0
    %836 = vmatprep.subr.mxu0 0.0
    %837 = vmatpush2.msra.mxu0 0.0
    %838 = vmatprep.subr.mxu0 0.0
    %839 = vmatpush2.msra.mxu0 0.0
    %840 = vmatprep.subr.mxu0 0.0
    %841 = vmatpush2.msra.mxu0 0.0
    %842 = vmatprep.subr.mxu0 0.0
    %843 = vmatpush2.msra.mxu0 0.0
    %844 = vmatprep.subr.mxu0 0.0
    %845 = vmatpush2.msra.mxu0 0.0
    %846 = vmatprep.subr.mxu0 0.0
    %847 = vmatpush2.msra.mxu0 0.0
    %848 = vmatprep.subr.mxu0 0.0
    %849 = vmatpush2.msra.mxu0 0.0
    %850 = vmatprep.subr.mxu0 0.0
    %851 = vmatpush2.msra.mxu0 0.0
    %852 = vmatprep.subr.mxu0 0.0
    %853 = vmatpush2.msra.mxu0 0.0
    %854 = vmatprep.subr.mxu0 0.0
    %855 = vmatpush2.msra.mxu0 0.0
    %856 = vmatprep.mubr.f32.mxu0 0.0
    %857 = vmatmul.mubr.f32.gmra.mxu0 %v790
    %v858 = vpop.f32.mrf.mxu0
    %v859 = vadd.f32 0.0, %v858
    %v860 = vpop.f32.mrf.mxu0
    %v861 = vadd.f32 0.0, %v860
    %862 = vdwg.mxu0
    %v863 = vsel %vm546, %v859, %v861
    %v864 = vadd.f32 %v789, %v863
    %v865 = vsub.f32 0.0, %v864
    %v866 = vmul.f32 %v865, 1.442695
    %v867 = vpow.pop %v866
    %v868 = vadd.f32 %v867, 1.0
    %v869 = vrcp.pop %v868
    %v870 = vtanh.pop %v864
    %v871 = vmul.f32 %v869, %v768
    %873 = vrot.lane.b32.xlu0 %v870, 64
    %v874 = vpop.permute.xlu0 %873
    %v876 = vmul.f32 %v869, %v874
    %878 = vrot.lane.b32.xlu0 %v876, 32
    %v879 = vpop.permute.xlu0 %878
    %v881 = vadd.f32 %v871, %v879
    %v882 = vtanh.pop %v881
    %884 = vrot.lane.b32.xlu0 %v882, 64
    %v885 = vpop.permute.xlu0 %884
    %v887 = vmul.f32 %v869, %v885
    %889 = vrot.lane.b32.xlu0 %v887, 32
    %v890 = vpop.permute.xlu0 %889
    %892 = vst.msk [vmem:[#allocation2 + $0x2] sm:$0x1] %vm664, %v890
    %893 = vst.msk [vmem:[#allocation3 + $0x4] sm:$0x2] %vm666, %v890
    %v894 = vlaneseq
    %v895 = vshrl.u32 %v894, 7
    %v896 = vsub.s32 3, %v895
    %v897 = vrot.slane %v358, %v896
    %v898 = vlaneseq
    %v899 = vshrl.u32 %v898, 7
    %v900 = vsub.s32 4, %v899
    %v901 = vrot.slane %v535, %v900
    %v902 = vsel %vm546, %v897, %v901
    %v903 = vsel %vm556, %v890, 0
    %905 = vmatprep.subr.mxu0 0.0
    %906 = vmatpush1.msra.mxu0 0.0
    %907 = vmatprep.subr.mxu0 0.0
    %908 = vmatpush1.msra.mxu0 0.0
    %909 = vmatprep.subr.mxu0 0.0
    %910 = vmatpush1.msra.mxu0 0.0
    %911 = vmatprep.subr.mxu0 0.0
    %912 = vmatpush1.msra.mxu0 0.0
    %913 = vmatprep.subr.mxu0 0.0
    %914 = vmatpush1.msra.mxu0 0.0
    %915 = vmatprep.subr.mxu0 0.0
    %916 = vmatpush1.msra.mxu0 0.0
    %917 = vmatprep.subr.mxu0 0.0
    %918 = vmatpush1.msra.mxu0 0.0
    %919 = vmatprep.subr.mxu0 0.0
    %920 = vmatpush1.msra.mxu0 0.0
    %921 = vmatprep.subr.mxu0 0.0
    %922 = vmatpush1.msra.mxu0 0.0
    %923 = vmatprep.subr.mxu0 0.0
    %924 = vmatpush1.msra.mxu0 0.0
    %925 = vmatprep.subr.mxu0 0.0
    %926 = vmatpush1.msra.mxu0 0.0
    %927 = vmatprep.subr.mxu0 0.0
    %928 = vmatpush1.msra.mxu0 0.0
    %929 = vmatprep.subr.mxu0 %v543
    %930 = vmatpush1.msra.mxu0 %v542
    %931 = vmatprep.subr.mxu0 %v541
    %932 = vmatpush1.msra.mxu0 %v540
    %933 = vmatprep.subr.mxu0 %v539
    %934 = vmatpush1.msra.mxu0 %v538
    %935 = vmatprep.subr.mxu0 %v537
    %936 = vmatpush1.msra.mxu0 %v536
    %937 = vmatprep.subr.mxu0 0.0
    %938 = vmatpush2.msra.mxu0 0.0
    %939 = vmatprep.subr.mxu0 0.0
    %940 = vmatpush2.msra.mxu0 0.0
    %941 = vmatprep.subr.mxu0 0.0
    %942 = vmatpush2.msra.mxu0 0.0
    %943 = vmatprep.subr.mxu0 0.0
    %944 = vmatpush2.msra.mxu0 0.0
    %945 = vmatprep.subr.mxu0 0.0
    %946 = vmatpush2.msra.mxu0 0.0
    %947 = vmatprep.subr.mxu0 0.0
    %948 = vmatpush2.msra.mxu0 0.0
    %949 = vmatprep.subr.mxu0 0.0
    %950 = vmatpush2.msra.mxu0 0.0
    %951 = vmatprep.subr.mxu0 0.0
    %952 = vmatpush2.msra.mxu0 0.0
    %953 = vmatprep.subr.mxu0 0.0
    %954 = vmatpush2.msra.mxu0 0.0
    %955 = vmatprep.subr.mxu0 0.0
    %956 = vmatpush2.msra.mxu0 0.0
    %957 = vmatprep.subr.mxu0 0.0
    %958 = vmatpush2.msra.mxu0 0.0
    %959 = vmatprep.subr.mxu0 0.0
    %960 = vmatpush2.msra.mxu0 0.0
    %961 = vmatprep.subr.mxu0 0.0
    %962 = vmatpush2.msra.mxu0 0.0
    %963 = vmatprep.subr.mxu0 0.0
    %964 = vmatpush2.msra.mxu0 0.0
    %965 = vmatprep.subr.mxu0 0.0
    %966 = vmatpush2.msra.mxu0 0.0
    %967 = vmatprep.subr.mxu0 0.0
    %968 = vmatpush2.msra.mxu0 0.0
    %969 = vmatprep.mubr.f32.mxu0 0.0
    %970 = vmatmul.mubr.f32.gmra.mxu0 %v903
    %v971 = vpop.f32.mrf.mxu0
    %v972 = vadd.f32 0.0, %v971
    %v973 = vpop.f32.mrf.mxu0
    %v974 = vadd.f32 0.0, %v973
    %975 = vdwg.mxu0
    %v976 = vsel %vm546, %v972, %v974
    %v977 = vadd.f32 %v902, %v976
    %v978 = vsub.f32 0.0, %v977
    %v979 = vmul.f32 %v978, 1.442695
    %v980 = vpow.pop %v979
    %v981 = vadd.f32 %v980, 1.0
    %v982 = vrcp.pop %v981
    %v983 = vtanh.pop %v977
    %v984 = vmul.f32 %v982, %v881
    %986 = vrot.lane.b32.xlu0 %v983, 64
    %v987 = vpop.permute.xlu0 %986
    %v989 = vmul.f32 %v982, %v987
    %991 = vrot.lane.b32.xlu0 %v989, 32
    %v992 = vpop.permute.xlu0 %991
    %v994 = vadd.f32 %v984, %v992
    %v995 = vtanh.pop %v994
    %997 = vrot.lane.b32.xlu0 %v995, 64
    %v998 = vpop.permute.xlu0 %997
    %v1000 = vmul.f32 %v982, %v998
    %1002 = vrot.lane.b32.xlu0 %v1000, 32
    %v1003 = vpop.permute.xlu0 %1002
    %1005 = vst.msk [vmem:[#allocation2 + $0x3] sm:$0x1] %vm664, %v1003
    %1006 = vst.msk [vmem:[#allocation3 + $0x3] sm:$0x2] %vm666, %v1003
    %v1007 = vlaneseq
    %v1008 = vshrl.u32 %v1007, 7
    %v1009 = vsub.s32 4, %v1008
    %v1010 = vrot.slane %v358, %v1009
    %v1011 = vlaneseq
    %v1012 = vshrl.u32 %v1011, 7
    %v1013 = vsub.s32 3, %v1012
    %v1014 = vrot.slane %v535, %v1013
    %v1015 = vsel %vm546, %v1010, %v1014
    %v1016 = vsel %vm556, %v1003, 0
    %1018 = vmatprep.subr.mxu0 0.0
    %1019 = vmatpush1.msra.mxu0 0.0
    %1020 = vmatprep.subr.mxu0 0.0
    %1021 = vmatpush1.msra.mxu0 0.0
    %1022 = vmatprep.subr.mxu0 0.0
    %1023 = vmatpush1.msra.mxu0 0.0
    %1024 = vmatprep.subr.mxu0 0.0
    %1025 = vmatpush1.msra.mxu0 0.0
    %1026 = vmatprep.subr.mxu0 0.0
    %1027 = vmatpush1.msra.mxu0 0.0
    %1028 = vmatprep.subr.mxu0 0.0
    %1029 = vmatpush1.msra.mxu0 0.0
    %1030 = vmatprep.subr.mxu0 0.0
    %1031 = vmatpush1.msra.mxu0 0.0
    %1032 = vmatprep.subr.mxu0 0.0
    %1033 = vmatpush1.msra.mxu0 0.0
    %1034 = vmatprep.subr.mxu0 0.0
    %1035 = vmatpush1.msra.mxu0 0.0
    %1036 = vmatprep.subr.mxu0 0.0
    %1037 = vmatpush1.msra.mxu0 0.0
    %1038 = vmatprep.subr.mxu0 0.0
    %1039 = vmatpush1.msra.mxu0 0.0
    %1040 = vmatprep.subr.mxu0 0.0
    %1041 = vmatpush1.msra.mxu0 0.0
    %1042 = vmatprep.subr.mxu0 %v543
    %1043 = vmatpush1.msra.mxu0 %v542
    %1044 = vmatprep.subr.mxu0 %v541
    %1045 = vmatpush1.msra.mxu0 %v540
    %1046 = vmatprep.subr.mxu0 %v539
    %1047 = vmatpush1.msra.mxu0 %v538
    %1048 = vmatprep.subr.mxu0 %v537
    %1049 = vmatpush1.msra.mxu0 %v536
    %1050 = vmatprep.subr.mxu0 0.0
    %1051 = vmatpush2.msra.mxu0 0.0
    %1052 = vmatprep.subr.mxu0 0.0
    %1053 = vmatpush2.msra.mxu0 0.0
    %1054 = vmatprep.subr.mxu0 0.0
    %1055 = vmatpush2.msra.mxu0 0.0
    %1056 = vmatprep.subr.mxu0 0.0
    %1057 = vmatpush2.msra.mxu0 0.0
    %1058 = vmatprep.subr.mxu0 0.0
    %1059 = vmatpush2.msra.mxu0 0.0
    %1060 = vmatprep.subr.mxu0 0.0
    %1061 = vmatpush2.msra.mxu0 0.0
    %1062 = vmatprep.subr.mxu0 0.0
    %1063 = vmatpush2.msra.mxu0 0.0
    %1064 = vmatprep.subr.mxu0 0.0
    %1065 = vmatpush2.msra.mxu0 0.0
    %1066 = vmatprep.subr.mxu0 0.0
    %1067 = vmatpush2.msra.mxu0 0.0
    %1068 = vmatprep.subr.mxu0 0.0
    %1069 = vmatpush2.msra.mxu0 0.0
    %1070 = vmatprep.subr.mxu0 0.0
    %1071 = vmatpush2.msra.mxu0 0.0
    %1072 = vmatprep.subr.mxu0 0.0
    %1073 = vmatpush2.msra.mxu0 0.0
    %1074 = vmatprep.subr.mxu0 0.0
    %1075 = vmatpush2.msra.mxu0 0.0
    %1076 = vmatprep.subr.mxu0 0.0
    %1077 = vmatpush2.msra.mxu0 0.0
    %1078 = vmatprep.subr.mxu0 0.0
    %1079 = vmatpush2.msra.mxu0 0.0
    %1080 = vmatprep.subr.mxu0 0.0
    %1081 = vmatpush2.msra.mxu0 0.0
    %1082 = vmatprep.mubr.f32.mxu0 0.0
    %1083 = vmatmul.mubr.f32.gmra.mxu0 %v1016
    %v1084 = vpop.f32.mrf.mxu0
    %v1085 = vadd.f32 0.0, %v1084
    %v1086 = vpop.f32.mrf.mxu0
    %v1087 = vadd.f32 0.0, %v1086
    %1088 = vdwg.mxu0
    %v1089 = vsel %vm546, %v1085, %v1087
    %v1090 = vadd.f32 %v1015, %v1089
    %v1091 = vsub.f32 0.0, %v1090
    %v1092 = vmul.f32 %v1091, 1.442695
    %v1093 = vpow.pop %v1092
    %v1094 = vadd.f32 %v1093, 1.0
    %v1095 = vrcp.pop %v1094
    %v1096 = vtanh.pop %v1090
    %v1097 = vmul.f32 %v1095, %v994
    %1099 = vrot.lane.b32.xlu0 %v1096, 64
    %v1100 = vpop.permute.xlu0 %1099
    %v1102 = vmul.f32 %v1095, %v1100
    %1104 = vrot.lane.b32.xlu0 %v1102, 32
    %v1105 = vpop.permute.xlu0 %1104
    %v1107 = vadd.f32 %v1097, %v1105
    %v1108 = vtanh.pop %v1107
    %1110 = vrot.lane.b32.xlu0 %v1108, 64
    %v1111 = vpop.permute.xlu0 %1110
    %v1113 = vmul.f32 %v1095, %v1111
    %1115 = vrot.lane.b32.xlu0 %v1113, 32
    %v1116 = vpop.permute.xlu0 %1115
    %1118 = vst.msk [vmem:[#allocation2 + $0x4] sm:$0x1] %vm664, %v1116
    %1119 = vst.msk [vmem:[#allocation3 + $0x2] sm:$0x2] %vm666, %v1116
    %v1120 = vlaneseq
    %v1121 = vshrl.u32 %v1120, 7
    %v1122 = vsub.s32 5, %v1121
    %v1123 = vrot.slane %v358, %v1122
    %v1124 = vlaneseq
    %v1125 = vshrl.u32 %v1124, 7
    %v1126 = vsub.s32 2, %v1125
    %v1127 = vrot.slane %v535, %v1126
    %v1128 = vsel %vm546, %v1123, %v1127
    %v1129 = vsel %vm556, %v1116, 0
    %1131 = vmatprep.subr.mxu0 0.0
    %1132 = vmatpush1.msra.mxu0 0.0
    %1133 = vmatprep.subr.mxu0 0.0
    %1134 = vmatpush1.msra.mxu0 0.0
    %1135 = vmatprep.subr.mxu0 0.0
    %1136 = vmatpush1.msra.mxu0 0.0
    %1137 = vmatprep.subr.mxu0 0.0
    %1138 = vmatpush1.msra.mxu0 0.0
    %1139 = vmatprep.subr.mxu0 0.0
    %1140 = vmatpush1.msra.mxu0 0.0
    %1141 = vmatprep.subr.mxu0 0.0
    %1142 = vmatpush1.msra.mxu0 0.0
    %1143 = vmatprep.subr.mxu0 0.0
    %1144 = vmatpush1.msra.mxu0 0.0
    %1145 = vmatprep.subr.mxu0 0.0
    %1146 = vmatpush1.msra.mxu0 0.0
    %1147 = vmatprep.subr.mxu0 0.0
    %1148 = vmatpush1.msra.mxu0 0.0
    %1149 = vmatprep.subr.mxu0 0.0
    %1150 = vmatpush1.msra.mxu0 0.0
    %1151 = vmatprep.subr.mxu0 0.0
    %1152 = vmatpush1.msra.mxu0 0.0
    %1153 = vmatprep.subr.mxu0 0.0
    %1154 = vmatpush1.msra.mxu0 0.0
    %1155 = vmatprep.subr.mxu0 %v543
    %1156 = vmatpush1.msra.mxu0 %v542
    %1157 = vmatprep.subr.mxu0 %v541
    %1158 = vmatpush1.msra.mxu0 %v540
    %1159 = vmatprep.subr.mxu0 %v539
    %1160 = vmatpush1.msra.mxu0 %v538
    %1161 = vmatprep.subr.mxu0 %v537
    %1162 = vmatpush1.msra.mxu0 %v536
    %1163 = vmatprep.subr.mxu0 0.0
    %1164 = vmatpush2.msra.mxu0 0.0
    %1165 = vmatprep.subr.mxu0 0.0
    %1166 = vmatpush2.msra.mxu0 0.0
    %1167 = vmatprep.subr.mxu0 0.0
    %1168 = vmatpush2.msra.mxu0 0.0
    %1169 = vmatprep.subr.mxu0 0.0
    %1170 = vmatpush2.msra.mxu0 0.0
    %1171 = vmatprep.subr.mxu0 0.0
    %1172 = vmatpush2.msra.mxu0 0.0
    %1173 = vmatprep.subr.mxu0 0.0
    %1174 = vmatpush2.msra.mxu0 0.0
    %1175 = vmatprep.subr.mxu0 0.0
    %1176 = vmatpush2.msra.mxu0 0.0
    %1177 = vmatprep.subr.mxu0 0.0
    %1178 = vmatpush2.msra.mxu0 0.0
    %1179 = vmatprep.subr.mxu0 0.0
    %1180 = vmatpush2.msra.mxu0 0.0
    %1181 = vmatprep.subr.mxu0 0.0
    %1182 = vmatpush2.msra.mxu0 0.0
    %1183 = vmatprep.subr.mxu0 0.0
    %1184 = vmatpush2.msra.mxu0 0.0
    %1185 = vmatprep.subr.mxu0 0.0
    %1186 = vmatpush2.msra.mxu0 0.0
    %1187 = vmatprep.subr.mxu0 0.0
    %1188 = vmatpush2.msra.mxu0 0.0
    %1189 = vmatprep.subr.mxu0 0.0
    %1190 = vmatpush2.msra.mxu0 0.0
    %1191 = vmatprep.subr.mxu0 0.0
    %1192 = vmatpush2.msra.mxu0 0.0
    %1193 = vmatprep.subr.mxu0 0.0
    %1194 = vmatpush2.msra.mxu0 0.0
    %1195 = vmatprep.mubr.f32.mxu0 0.0
    %1196 = vmatmul.mubr.f32.gmra.mxu0 %v1129
    %v1197 = vpop.f32.mrf.mxu0
    %v1198 = vadd.f32 0.0, %v1197
    %v1199 = vpop.f32.mrf.mxu0
    %v1200 = vadd.f32 0.0, %v1199
    %1201 = vdwg.mxu0
    %v1202 = vsel %vm546, %v1198, %v1200
    %v1203 = vadd.f32 %v1128, %v1202
    %v1204 = vsub.f32 0.0, %v1203
    %v1205 = vmul.f32 %v1204, 1.442695
    %v1206 = vpow.pop %v1205
    %v1207 = vadd.f32 %v1206, 1.0
    %v1208 = vrcp.pop %v1207
    %v1209 = vtanh.pop %v1203
    %v1210 = vmul.f32 %v1208, %v1107
    %1212 = vrot.lane.b32.xlu0 %v1209, 64
    %v1213 = vpop.permute.xlu0 %1212
    %v1215 = vmul.f32 %v1208, %v1213
    %1217 = vrot.lane.b32.xlu0 %v1215, 32
    %v1218 = vpop.permute.xlu0 %1217
    %v1220 = vadd.f32 %v1210, %v1218
    %v1221 = vtanh.pop %v1220
    %1223 = vrot.lane.b32.xlu0 %v1221, 64
    %v1224 = vpop.permute.xlu0 %1223
    %v1226 = vmul.f32 %v1208, %v1224
    %1228 = vrot.lane.b32.xlu0 %v1226, 32
    %v1229 = vpop.permute.xlu0 %1228
    %1231 = vst.msk [vmem:[#allocation2 + $0x5] sm:$0x1] %vm664, %v1229
    %1232 = vst.msk [vmem:[#allocation3 + $0x1] sm:$0x2] %vm666, %v1229
    %v1233 = vlaneseq
    %v1234 = vshrl.u32 %v1233, 7
    %v1235 = vsub.s32 6, %v1234
    %v1236 = vrot.slane %v358, %v1235
    %v1237 = vlaneseq
    %v1238 = vshrl.u32 %v1237, 7
    %v1239 = vsub.s32 1, %v1238
    %v1240 = vrot.slane %v535, %v1239
    %v1241 = vsel %vm546, %v1236, %v1240
    %v1242 = vsel %vm556, %v1229, 0
    %1244 = vmatprep.subr.mxu0 0.0
    %1245 = vmatpush1.msra.mxu0 0.0
    %1246 = vmatprep.subr.mxu0 0.0
    %1247 = vmatpush1.msra.mxu0 0.0
    %1248 = vmatprep.subr.mxu0 0.0
    %1249 = vmatpush1.msra.mxu0 0.0
    %1250 = vmatprep.subr.mxu0 0.0
    %1251 = vmatpush1.msra.mxu0 0.0
    %1252 = vmatprep.subr.mxu0 0.0
    %1253 = vmatpush1.msra.mxu0 0.0
    %1254 = vmatprep.subr.mxu0 0.0
    %1255 = vmatpush1.msra.mxu0 0.0
    %1256 = vmatprep.subr.mxu0 0.0
    %1257 = vmatpush1.msra.mxu0 0.0
    %1258 = vmatprep.subr.mxu0 0.0
    %1259 = vmatpush1.msra.mxu0 0.0
    %1260 = vmatprep.subr.mxu0 0.0
    %1261 = vmatpush1.msra.mxu0 0.0
    %1262 = vmatprep.subr.mxu0 0.0
    %1263 = vmatpush1.msra.mxu0 0.0
    %1264 = vmatprep.subr.mxu0 0.0
    %1265 = vmatpush1.msra.mxu0 0.0
    %1266 = vmatprep.subr.mxu0 0.0
    %1267 = vmatpush1.msra.mxu0 0.0
    %1268 = vmatprep.subr.mxu0 %v543
    %1269 = vmatpush1.msra.mxu0 %v542
    %1270 = vmatprep.subr.mxu0 %v541
    %1271 = vmatpush1.msra.mxu0 %v540
    %1272 = vmatprep.subr.mxu0 %v539
    %1273 = vmatpush1.msra.mxu0 %v538
    %1274 = vmatprep.subr.mxu0 %v537
    %1275 = vmatpush1.msra.mxu0 %v536
    %1276 = vmatprep.subr.mxu0 0.0
    %1277 = vmatpush2.msra.mxu0 0.0
    %1278 = vmatprep.subr.mxu0 0.0
    %1279 = vmatpush2.msra.mxu0 0.0
    %1280 = vmatprep.subr.mxu0 0.0
    %1281 = vmatpush2.msra.mxu0 0.0
    %1282 = vmatprep.subr.mxu0 0.0
    %1283 = vmatpush2.msra.mxu0 0.0
    %1284 = vmatprep.subr.mxu0 0.0
    %1285 = vmatpush2.msra.mxu0 0.0
    %1286 = vmatprep.subr.mxu0 0.0
    %1287 = vmatpush2.msra.mxu0 0.0
    %1288 = vmatprep.subr.mxu0 0.0
    %1289 = vmatpush2.msra.mxu0 0.0
    %1290 = vmatprep.subr.mxu0 0.0
    %1291 = vmatpush2.msra.mxu0 0.0
    %1292 = vmatprep.subr.mxu0 0.0
    %1293 = vmatpush2.msra.mxu0 0.0
    %1294 = vmatprep.subr.mxu0 0.0
    %1295 = vmatpush2.msra.mxu0 0.0
    %1296 = vmatprep.subr.mxu0 0.0
    %1297 = vmatpush2.msra.mxu0 0.0
    %1298 = vmatprep.subr.mxu0 0.0
    %1299 = vmatpush2.msra.mxu0 0.0
    %1300 = vmatprep.subr.mxu0 0.0
    %1301 = vmatpush2.msra.mxu0 0.0
    %1302 = vmatprep.subr.mxu0 0.0
    %1303 = vmatpush2.msra.mxu0 0.0
    %1304 = vmatprep.subr.mxu0 0.0
    %1305 = vmatpush2.msra.mxu0 0.0
    %1306 = vmatprep.subr.mxu0 0.0
    %1307 = vmatpush2.msra.mxu0 0.0
    %1308 = vmatprep.mubr.f32.mxu0 0.0
    %1309 = vmatmul.mubr.f32.gmra.mxu0 %v1242
    %v1310 = vpop.f32.mrf.mxu0
    %v1311 = vadd.f32 0.0, %v1310
    %v1312 = vpop.f32.mrf.mxu0
    %v1313 = vadd.f32 0.0, %v1312
    %1314 = vdwg.mxu0
    %v1315 = vsel %vm546, %v1311, %v1313
    %v1316 = vadd.f32 %v1241, %v1315
    %v1317 = vsub.f32 0.0, %v1316
    %v1318 = vmul.f32 %v1317, 1.442695
    %v1319 = vpow.pop %v1318
    %v1320 = vadd.f32 %v1319, 1.0
    %v1321 = vrcp.pop %v1320
    %v1322 = vtanh.pop %v1316
    %v1323 = vmul.f32 %v1321, %v1220
    %1325 = vrot.lane.b32.xlu0 %v1322, 64
    %v1326 = vpop.permute.xlu0 %1325
    %v1328 = vmul.f32 %v1321, %v1326
    %1330 = vrot.lane.b32.xlu0 %v1328, 32
    %v1331 = vpop.permute.xlu0 %1330
    %v1333 = vadd.f32 %v1323, %v1331
    %v1334 = vtanh.pop %v1333
    %1336 = vrot.lane.b32.xlu0 %v1334, 64
    %v1337 = vpop.permute.xlu0 %1336
    %v1339 = vmul.f32 %v1321, %v1337
    %1341 = vrot.lane.b32.xlu0 %v1339, 32
    %v1342 = vpop.permute.xlu0 %1341
    %1344 = vst.msk [vmem:[#allocation2 + $0x6] sm:$0x1] %vm664, %v1342
    %1345 = vst.msk [vmem:[#allocation3] sm:$0x2] %vm666, %v1342
    %v1346 = vlaneseq
    %v1347 = vshrl.u32 %v1346, 7
    %v1348 = vsub.s32 7, %v1347
    %v1349 = vrot.slane %v358, %v1348
    %v1350 = vlaneseq
    %v1351 = vshrl.u32 %v1350, 7
    %v1352 = vsub.s32 0, %v1351
    %v1353 = vrot.slane %v535, %v1352
    %v1354 = vsel %vm546, %v1349, %v1353
    %v1355 = vsel %vm556, %v1342, 0
    %1357 = vmatprep.subr.mxu0 0.0
    %1358 = vmatpush1.msra.mxu0 0.0
    %1359 = vmatprep.subr.mxu0 0.0
    %1360 = vmatpush1.msra.mxu0 0.0
    %1361 = vmatprep.subr.mxu0 0.0
    %1362 = vmatpush1.msra.mxu0 0.0
    %1363 = vmatprep.subr.mxu0 0.0
    %1364 = vmatpush1.msra.mxu0 0.0
    %1365 = vmatprep.subr.mxu0 0.0
    %1366 = vmatpush1.msra.mxu0 0.0
    %1367 = vmatprep.subr.mxu0 0.0
    %1368 = vmatpush1.msra.mxu0 0.0
    %1369 = vmatprep.subr.mxu0 0.0
    %1370 = vmatpush1.msra.mxu0 0.0
    %1371 = vmatprep.subr.mxu0 0.0
    %1372 = vmatpush1.msra.mxu0 0.0
    %1373 = vmatprep.subr.mxu0 0.0
    %1374 = vmatpush1.msra.mxu0 0.0
    %1375 = vmatprep.subr.mxu0 0.0
    %1376 = vmatpush1.msra.mxu0 0.0
    %1377 = vmatprep.subr.mxu0 0.0
    %1378 = vmatpush1.msra.mxu0 0.0
    %1379 = vmatprep.subr.mxu0 0.0
    %1380 = vmatpush1.msra.mxu0 0.0
    %1381 = vmatprep.subr.mxu0 %v543
    %1382 = vmatpush1.msra.mxu0 %v542
    %1383 = vmatprep.subr.mxu0 %v541
    %1384 = vmatpush1.msra.mxu0 %v540
    %1385 = vmatprep.subr.mxu0 %v539
    %1386 = vmatpush1.msra.mxu0 %v538
    %1387 = vmatprep.subr.mxu0 %v537
    %1388 = vmatpush1.msra.mxu0 %v536
    %1389 = vmatprep.subr.mxu0 0.0
    %1390 = vmatpush2.msra.mxu0 0.0
    %1391 = vmatprep.subr.mxu0 0.0
    %1392 = vmatpush2.msra.mxu0 0.0
    %1393 = vmatprep.subr.mxu0 0.0
    %1394 = vmatpush2.msra.mxu0 0.0
    %1395 = vmatprep.subr.mxu0 0.0
    %1396 = vmatpush2.msra.mxu0 0.0
    %1397 = vmatprep.subr.mxu0 0.0
    %1398 = vmatpush2.msra.mxu0 0.0
    %1399 = vmatprep.subr.mxu0 0.0
    %1400 = vmatpush2.msra.mxu0 0.0
    %1401 = vmatprep.subr.mxu0 0.0
    %1402 = vmatpush2.msra.mxu0 0.0
    %1403 = vmatprep.subr.mxu0 0.0
    %1404 = vmatpush2.msra.mxu0 0.0
    %1405 = vmatprep.subr.mxu0 0.0
    %1406 = vmatpush2.msra.mxu0 0.0
    %1407 = vmatprep.subr.mxu0 0.0
    %1408 = vmatpush2.msra.mxu0 0.0
    %1409 = vmatprep.subr.mxu0 0.0
    %1410 = vmatpush2.msra.mxu0 0.0
    %1411 = vmatprep.subr.mxu0 0.0
    %1412 = vmatpush2.msra.mxu0 0.0
    %1413 = vmatprep.subr.mxu0 0.0
    %1414 = vmatpush2.msra.mxu0 0.0
    %1415 = vmatprep.subr.mxu0 0.0
    %1416 = vmatpush2.msra.mxu0 0.0
    %1417 = vmatprep.subr.mxu0 0.0
    %1418 = vmatpush2.msra.mxu0 0.0
    %1419 = vmatprep.subr.mxu0 0.0
    %1420 = vmatpush2.msra.mxu0 0.0
    %1421 = vmatprep.mubr.f32.mxu0 0.0
    %1422 = vmatmul.mubr.f32.gmra.mxu0 %v1355
    %v1423 = vpop.f32.mrf.mxu0
    %v1424 = vadd.f32 0.0, %v1423
    %v1425 = vpop.f32.mrf.mxu0
    %v1426 = vadd.f32 0.0, %v1425
    %1427 = vdwg.mxu0
    %v1428 = vsel %vm546, %v1424, %v1426
    %v1429 = vadd.f32 %v1354, %v1428
    %v1430 = vsub.f32 0.0, %v1429
    %v1431 = vmul.f32 %v1430, 1.442695
    %v1432 = vpow.pop %v1431
    %v1433 = vadd.f32 %v1432, 1.0
    %v1434 = vrcp.pop %v1433
    %v1435 = vtanh.pop %v1429
    %v1436 = vmul.f32 %v1434, %v1333
    %1438 = vrot.lane.b32.xlu0 %v1435, 64
    %v1439 = vpop.permute.xlu0 %1438
    %v1441 = vmul.f32 %v1434, %v1439
    %1443 = vrot.lane.b32.xlu0 %v1441, 32
    %v1444 = vpop.permute.xlu0 %1443
    %v1446 = vadd.f32 %v1436, %v1444
    %v1447 = vtanh.pop %v1446
    %1449 = vrot.lane.b32.xlu0 %v1447, 64
    %v1450 = vpop.permute.xlu0 %1449
    %v1452 = vmul.f32 %v1434, %v1450
    %1454 = vrot.lane.b32.xlu0 %v1452, 32
    %v1455 = vpop.permute.xlu0 %1454
    %1457 = vst.msk [vmem:[#allocation2 + $0x7] sm:$0x1] %vm664, %v1455
    %1458 = vst.msk [vmem:[#allocation3 - $0x1] sm:$0x2] %vm666, %v1455
    %vm1459 = vcmask 254976
    %1460 = vst.msk [vmem:[#allocation18] sm:$0x3] %vm1459, %v1455
    %1462 = vrot.lane.b32.xlu0 %v1446, 96
    %v1463 = vpop.permute.xlu0 %1462
    %1465 = vst.msk [vmem:[#allocation19] sm:$0x3] %vm1459, %v1463
    %v1466 = vld [vmem:[#allocation2] sm:$0xff]
    %v1467 = vld [vmem:[#allocation3] sm:$0xff]
    %v1468 = vld [vmem:[#allocation13] sm:$0xff]
    %v1469 = vld [vmem:[#allocation13 + $0x8] sm:$0xff]
    %v1470 = vld [vmem:[#allocation13 + $0x10] sm:$0xff]
    %v1471 = vld [vmem:[#allocation13 + $0x18] sm:$0xff]
    %v1472 = vld [vmem:[#allocation13 + $0x20] sm:$0xff]
    %v1473 = vld [vmem:[#allocation13 + $0x28] sm:$0xff]
    %v1474 = vld [vmem:[#allocation13 + $0x30] sm:$0xff]
    %v1475 = vld [vmem:[#allocation13 + $0x38] sm:$0xff]
    %v1477 = vsel %vm556, %v1467, 0
    %1479 = vmatprep.subr.mxu0 0.0
    %1480 = vmatpush1.msra.mxu0 0.0
    %1481 = vmatprep.subr.mxu0 0.0
    %1482 = vmatpush1.msra.mxu0 0.0
    %1483 = vmatprep.subr.mxu0 0.0
    %1484 = vmatpush1.msra.mxu0 0.0
    %1485 = vmatprep.subr.mxu0 0.0
    %1486 = vmatpush1.msra.mxu0 0.0
    %1487 = vmatprep.subr.mxu0 0.0
    %1488 = vmatpush1.msra.mxu0 0.0
    %1489 = vmatprep.subr.mxu0 0.0
    %1490 = vmatpush1.msra.mxu0 0.0
    %1491 = vmatprep.subr.mxu0 0.0
    %1492 = vmatpush1.msra.mxu0 0.0
    %1493 = vmatprep.subr.mxu0 0.0
    %1494 = vmatpush1.msra.mxu0 0.0
    %1495 = vmatprep.subr.mxu0 0.0
    %1496 = vmatpush1.msra.mxu0 0.0
    %1497 = vmatprep.subr.mxu0 0.0
    %1498 = vmatpush1.msra.mxu0 0.0
    %1499 = vmatprep.subr.mxu0 0.0
    %1500 = vmatpush1.msra.mxu0 0.0
    %1501 = vmatprep.subr.mxu0 0.0
    %1502 = vmatpush1.msra.mxu0 0.0
    %1503 = vmatprep.subr.mxu0 0.0
    %1504 = vmatpush1.msra.mxu0 %v1475
    %1505 = vmatprep.subr.mxu0 0.0
    %1506 = vmatpush1.msra.mxu0 %v1474
    %1507 = vmatprep.subr.mxu0 0.0
    %1508 = vmatpush1.msra.mxu0 %v1473
    %1509 = vmatprep.subr.mxu0 0.0
    %1510 = vmatpush1.msra.mxu0 %v1472
    %1511 = vmatprep.subr.mxu0 0.0
    %1512 = vmatpush2.msra.mxu0 0.0
    %1513 = vmatprep.subr.mxu0 0.0
    %1514 = vmatpush2.msra.mxu0 0.0
    %1515 = vmatprep.subr.mxu0 0.0
    %1516 = vmatpush2.msra.mxu0 0.0
    %1517 = vmatprep.subr.mxu0 0.0
    %1518 = vmatpush2.msra.mxu0 0.0
    %1519 = vmatprep.subr.mxu0 0.0
    %1520 = vmatpush2.msra.mxu0 0.0
    %1521 = vmatprep.subr.mxu0 0.0
    %1522 = vmatpush2.msra.mxu0 0.0
    %1523 = vmatprep.subr.mxu0 0.0
    %1524 = vmatpush2.msra.mxu0 0.0
    %1525 = vmatprep.subr.mxu0 0.0
    %1526 = vmatpush2.msra.mxu0 0.0
    %1527 = vmatprep.subr.mxu0 0.0
    %1528 = vmatpush2.msra.mxu0 0.0
    %1529 = vmatprep.subr.mxu0 0.0
    %1530 = vmatpush2.msra.mxu0 0.0
    %1531 = vmatprep.subr.mxu0 0.0
    %1532 = vmatpush2.msra.mxu0 0.0
    %1533 = vmatprep.subr.mxu0 0.0
    %1534 = vmatpush2.msra.mxu0 0.0
    %1535 = vmatprep.subr.mxu0 0.0
    %1536 = vmatpush2.msra.mxu0 0.0
    %1537 = vmatprep.subr.mxu0 0.0
    %1538 = vmatpush2.msra.mxu0 0.0
    %1539 = vmatprep.subr.mxu0 0.0
    %1540 = vmatpush2.msra.mxu0 0.0
    %1541 = vmatprep.subr.mxu0 0.0
    %1542 = vmatpush2.msra.mxu0 0.0
    %1543 = vmatprep.mubr.f32.mxu0 0.0
    %1544 = vmatmul.mubr.f32.gmra.mxu0 %v1477
    %v1545 = vpop.f32.mrf.mxu0
    %v1546 = vadd.f32 0.0, %v1545
    %v1547 = vpop.f32.mrf.mxu0
    %1548 = vdwg.mxu0
    %v1550 = vsel %vm556, %v1466, 0
    %1552 = vmatprep.subr.mxu0 0.0
    %1553 = vmatpush1.msra.mxu0 0.0
    %1554 = vmatprep.subr.mxu0 0.0
    %1555 = vmatpush1.msra.mxu0 0.0
    %1556 = vmatprep.subr.mxu0 0.0
    %1557 = vmatpush1.msra.mxu0 0.0
    %1558 = vmatprep.subr.mxu0 0.0
    %1559 = vmatpush1.msra.mxu0 0.0
    %1560 = vmatprep.subr.mxu0 0.0
    %1561 = vmatpush1.msra.mxu0 0.0
    %1562 = vmatprep.subr.mxu0 0.0
    %1563 = vmatpush1.msra.mxu0 0.0
    %1564 = vmatprep.subr.mxu0 0.0
    %1565 = vmatpush1.msra.mxu0 0.0
    %1566 = vmatprep.subr.mxu0 0.0
    %1567 = vmatpush1.msra.mxu0 0.0
    %1568 = vmatprep.subr.mxu0 0.0
    %1569 = vmatpush1.msra.mxu0 0.0
    %1570 = vmatprep.subr.mxu0 0.0
    %1571 = vmatpush1.msra.mxu0 0.0
    %1572 = vmatprep.subr.mxu0 0.0
    %1573 = vmatpush1.msra.mxu0 0.0
    %1574 = vmatprep.subr.mxu0 0.0
    %1575 = vmatpush1.msra.mxu0 0.0
    %1576 = vmatprep.subr.mxu0 0.0
    %1577 = vmatpush1.msra.mxu0 %v1471
    %1578 = vmatprep.subr.mxu0 0.0
    %1579 = vmatpush1.msra.mxu0 %v1470
    %1580 = vmatprep.subr.mxu0 0.0
    %1581 = vmatpush1.msra.mxu0 %v1469
    %1582 = vmatprep.subr.mxu0 0.0
    %1583 = vmatpush1.msra.mxu0 %v1468
    %1584 = vmatprep.subr.mxu0 0.0
    %1585 = vmatpush2.msra.mxu0 0.0
    %1586 = vmatprep.subr.mxu0 0.0
    %1587 = vmatpush2.msra.mxu0 0.0
    %1588 = vmatprep.subr.mxu0 0.0
    %1589 = vmatpush2.msra.mxu0 0.0
    %1590 = vmatprep.subr.mxu0 0.0
    %1591 = vmatpush2.msra.mxu0 0.0
    %1592 = vmatprep.subr.mxu0 0.0
    %1593 = vmatpush2.msra.mxu0 0.0
    %1594 = vmatprep.subr.mxu0 0.0
    %1595 = vmatpush2.msra.mxu0 0.0
    %1596 = vmatprep.subr.mxu0 0.0
    %1597 = vmatpush2.msra.mxu0 0.0
    %1598 = vmatprep.subr.mxu0 0.0
    %1599 = vmatpush2.msra.mxu0 0.0
    %1600 = vmatprep.subr.mxu0 0.0
    %1601 = vmatpush2.msra.mxu0 0.0
    %1602 = vmatprep.subr.mxu0 0.0
    %1603 = vmatpush2.msra.mxu0 0.0
    %1604 = vmatprep.subr.mxu0 0.0
    %1605 = vmatpush2.msra.mxu0 0.0
    %1606 = vmatprep.subr.mxu0 0.0
    %1607 = vmatpush2.msra.mxu0 0.0
    %1608 = vmatprep.subr.mxu0 0.0
    %1609 = vmatpush2.msra.mxu0 0.0
    %1610 = vmatprep.subr.mxu0 0.0
    %1611 = vmatpush2.msra.mxu0 0.0
    %1612 = vmatprep.subr.mxu0 0.0
    %1613 = vmatpush2.msra.mxu0 0.0
    %1614 = vmatprep.subr.mxu0 0.0
    %1615 = vmatpush2.msra.mxu0 0.0
    %1616 = vmatprep.mubr.f32.mxu0 0.0
    %1617 = vmatmul.mubr.f32.gmra.mxu0 %v1550
    %v1618 = vpop.f32.mrf.mxu0
    %v1619 = vadd.f32 %v1546, %v1618
    %v1620 = vpop.f32.mrf.mxu0
    %1621 = vdwg.mxu0
    %v1622 = vlaneseq
    %v1623 = vshrl.u32 %v1622, 7
    %v1624 = vsub.s32 0, %v1623
    %v1625 = vrot.slane %v179, %v1624
    %v1626 = vadd.f32 %v1619, %v1625
    %v1627 = vld [vmem:[#allocation15] sm:$0xff]
    %v1628 = vld [vmem:[#allocation15 + $0x8] sm:$0xff]
    %v1629 = vld [vmem:[#allocation15 + $0x10] sm:$0xff]
    %v1630 = vld [vmem:[#allocation15 + $0x18] sm:$0xff]
    %v1631 = vld [vmem:[#allocation15 + $0x20] sm:$0xff]
    %v1632 = vld [vmem:[#allocation15 + $0x28] sm:$0xff]
    %v1633 = vld [vmem:[#allocation15 + $0x30] sm:$0xff]
    %v1634 = vld [vmem:[#allocation15 + $0x38] sm:$0xff]
    %1635 = vmatprep.subr.mxu0 0.0
    %1636 = vmatpush1.msra.mxu0 0.0
    %1637 = vmatprep.subr.mxu0 0.0
    %1638 = vmatpush1.msra.mxu0 0.0
    %1639 = vmatprep.subr.mxu0 0.0
    %1640 = vmatpush1.msra.mxu0 0.0
    %1641 = vmatprep.subr.mxu0 0.0
    %1642 = vmatpush1.msra.mxu0 0.0
    %1643 = vmatprep.subr.mxu0 0.0
    %1644 = vmatpush1.msra.mxu0 0.0
    %1645 = vmatprep.subr.mxu0 0.0
    %1646 = vmatpush1.msra.mxu0 0.0
    %1647 = vmatprep.subr.mxu0 0.0
    %1648 = vmatpush1.msra.mxu0 0.0
    %1649 = vmatprep.subr.mxu0 0.0
    %1650 = vmatpush1.msra.mxu0 0.0
    %1651 = vmatprep.subr.mxu0 0.0
    %1652 = vmatpush1.msra.mxu0 0.0
    %1653 = vmatprep.subr.mxu0 0.0
    %1654 = vmatpush1.msra.mxu0 0.0
    %1655 = vmatprep.subr.mxu0 0.0
    %1656 = vmatpush1.msra.mxu0 0.0
    %1657 = vmatprep.subr.mxu0 0.0
    %1658 = vmatpush1.msra.mxu0 0.0
    %1659 = vmatprep.subr.mxu0 0.0
    %1660 = vmatpush1.msra.mxu0 %v1634
    %1661 = vmatprep.subr.mxu0 0.0
    %1662 = vmatpush1.msra.mxu0 %v1633
    %1663 = vmatprep.subr.mxu0 0.0
    %1664 = vmatpush1.msra.mxu0 %v1632
    %1665 = vmatprep.subr.mxu0 0.0
    %1666 = vmatpush1.msra.mxu0 %v1631
    %1667 = vmatprep.subr.mxu0 0.0
    %1668 = vmatpush2.msra.mxu0 0.0
    %1669 = vmatprep.subr.mxu0 0.0
    %1670 = vmatpush2.msra.mxu0 0.0
    %1671 = vmatprep.subr.mxu0 0.0
    %1672 = vmatpush2.msra.mxu0 0.0
    %1673 = vmatprep.subr.mxu0 0.0
    %1674 = vmatpush2.msra.mxu0 0.0
    %1675 = vmatprep.subr.mxu0 0.0
    %1676 = vmatpush2.msra.mxu0 0.0
    %1677 = vmatprep.subr.mxu0 0.0
    %1678 = vmatpush2.msra.mxu0 0.0
    %1679 = vmatprep.subr.mxu0 0.0
    %1680 = vmatpush2.msra.mxu0 0.0
    %1681 = vmatprep.subr.mxu0 0.0
    %1682 = vmatpush2.msra.mxu0 0.0
    %1683 = vmatprep.subr.mxu0 0.0
    %1684 = vmatpush2.msra.mxu0 0.0
    %1685 = vmatprep.subr.mxu0 0.0
    %1686 = vmatpush2.msra.mxu0 0.0
    %1687 = vmatprep.subr.mxu0 0.0
    %1688 = vmatpush2.msra.mxu0 0.0
    %1689 = vmatprep.subr.mxu0 0.0
    %1690 = vmatpush2.msra.mxu0 0.0
    %1691 = vmatprep.subr.mxu0 0.0
    %1692 = vmatpush2.msra.mxu0 0.0
    %1693 = vmatprep.subr.mxu0 0.0
    %1694 = vmatpush2.msra.mxu0 0.0
    %1695 = vmatprep.subr.mxu0 0.0
    %1696 = vmatpush2.msra.mxu0 0.0
    %1697 = vmatprep.subr.mxu0 0.0
    %1698 = vmatpush2.msra.mxu0 0.0
    %1699 = vmatprep.mubr.f32.mxu0 0.0
    %1700 = vmatmul.mubr.f32.gmra.mxu0 %v1477
    %v1701 = vpop.f32.mrf.mxu0
    %v1702 = vadd.f32 0.0, %v1701
    %v1703 = vpop.f32.mrf.mxu0
    %1704 = vdwg.mxu0
    %1705 = vmatprep.subr.mxu0 0.0
    %1706 = vmatpush1.msra.mxu0 0.0
    %1707 = vmatprep.subr.mxu0 0.0
    %1708 = vmatpush1.msra.mxu0 0.0
    %1709 = vmatprep.subr.mxu0 0.0
    %1710 = vmatpush1.msra.mxu0 0.0
    %1711 = vmatprep.subr.mxu0 0.0
    %1712 = vmatpush1.msra.mxu0 0.0
    %1713 = vmatprep.subr.mxu0 0.0
    %1714 = vmatpush1.msra.mxu0 0.0
    %1715 = vmatprep.subr.mxu0 0.0
    %1716 = vmatpush1.msra.mxu0 0.0
    %1717 = vmatprep.subr.mxu0 0.0
    %1718 = vmatpush1.msra.mxu0 0.0
    %1719 = vmatprep.subr.mxu0 0.0
    %1720 = vmatpush1.msra.mxu0 0.0
    %1721 = vmatprep.subr.mxu0 0.0
    %1722 = vmatpush1.msra.mxu0 0.0
    %1723 = vmatprep.subr.mxu0 0.0
    %1724 = vmatpush1.msra.mxu0 0.0
    %1725 = vmatprep.subr.mxu0 0.0
    %1726 = vmatpush1.msra.mxu0 0.0
    %1727 = vmatprep.subr.mxu0 0.0
    %1728 = vmatpush1.msra.mxu0 0.0
    %1729 = vmatprep.subr.mxu0 0.0
    %1730 = vmatpush1.msra.mxu0 %v1630
    %1731 = vmatprep.subr.mxu0 0.0
    %1732 = vmatpush1.msra.mxu0 %v1629
    %1733 = vmatprep.subr.mxu0 0.0
    %1734 = vmatpush1.msra.mxu0 %v1628
    %1735 = vmatprep.subr.mxu0 0.0
    %1736 = vmatpush1.msra.mxu0 %v1627
    %1737 = vmatprep.subr.mxu0 0.0
    %1738 = vmatpush2.msra.mxu0 0.0
    %1739 = vmatprep.subr.mxu0 0.0
    %1740 = vmatpush2.msra.mxu0 0.0
    %1741 = vmatprep.subr.mxu0 0.0
    %1742 = vmatpush2.msra.mxu0 0.0
    %1743 = vmatprep.subr.mxu0 0.0
    %1744 = vmatpush2.msra.mxu0 0.0
    %1745 = vmatprep.subr.mxu0 0.0
    %1746 = vmatpush2.msra.mxu0 0.0
    %1747 = vmatprep.subr.mxu0 0.0
    %1748 = vmatpush2.msra.mxu0 0.0
    %1749 = vmatprep.subr.mxu0 0.0
    %1750 = vmatpush2.msra.mxu0 0.0
    %1751 = vmatprep.subr.mxu0 0.0
    %1752 = vmatpush2.msra.mxu0 0.0
    %1753 = vmatprep.subr.mxu0 0.0
    %1754 = vmatpush2.msra.mxu0 0.0
    %1755 = vmatprep.subr.mxu0 0.0
    %1756 = vmatpush2.msra.mxu0 0.0
    %1757 = vmatprep.subr.mxu0 0.0
    %1758 = vmatpush2.msra.mxu0 0.0
    %1759 = vmatprep.subr.mxu0 0.0
    %1760 = vmatpush2.msra.mxu0 0.0
    %1761 = vmatprep.subr.mxu0 0.0
    %1762 = vmatpush2.msra.mxu0 0.0
    %1763 = vmatprep.subr.mxu0 0.0
    %1764 = vmatpush2.msra.mxu0 0.0
    %1765 = vmatprep.subr.mxu0 0.0
    %1766 = vmatpush2.msra.mxu0 0.0
    %1767 = vmatprep.subr.mxu0 0.0
    %1768 = vmatpush2.msra.mxu0 0.0
    %1769 = vmatprep.mubr.f32.mxu0 0.0
    %1770 = vmatmul.mubr.f32.gmra.mxu0 %v1550
    %v1771 = vpop.f32.mrf.mxu0
    %v1772 = vadd.f32 %v1702, %v1771
    %v1773 = vpop.f32.mrf.mxu0
    %1774 = vdwg.mxu0
    %v1775 = vlaneseq
    %v1776 = vshrl.u32 %v1775, 7
    %v1777 = vsub.s32 1, %v1776
    %v1778 = vrot.slane %v179, %v1777
    %v1779 = vadd.f32 %v1772, %v1778
    %v1780 = vld [vmem:[#allocation16] sm:$0xff]
    %v1781 = vld [vmem:[#allocation16 + $0x8] sm:$0xff]
    %v1782 = vld [vmem:[#allocation16 + $0x10] sm:$0xff]
    %v1783 = vld [vmem:[#allocation16 + $0x18] sm:$0xff]
    %v1784 = vld [vmem:[#allocation16 + $0x20] sm:$0xff]
    %v1785 = vld [vmem:[#allocation16 + $0x28] sm:$0xff]
    %v1786 = vld [vmem:[#allocation16 + $0x30] sm:$0xff]
    %v1787 = vld [vmem:[#allocation16 + $0x38] sm:$0xff]
    %v1788 = vlaneseq
    %v1789 = vshrl.u32 %v1788, 7
    %v1790 = vsub.s32 0, %v1789
    %v1791 = vrot.slane %v1626, %v1790
    %v1792 = vlaneseq
    %v1793 = vshrl.u32 %v1792, 7
    %v1794 = vsub.s32 7, %v1793
    %v1795 = vrot.slane %v1779, %v1794
    %v1796 = vsel %vm546, %v1791, %v1795
    %v1797 = vrot.slane %v180, 2
    %v1798 = vsel %vm556, %v1797, 0
    %1800 = vmatprep.subr.mxu0 0.0
    %1801 = vmatpush1.msra.mxu0 0.0
    %1802 = vmatprep.subr.mxu0 0.0
    %1803 = vmatpush1.msra.mxu0 0.0
    %1804 = vmatprep.subr.mxu0 0.0
    %1805 = vmatpush1.msra.mxu0 0.0
    %1806 = vmatprep.subr.mxu0 0.0
    %1807 = vmatpush1.msra.mxu0 0.0
    %1808 = vmatprep.subr.mxu0 0.0
    %1809 = vmatpush1.msra.mxu0 0.0
    %1810 = vmatprep.subr.mxu0 0.0
    %1811 = vmatpush1.msra.mxu0 0.0
    %1812 = vmatprep.subr.mxu0 0.0
    %1813 = vmatpush1.msra.mxu0 0.0
    %1814 = vmatprep.subr.mxu0 0.0
    %1815 = vmatpush1.msra.mxu0 0.0
    %1816 = vmatprep.subr.mxu0 0.0
    %1817 = vmatpush1.msra.mxu0 0.0
    %1818 = vmatprep.subr.mxu0 0.0
    %1819 = vmatpush1.msra.mxu0 0.0
    %1820 = vmatprep.subr.mxu0 0.0
    %1821 = vmatpush1.msra.mxu0 0.0
    %1822 = vmatprep.subr.mxu0 0.0
    %1823 = vmatpush1.msra.mxu0 0.0
    %1824 = vmatprep.subr.mxu0 %v1787
    %1825 = vmatpush1.msra.mxu0 %v1786
    %1826 = vmatprep.subr.mxu0 %v1785
    %1827 = vmatpush1.msra.mxu0 %v1784
    %1828 = vmatprep.subr.mxu0 %v1783
    %1829 = vmatpush1.msra.mxu0 %v1782
    %1830 = vmatprep.subr.mxu0 %v1781
    %1831 = vmatpush1.msra.mxu0 %v1780
    %1832 = vmatprep.subr.mxu0 0.0
    %1833 = vmatpush2.msra.mxu0 0.0
    %1834 = vmatprep.subr.mxu0 0.0
    %1835 = vmatpush2.msra.mxu0 0.0
    %1836 = vmatprep.subr.mxu0 0.0
    %1837 = vmatpush2.msra.mxu0 0.0
    %1838 = vmatprep.subr.mxu0 0.0
    %1839 = vmatpush2.msra.mxu0 0.0
    %1840 = vmatprep.subr.mxu0 0.0
    %1841 = vmatpush2.msra.mxu0 0.0
    %1842 = vmatprep.subr.mxu0 0.0
    %1843 = vmatpush2.msra.mxu0 0.0
    %1844 = vmatprep.subr.mxu0 0.0
    %1845 = vmatpush2.msra.mxu0 0.0
    %1846 = vmatprep.subr.mxu0 0.0
    %1847 = vmatpush2.msra.mxu0 0.0
    %1848 = vmatprep.subr.mxu0 0.0
    %1849 = vmatpush2.msra.mxu0 0.0
    %1850 = vmatprep.subr.mxu0 0.0
    %1851 = vmatpush2.msra.mxu0 0.0
    %1852 = vmatprep.subr.mxu0 0.0
    %1853 = vmatpush2.msra.mxu0 0.0
    %1854 = vmatprep.subr.mxu0 0.0
    %1855 = vmatpush2.msra.mxu0 0.0
    %1856 = vmatprep.subr.mxu0 0.0
    %1857 = vmatpush2.msra.mxu0 0.0
    %1858 = vmatprep.subr.mxu0 0.0
    %1859 = vmatpush2.msra.mxu0 0.0
    %1860 = vmatprep.subr.mxu0 0.0
    %1861 = vmatpush2.msra.mxu0 0.0
    %1862 = vmatprep.subr.mxu0 0.0
    %1863 = vmatpush2.msra.mxu0 0.0
    %1864 = vmatprep.mubr.f32.mxu0 0.0
    %1865 = vmatmul.mubr.f32.gmra.mxu0 %v1798
    %v1866 = vpop.f32.mrf.mxu0
    %v1867 = vadd.f32 0.0, %v1866
    %v1868 = vpop.f32.mrf.mxu0
    %v1869 = vadd.f32 0.0, %v1868
    %1870 = vdwg.mxu0
    %v1871 = vsel %vm546, %v1867, %v1869
    %v1872 = vadd.f32 %v1796, %v1871
    %v1873 = vsub.f32 0.0, %v1872
    %v1874 = vmul.f32 %v1873, 1.442695
    %v1875 = vpow.pop %v1874
    %v1876 = vadd.f32 %v1875, 1.0
    %v1877 = vrcp.pop %v1876
    %v1878 = vtanh.pop %v1872
    %v1879 = vrot.slane %v181, 2
    %1880 = vrot.lane.b32.xlu0 %v1879, 32
    %v1881 = vpop.permute.xlu0 %1880
    %v1883 = vmul.f32 %v1877, %v1881
    %1885 = vrot.lane.b32.xlu0 %v1878, 64
    %v1886 = vpop.permute.xlu0 %1885
    %v1888 = vmul.f32 %v1877, %v1886
    %1890 = vrot.lane.b32.xlu0 %v1888, 32
    %v1891 = vpop.permute.xlu0 %1890
    %v1893 = vadd.f32 %v1883, %v1891
    %v1894 = vtanh.pop %v1893
    %1896 = vrot.lane.b32.xlu0 %v1894, 64
    %v1897 = vpop.permute.xlu0 %1896
    %v1899 = vmul.f32 %v1877, %v1897
    %1901 = vrot.lane.b32.xlu0 %v1899, 32
    %v1902 = vpop.permute.xlu0 %1901
    %1904 = vst.msk [vmem:[%s14] sm:$0x1] %vm664, %v1902
    %1905 = vst.msk [vmem:[%s15 + $0x6] sm:$0x2] %vm666, %v1902
    %v1906 = vlaneseq
    %v1907 = vshrl.u32 %v1906, 7
    %v1908 = vsub.s32 1, %v1907
    %v1909 = vrot.slane %v1626, %v1908
    %v1910 = vlaneseq
    %v1911 = vshrl.u32 %v1910, 7
    %v1912 = vsub.s32 6, %v1911
    %v1913 = vrot.slane %v1779, %v1912
    %v1914 = vsel %vm546, %v1909, %v1913
    %v1915 = vsel %vm556, %v1902, 0
    %1917 = vmatprep.subr.mxu0 0.0
    %1918 = vmatpush1.msra.mxu0 0.0
    %1919 = vmatprep.subr.mxu0 0.0
    %1920 = vmatpush1.msra.mxu0 0.0
    %1921 = vmatprep.subr.mxu0 0.0
    %1922 = vmatpush1.msra.mxu0 0.0
    %1923 = vmatprep.subr.mxu0 0.0
    %1924 = vmatpush1.msra.mxu0 0.0
    %1925 = vmatprep.subr.mxu0 0.0
    %1926 = vmatpush1.msra.mxu0 0.0
    %1927 = vmatprep.subr.mxu0 0.0
    %1928 = vmatpush1.msra.mxu0 0.0
    %1929 = vmatprep.subr.mxu0 0.0
    %1930 = vmatpush1.msra.mxu0 0.0
    %1931 = vmatprep.subr.mxu0 0.0
    %1932 = vmatpush1.msra.mxu0 0.0
    %1933 = vmatprep.subr.mxu0 0.0
    %1934 = vmatpush1.msra.mxu0 0.0
    %1935 = vmatprep.subr.mxu0 0.0
    %1936 = vmatpush1.msra.mxu0 0.0
    %1937 = vmatprep.subr.mxu0 0.0
    %1938 = vmatpush1.msra.mxu0 0.0
    %1939 = vmatprep.subr.mxu0 0.0
    %1940 = vmatpush1.msra.mxu0 0.0
    %1941 = vmatprep.subr.mxu0 %v1787
    %1942 = vmatpush1.msra.mxu0 %v1786
    %1943 = vmatprep.subr.mxu0 %v1785
    %1944 = vmatpush1.msra.mxu0 %v1784
    %1945 = vmatprep.subr.mxu0 %v1783
    %1946 = vmatpush1.msra.mxu0 %v1782
    %1947 = vmatprep.subr.mxu0 %v1781
    %1948 = vmatpush1.msra.mxu0 %v1780
    %1949 = vmatprep.subr.mxu0 0.0
    %1950 = vmatpush2.msra.mxu0 0.0
    %1951 = vmatprep.subr.mxu0 0.0
    %1952 = vmatpush2.msra.mxu0 0.0
    %1953 = vmatprep.subr.mxu0 0.0
    %1954 = vmatpush2.msra.mxu0 0.0
    %1955 = vmatprep.subr.mxu0 0.0
    %1956 = vmatpush2.msra.mxu0 0.0
    %1957 = vmatprep.subr.mxu0 0.0
    %1958 = vmatpush2.msra.mxu0 0.0
    %1959 = vmatprep.subr.mxu0 0.0
    %1960 = vmatpush2.msra.mxu0 0.0
    %1961 = vmatprep.subr.mxu0 0.0
    %1962 = vmatpush2.msra.mxu0 0.0
    %1963 = vmatprep.subr.mxu0 0.0
    %1964 = vmatpush2.msra.mxu0 0.0
    %1965 = vmatprep.subr.mxu0 0.0
    %1966 = vmatpush2.msra.mxu0 0.0
    %1967 = vmatprep.subr.mxu0 0.0
    %1968 = vmatpush2.msra.mxu0 0.0
    %1969 = vmatprep.subr.mxu0 0.0
    %1970 = vmatpush2.msra.mxu0 0.0
    %1971 = vmatprep.subr.mxu0 0.0
    %1972 = vmatpush2.msra.mxu0 0.0
    %1973 = vmatprep.subr.mxu0 0.0
    %1974 = vmatpush2.msra.mxu0 0.0
    %1975 = vmatprep.subr.mxu0 0.0
    %1976 = vmatpush2.msra.mxu0 0.0
    %1977 = vmatprep.subr.mxu0 0.0
    %1978 = vmatpush2.msra.mxu0 0.0
    %1979 = vmatprep.subr.mxu0 0.0
    %1980 = vmatpush2.msra.mxu0 0.0
    %1981 = vmatprep.mubr.f32.mxu0 0.0
    %1982 = vmatmul.mubr.f32.gmra.mxu0 %v1915
    %v1983 = vpop.f32.mrf.mxu0
    %v1984 = vadd.f32 0.0, %v1983
    %v1985 = vpop.f32.mrf.mxu0
    %v1986 = vadd.f32 0.0, %v1985
    %1987 = vdwg.mxu0
    %v1988 = vsel %vm546, %v1984, %v1986
    %v1989 = vadd.f32 %v1914, %v1988
    %v1990 = vsub.f32 0.0, %v1989
    %v1991 = vmul.f32 %v1990, 1.442695
    %v1992 = vpow.pop %v1991
    %v1993 = vadd.f32 %v1992, 1.0
    %v1994 = vrcp.pop %v1993
    %v1995 = vtanh.pop %v1989
    %v1996 = vmul.f32 %v1994, %v1893
    %1998 = vrot.lane.b32.xlu0 %v1995, 64
    %v1999 = vpop.permute.xlu0 %1998
    %v2001 = vmul.f32 %v1994, %v1999
    %2003 = vrot.lane.b32.xlu0 %v2001, 32
    %v2004 = vpop.permute.xlu0 %2003
    %v2006 = vadd.f32 %v1996, %v2004
    %v2007 = vtanh.pop %v2006
    %2009 = vrot.lane.b32.xlu0 %v2007, 64
    %v2010 = vpop.permute.xlu0 %2009
    %v2012 = vmul.f32 %v1994, %v2010
    %2014 = vrot.lane.b32.xlu0 %v2012, 32
    %v2015 = vpop.permute.xlu0 %2014
    %2017 = vst.msk [vmem:[%s14 + $0x1] sm:$0x1] %vm664, %v2015
    %2018 = vst.msk [vmem:[%s15 + $0x5] sm:$0x2] %vm666, %v2015
    %v2019 = vlaneseq
    %v2020 = vshrl.u32 %v2019, 7
    %v2021 = vsub.s32 2, %v2020
    %v2022 = vrot.slane %v1626, %v2021
    %v2023 = vlaneseq
    %v2024 = vshrl.u32 %v2023, 7
    %v2025 = vsub.s32 5, %v2024
    %v2026 = vrot.slane %v1779, %v2025
    %v2027 = vsel %vm546, %v2022, %v2026
    %v2028 = vsel %vm556, %v2015, 0
    %2030 = vmatprep.subr.mxu0 0.0
    %2031 = vmatpush1.msra.mxu0 0.0
    %2032 = vmatprep.subr.mxu0 0.0
    %2033 = vmatpush1.msra.mxu0 0.0
    %2034 = vmatprep.subr.mxu0 0.0
    %2035 = vmatpush1.msra.mxu0 0.0
    %2036 = vmatprep.subr.mxu0 0.0
    %2037 = vmatpush1.msra.mxu0 0.0
    %2038 = vmatprep.subr.mxu0 0.0
    %2039 = vmatpush1.msra.mxu0 0.0
    %2040 = vmatprep.subr.mxu0 0.0
    %2041 = vmatpush1.msra.mxu0 0.0
    %2042 = vmatprep.subr.mxu0 0.0
    %2043 = vmatpush1.msra.mxu0 0.0
    %2044 = vmatprep.subr.mxu0 0.0
    %2045 = vmatpush1.msra.mxu0 0.0
    %2046 = vmatprep.subr.mxu0 0.0
    %2047 = vmatpush1.msra.mxu0 0.0
    %2048 = vmatprep.subr.mxu0 0.0
    %2049 = vmatpush1.msra.mxu0 0.0
    %2050 = vmatprep.subr.mxu0 0.0
    %2051 = vmatpush1.msra.mxu0 0.0
    %2052 = vmatprep.subr.mxu0 0.0
    %2053 = vmatpush1.msra.mxu0 0.0
    %2054 = vmatprep.subr.mxu0 %v1787
    %2055 = vmatpush1.msra.mxu0 %v1786
    %2056 = vmatprep.subr.mxu0 %v1785
    %2057 = vmatpush1.msra.mxu0 %v1784
    %2058 = vmatprep.subr.mxu0 %v1783
    %2059 = vmatpush1.msra.mxu0 %v1782
    %2060 = vmatprep.subr.mxu0 %v1781
    %2061 = vmatpush1.msra.mxu0 %v1780
    %2062 = vmatprep.subr.mxu0 0.0
    %2063 = vmatpush2.msra.mxu0 0.0
    %2064 = vmatprep.subr.mxu0 0.0
    %2065 = vmatpush2.msra.mxu0 0.0
    %2066 = vmatprep.subr.mxu0 0.0
    %2067 = vmatpush2.msra.mxu0 0.0
    %2068 = vmatprep.subr.mxu0 0.0
    %2069 = vmatpush2.msra.mxu0 0.0
    %2070 = vmatprep.subr.mxu0 0.0
    %2071 = vmatpush2.msra.mxu0 0.0
    %2072 = vmatprep.subr.mxu0 0.0
    %2073 = vmatpush2.msra.mxu0 0.0
    %2074 = vmatprep.subr.mxu0 0.0
    %2075 = vmatpush2.msra.mxu0 0.0
    %2076 = vmatprep.subr.mxu0 0.0
    %2077 = vmatpush2.msra.mxu0 0.0
    %2078 = vmatprep.subr.mxu0 0.0
    %2079 = vmatpush2.msra.mxu0 0.0
    %2080 = vmatprep.subr.mxu0 0.0
    %2081 = vmatpush2.msra.mxu0 0.0
    %2082 = vmatprep.subr.mxu0 0.0
    %2083 = vmatpush2.msra.mxu0 0.0
    %2084 = vmatprep.subr.mxu0 0.0
    %2085 = vmatpush2.msra.mxu0 0.0
    %2086 = vmatprep.subr.mxu0 0.0
    %2087 = vmatpush2.msra.mxu0 0.0
    %2088 = vmatprep.subr.mxu0 0.0
    %2089 = vmatpush2.msra.mxu0 0.0
    %2090 = vmatprep.subr.mxu0 0.0
    %2091 = vmatpush2.msra.mxu0 0.0
    %2092 = vmatprep.subr.mxu0 0.0
    %2093 = vmatpush2.msra.mxu0 0.0
    %2094 = vmatprep.mubr.f32.mxu0 0.0
    %2095 = vmatmul.mubr.f32.gmra.mxu0 %v2028
    %v2096 = vpop.f32.mrf.mxu0
    %v2097 = vadd.f32 0.0, %v2096
    %v2098 = vpop.f32.mrf.mxu0
    %v2099 = vadd.f32 0.0, %v2098
    %2100 = vdwg.mxu0
    %v2101 = vsel %vm546, %v2097, %v2099
    %v2102 = vadd.f32 %v2027, %v2101
    %v2103 = vsub.f32 0.0, %v2102
    %v2104 = vmul.f32 %v2103, 1.442695
    %v2105 = vpow.pop %v2104
    %v2106 = vadd.f32 %v2105, 1.0
    %v2107 = vrcp.pop %v2106
    %v2108 = vtanh.pop %v2102
    %v2109 = vmul.f32 %v2107, %v2006
    %2111 = vrot.lane.b32.xlu0 %v2108, 64
    %v2112 = vpop.permute.xlu0 %2111
    %v2114 = vmul.f32 %v2107, %v2112
    %2116 = vrot.lane.b32.xlu0 %v2114, 32
    %v2117 = vpop.permute.xlu0 %2116
    %v2119 = vadd.f32 %v2109, %v2117
    %v2120 = vtanh.pop %v2119
    %2122 = vrot.lane.b32.xlu0 %v2120, 64
    %v2123 = vpop.permute.xlu0 %2122
    %v2125 = vmul.f32 %v2107, %v2123
    %2127 = vrot.lane.b32.xlu0 %v2125, 32
    %v2128 = vpop.permute.xlu0 %2127
    %2130 = vst.msk [vmem:[%s14 + $0x2] sm:$0x1] %vm664, %v2128
    %2131 = vst.msk [vmem:[%s15 + $0x4] sm:$0x2] %vm666, %v2128
    %v2132 = vlaneseq
    %v2133 = vshrl.u32 %v2132, 7
    %v2134 = vsub.s32 3, %v2133
    %v2135 = vrot.slane %v1626, %v2134
    %v2136 = vlaneseq
    %v2137 = vshrl.u32 %v2136, 7
    %v2138 = vsub.s32 4, %v2137
    %v2139 = vrot.slane %v1779, %v2138
    %v2140 = vsel %vm546, %v2135, %v2139
    %v2141 = vsel %vm556, %v2128, 0
    %2143 = vmatprep.subr.mxu0 0.0
    %2144 = vmatpush1.msra.mxu0 0.0
    %2145 = vmatprep.subr.mxu0 0.0
    %2146 = vmatpush1.msra.mxu0 0.0
    %2147 = vmatprep.subr.mxu0 0.0
    %2148 = vmatpush1.msra.mxu0 0.0
    %2149 = vmatprep.subr.mxu0 0.0
    %2150 = vmatpush1.msra.mxu0 0.0
    %2151 = vmatprep.subr.mxu0 0.0
    %2152 = vmatpush1.msra.mxu0 0.0
    %2153 = vmatprep.subr.mxu0 0.0
    %2154 = vmatpush1.msra.mxu0 0.0
    %2155 = vmatprep.subr.mxu0 0.0
    %2156 = vmatpush1.msra.mxu0 0.0
    %2157 = vmatprep.subr.mxu0 0.0
    %2158 = vmatpush1.msra.mxu0 0.0
    %2159 = vmatprep.subr.mxu0 0.0
    %2160 = vmatpush1.msra.mxu0 0.0
    %2161 = vmatprep.subr.mxu0 0.0
    %2162 = vmatpush1.msra.mxu0 0.0
    %2163 = vmatprep.subr.mxu0 0.0
    %2164 = vmatpush1.msra.mxu0 0.0
    %2165 = vmatprep.subr.mxu0 0.0
    %2166 = vmatpush1.msra.mxu0 0.0
    %2167 = vmatprep.subr.mxu0 %v1787
    %2168 = vmatpush1.msra.mxu0 %v1786
    %2169 = vmatprep.subr.mxu0 %v1785
    %2170 = vmatpush1.msra.mxu0 %v1784
    %2171 = vmatprep.subr.mxu0 %v1783
    %2172 = vmatpush1.msra.mxu0 %v1782
    %2173 = vmatprep.subr.mxu0 %v1781
    %2174 = vmatpush1.msra.mxu0 %v1780
    %2175 = vmatprep.subr.mxu0 0.0
    %2176 = vmatpush2.msra.mxu0 0.0
    %2177 = vmatprep.subr.mxu0 0.0
    %2178 = vmatpush2.msra.mxu0 0.0
    %2179 = vmatprep.subr.mxu0 0.0
    %2180 = vmatpush2.msra.mxu0 0.0
    %2181 = vmatprep.subr.mxu0 0.0
    %2182 = vmatpush2.msra.mxu0 0.0
    %2183 = vmatprep.subr.mxu0 0.0
    %2184 = vmatpush2.msra.mxu0 0.0
    %2185 = vmatprep.subr.mxu0 0.0
    %2186 = vmatpush2.msra.mxu0 0.0
    %2187 = vmatprep.subr.mxu0 0.0
    %2188 = vmatpush2.msra.mxu0 0.0
    %2189 = vmatprep.subr.mxu0 0.0
    %2190 = vmatpush2.msra.mxu0 0.0
    %2191 = vmatprep.subr.mxu0 0.0
    %2192 = vmatpush2.msra.mxu0 0.0
    %2193 = vmatprep.subr.mxu0 0.0
    %2194 = vmatpush2.msra.mxu0 0.0
    %2195 = vmatprep.subr.mxu0 0.0
    %2196 = vmatpush2.msra.mxu0 0.0
    %2197 = vmatprep.subr.mxu0 0.0
    %2198 = vmatpush2.msra.mxu0 0.0
    %2199 = vmatprep.subr.mxu0 0.0
    %2200 = vmatpush2.msra.mxu0 0.0
    %2201 = vmatprep.subr.mxu0 0.0
    %2202 = vmatpush2.msra.mxu0 0.0
    %2203 = vmatprep.subr.mxu0 0.0
    %2204 = vmatpush2.msra.mxu0 0.0
    %2205 = vmatprep.subr.mxu0 0.0
    %2206 = vmatpush2.msra.mxu0 0.0
    %2207 = vmatprep.mubr.f32.mxu0 0.0
    %2208 = vmatmul.mubr.f32.gmra.mxu0 %v2141
    %v2209 = vpop.f32.mrf.mxu0
    %v2210 = vadd.f32 0.0, %v2209
    %v2211 = vpop.f32.mrf.mxu0
    %v2212 = vadd.f32 0.0, %v2211
    %2213 = vdwg.mxu0
    %v2214 = vsel %vm546, %v2210, %v2212
    %v2215 = vadd.f32 %v2140, %v2214
    %v2216 = vsub.f32 0.0, %v2215
    %v2217 = vmul.f32 %v2216, 1.442695
    %v2218 = vpow.pop %v2217
    %v2219 = vadd.f32 %v2218, 1.0
    %v2220 = vrcp.pop %v2219
    %v2221 = vtanh.pop %v2215
    %v2222 = vmul.f32 %v2220, %v2119
    %2224 = vrot.lane.b32.xlu0 %v2221, 64
    %v2225 = vpop.permute.xlu0 %2224
    %v2227 = vmul.f32 %v2220, %v2225
    %2229 = vrot.lane.b32.xlu0 %v2227, 32
    %v2230 = vpop.permute.xlu0 %2229
    %v2232 = vadd.f32 %v2222, %v2230
    %v2233 = vtanh.pop %v2232
    %2235 = vrot.lane.b32.xlu0 %v2233, 64
    %v2236 = vpop.permute.xlu0 %2235
    %v2238 = vmul.f32 %v2220, %v2236
    %2240 = vrot.lane.b32.xlu0 %v2238, 32
    %v2241 = vpop.permute.xlu0 %2240
    %2243 = vst.msk [vmem:[%s14 + $0x3] sm:$0x1] %vm664, %v2241
    %2244 = vst.msk [vmem:[%s15 + $0x3] sm:$0x2] %vm666, %v2241
    %v2245 = vlaneseq
    %v2246 = vshrl.u32 %v2245, 7
    %v2247 = vsub.s32 4, %v2246
    %v2248 = vrot.slane %v1626, %v2247
    %v2249 = vlaneseq
    %v2250 = vshrl.u32 %v2249, 7
    %v2251 = vsub.s32 3, %v2250
    %v2252 = vrot.slane %v1779, %v2251
    %v2253 = vsel %vm546, %v2248, %v2252
    %v2254 = vsel %vm556, %v2241, 0
    %2256 = vmatprep.subr.mxu0 0.0
    %2257 = vmatpush1.msra.mxu0 0.0
    %2258 = vmatprep.subr.mxu0 0.0
    %2259 = vmatpush1.msra.mxu0 0.0
    %2260 = vmatprep.subr.mxu0 0.0
    %2261 = vmatpush1.msra.mxu0 0.0
    %2262 = vmatprep.subr.mxu0 0.0
    %2263 = vmatpush1.msra.mxu0 0.0
    %2264 = vmatprep.subr.mxu0 0.0
    %2265 = vmatpush1.msra.mxu0 0.0
    %2266 = vmatprep.subr.mxu0 0.0
    %2267 = vmatpush1.msra.mxu0 0.0
    %2268 = vmatprep.subr.mxu0 0.0
    %2269 = vmatpush1.msra.mxu0 0.0
    %2270 = vmatprep.subr.mxu0 0.0
    %2271 = vmatpush1.msra.mxu0 0.0
    %2272 = vmatprep.subr.mxu0 0.0
    %2273 = vmatpush1.msra.mxu0 0.0
    %2274 = vmatprep.subr.mxu0 0.0
    %2275 = vmatpush1.msra.mxu0 0.0
    %2276 = vmatprep.subr.mxu0 0.0
    %2277 = vmatpush1.msra.mxu0 0.0
    %2278 = vmatprep.subr.mxu0 0.0
    %2279 = vmatpush1.msra.mxu0 0.0
    %2280 = vmatprep.subr.mxu0 %v1787
    %2281 = vmatpush1.msra.mxu0 %v1786
    %2282 = vmatprep.subr.mxu0 %v1785
    %2283 = vmatpush1.msra.mxu0 %v1784
    %2284 = vmatprep.subr.mxu0 %v1783
    %2285 = vmatpush1.msra.mxu0 %v1782
    %2286 = vmatprep.subr.mxu0 %v1781
    %2287 = vmatpush1.msra.mxu0 %v1780
    %2288 = vmatprep.subr.mxu0 0.0
    %2289 = vmatpush2.msra.mxu0 0.0
    %2290 = vmatprep.subr.mxu0 0.0
    %2291 = vmatpush2.msra.mxu0 0.0
    %2292 = vmatprep.subr.mxu0 0.0
    %2293 = vmatpush2.msra.mxu0 0.0
    %2294 = vmatprep.subr.mxu0 0.0
    %2295 = vmatpush2.msra.mxu0 0.0
    %2296 = vmatprep.subr.mxu0 0.0
    %2297 = vmatpush2.msra.mxu0 0.0
    %2298 = vmatprep.subr.mxu0 0.0
    %2299 = vmatpush2.msra.mxu0 0.0
    %2300 = vmatprep.subr.mxu0 0.0
    %2301 = vmatpush2.msra.mxu0 0.0
    %2302 = vmatprep.subr.mxu0 0.0
    %2303 = vmatpush2.msra.mxu0 0.0
    %2304 = vmatprep.subr.mxu0 0.0
    %2305 = vmatpush2.msra.mxu0 0.0
    %2306 = vmatprep.subr.mxu0 0.0
    %2307 = vmatpush2.msra.mxu0 0.0
    %2308 = vmatprep.subr.mxu0 0.0
    %2309 = vmatpush2.msra.mxu0 0.0
    %2310 = vmatprep.subr.mxu0 0.0
    %2311 = vmatpush2.msra.mxu0 0.0
    %2312 = vmatprep.subr.mxu0 0.0
    %2313 = vmatpush2.msra.mxu0 0.0
    %2314 = vmatprep.subr.mxu0 0.0
    %2315 = vmatpush2.msra.mxu0 0.0
    %2316 = vmatprep.subr.mxu0 0.0
    %2317 = vmatpush2.msra.mxu0 0.0
    %2318 = vmatprep.subr.mxu0 0.0
    %2319 = vmatpush2.msra.mxu0 0.0
    %2320 = vmatprep.mubr.f32.mxu0 0.0
    %2321 = vmatmul.mubr.f32.gmra.mxu0 %v2254
    %v2322 = vpop.f32.mrf.mxu0
    %v2323 = vadd.f32 0.0, %v2322
    %v2324 = vpop.f32.mrf.mxu0
    %v2325 = vadd.f32 0.0, %v2324
    %2326 = vdwg.mxu0
    %v2327 = vsel %vm546, %v2323, %v2325
    %v2328 = vadd.f32 %v2253, %v2327
    %v2329 = vsub.f32 0.0, %v2328
    %v2330 = vmul.f32 %v2329, 1.442695
    %v2331 = vpow.pop %v2330
    %v2332 = vadd.f32 %v2331, 1.0
    %v2333 = vrcp.pop %v2332
    %v2334 = vtanh.pop %v2328
    %v2335 = vmul.f32 %v2333, %v2232
    %2337 = vrot.lane.b32.xlu0 %v2334, 64
    %v2338 = vpop.permute.xlu0 %2337
    %v2340 = vmul.f32 %v2333, %v2338
    %2342 = vrot.lane.b32.xlu0 %v2340, 32
    %v2343 = vpop.permute.xlu0 %2342
    %v2345 = vadd.f32 %v2335, %v2343
    %v2346 = vtanh.pop %v2345
    %2348 = vrot.lane.b32.xlu0 %v2346, 64
    %v2349 = vpop.permute.xlu0 %2348
    %v2351 = vmul.f32 %v2333, %v2349
    %2353 = vrot.lane.b32.xlu0 %v2351, 32
    %v2354 = vpop.permute.xlu0 %2353
    %2356 = vst.msk [vmem:[%s14 + $0x4] sm:$0x1] %vm664, %v2354
    %2357 = vst.msk [vmem:[%s15 + $0x2] sm:$0x2] %vm666, %v2354
    %v2358 = vlaneseq
    %v2359 = vshrl.u32 %v2358, 7
    %v2360 = vsub.s32 5, %v2359
    %v2361 = vrot.slane %v1626, %v2360
    %v2362 = vlaneseq
    %v2363 = vshrl.u32 %v2362, 7
    %v2364 = vsub.s32 2, %v2363
    %v2365 = vrot.slane %v1779, %v2364
    %v2366 = vsel %vm546, %v2361, %v2365
    %v2367 = vsel %vm556, %v2354, 0
    %2369 = vmatprep.subr.mxu0 0.0
    %2370 = vmatpush1.msra.mxu0 0.0
    %2371 = vmatprep.subr.mxu0 0.0
    %2372 = vmatpush1.msra.mxu0 0.0
    %2373 = vmatprep.subr.mxu0 0.0
    %2374 = vmatpush1.msra.mxu0 0.0
    %2375 = vmatprep.subr.mxu0 0.0
    %2376 = vmatpush1.msra.mxu0 0.0
    %2377 = vmatprep.subr.mxu0 0.0
    %2378 = vmatpush1.msra.mxu0 0.0
    %2379 = vmatprep.subr.mxu0 0.0
    %2380 = vmatpush1.msra.mxu0 0.0
    %2381 = vmatprep.subr.mxu0 0.0
    %2382 = vmatpush1.msra.mxu0 0.0
    %2383 = vmatprep.subr.mxu0 0.0
    %2384 = vmatpush1.msra.mxu0 0.0
    %2385 = vmatprep.subr.mxu0 0.0
    %2386 = vmatpush1.msra.mxu0 0.0
    %2387 = vmatprep.subr.mxu0 0.0
    %2388 = vmatpush1.msra.mxu0 0.0
    %2389 = vmatprep.subr.mxu0 0.0
    %2390 = vmatpush1.msra.mxu0 0.0
    %2391 = vmatprep.subr.mxu0 0.0
    %2392 = vmatpush1.msra.mxu0 0.0
    %2393 = vmatprep.subr.mxu0 %v1787
    %2394 = vmatpush1.msra.mxu0 %v1786
    %2395 = vmatprep.subr.mxu0 %v1785
    %2396 = vmatpush1.msra.mxu0 %v1784
    %2397 = vmatprep.subr.mxu0 %v1783
    %2398 = vmatpush1.msra.mxu0 %v1782
    %2399 = vmatprep.subr.mxu0 %v1781
    %2400 = vmatpush1.msra.mxu0 %v1780
    %2401 = vmatprep.subr.mxu0 0.0
    %2402 = vmatpush2.msra.mxu0 0.0
    %2403 = vmatprep.subr.mxu0 0.0
    %2404 = vmatpush2.msra.mxu0 0.0
    %2405 = vmatprep.subr.mxu0 0.0
    %2406 = vmatpush2.msra.mxu0 0.0
    %2407 = vmatprep.subr.mxu0 0.0
    %2408 = vmatpush2.msra.mxu0 0.0
    %2409 = vmatprep.subr.mxu0 0.0
    %2410 = vmatpush2.msra.mxu0 0.0
    %2411 = vmatprep.subr.mxu0 0.0
    %2412 = vmatpush2.msra.mxu0 0.0
    %2413 = vmatprep.subr.mxu0 0.0
    %2414 = vmatpush2.msra.mxu0 0.0
    %2415 = vmatprep.subr.mxu0 0.0
    %2416 = vmatpush2.msra.mxu0 0.0
    %2417 = vmatprep.subr.mxu0 0.0
    %2418 = vmatpush2.msra.mxu0 0.0
    %2419 = vmatprep.subr.mxu0 0.0
    %2420 = vmatpush2.msra.mxu0 0.0
    %2421 = vmatprep.subr.mxu0 0.0
    %2422 = vmatpush2.msra.mxu0 0.0
    %2423 = vmatprep.subr.mxu0 0.0
    %2424 = vmatpush2.msra.mxu0 0.0
    %2425 = vmatprep.subr.mxu0 0.0
    %2426 = vmatpush2.msra.mxu0 0.0
    %2427 = vmatprep.subr.mxu0 0.0
    %2428 = vmatpush2.msra.mxu0 0.0
    %2429 = vmatprep.subr.mxu0 0.0
    %2430 = vmatpush2.msra.mxu0 0.0
    %2431 = vmatprep.subr.mxu0 0.0
    %2432 = vmatpush2.msra.mxu0 0.0
    %2433 = vmatprep.mubr.f32.mxu0 0.0
    %2434 = vmatmul.mubr.f32.gmra.mxu0 %v2367
    %v2435 = vpop.f32.mrf.mxu0
    %v2436 = vadd.f32 0.0, %v2435
    %v2437 = vpop.f32.mrf.mxu0
    %v2438 = vadd.f32 0.0, %v2437
    %2439 = vdwg.mxu0
    %v2440 = vsel %vm546, %v2436, %v2438
    %v2441 = vadd.f32 %v2366, %v2440
    %v2442 = vsub.f32 0.0, %v2441
    %v2443 = vmul.f32 %v2442, 1.442695
    %v2444 = vpow.pop %v2443
    %v2445 = vadd.f32 %v2444, 1.0
    %v2446 = vrcp.pop %v2445
    %v2447 = vtanh.pop %v2441
    %v2448 = vmul.f32 %v2446, %v2345
    %2450 = vrot.lane.b32.xlu0 %v2447, 64
    %v2451 = vpop.permute.xlu0 %2450
    %v2453 = vmul.f32 %v2446, %v2451
    %2455 = vrot.lane.b32.xlu0 %v2453, 32
    %v2456 = vpop.permute.xlu0 %2455
    %v2458 = vadd.f32 %v2448, %v2456
    %v2459 = vtanh.pop %v2458
    %2461 = vrot.lane.b32.xlu0 %v2459, 64
    %v2462 = vpop.permute.xlu0 %2461
    %v2464 = vmul.f32 %v2446, %v2462
    %2466 = vrot.lane.b32.xlu0 %v2464, 32
    %v2467 = vpop.permute.xlu0 %2466
    %2469 = vst.msk [vmem:[%s14 + $0x5] sm:$0x1] %vm664, %v2467
    %2470 = vst.msk [vmem:[%s15 + $0x1] sm:$0x2] %vm666, %v2467
    %v2471 = vlaneseq
    %v2472 = vshrl.u32 %v2471, 7
    %v2473 = vsub.s32 6, %v2472
    %v2474 = vrot.slane %v1626, %v2473
    %v2475 = vlaneseq
    %v2476 = vshrl.u32 %v2475, 7
    %v2477 = vsub.s32 1, %v2476
    %v2478 = vrot.slane %v1779, %v2477
    %v2479 = vsel %vm546, %v2474, %v2478
    %v2480 = vsel %vm556, %v2467, 0
    %2482 = vmatprep.subr.mxu0 0.0
    %2483 = vmatpush1.msra.mxu0 0.0
    %2484 = vmatprep.subr.mxu0 0.0
    %2485 = vmatpush1.msra.mxu0 0.0
    %2486 = vmatprep.subr.mxu0 0.0
    %2487 = vmatpush1.msra.mxu0 0.0
    %2488 = vmatprep.subr.mxu0 0.0
    %2489 = vmatpush1.msra.mxu0 0.0
    %2490 = vmatprep.subr.mxu0 0.0
    %2491 = vmatpush1.msra.mxu0 0.0
    %2492 = vmatprep.subr.mxu0 0.0
    %2493 = vmatpush1.msra.mxu0 0.0
    %2494 = vmatprep.subr.mxu0 0.0
    %2495 = vmatpush1.msra.mxu0 0.0
    %2496 = vmatprep.subr.mxu0 0.0
    %2497 = vmatpush1.msra.mxu0 0.0
    %2498 = vmatprep.subr.mxu0 0.0
    %2499 = vmatpush1.msra.mxu0 0.0
    %2500 = vmatprep.subr.mxu0 0.0
    %2501 = vmatpush1.msra.mxu0 0.0
    %2502 = vmatprep.subr.mxu0 0.0
    %2503 = vmatpush1.msra.mxu0 0.0
    %2504 = vmatprep.subr.mxu0 0.0
    %2505 = vmatpush1.msra.mxu0 0.0
    %2506 = vmatprep.subr.mxu0 %v1787
    %2507 = vmatpush1.msra.mxu0 %v1786
    %2508 = vmatprep.subr.mxu0 %v1785
    %2509 = vmatpush1.msra.mxu0 %v1784
    %2510 = vmatprep.subr.mxu0 %v1783
    %2511 = vmatpush1.msra.mxu0 %v1782
    %2512 = vmatprep.subr.mxu0 %v1781
    %2513 = vmatpush1.msra.mxu0 %v1780
    %2514 = vmatprep.subr.mxu0 0.0
    %2515 = vmatpush2.msra.mxu0 0.0
    %2516 = vmatprep.subr.mxu0 0.0
    %2517 = vmatpush2.msra.mxu0 0.0
    %2518 = vmatprep.subr.mxu0 0.0
    %2519 = vmatpush2.msra.mxu0 0.0
    %2520 = vmatprep.subr.mxu0 0.0
    %2521 = vmatpush2.msra.mxu0 0.0
    %2522 = vmatprep.subr.mxu0 0.0
    %2523 = vmatpush2.msra.mxu0 0.0
    %2524 = vmatprep.subr.mxu0 0.0
    %2525 = vmatpush2.msra.mxu0 0.0
    %2526 = vmatprep.subr.mxu0 0.0
    %2527 = vmatpush2.msra.mxu0 0.0
    %2528 = vmatprep.subr.mxu0 0.0
    %2529 = vmatpush2.msra.mxu0 0.0
    %2530 = vmatprep.subr.mxu0 0.0
    %2531 = vmatpush2.msra.mxu0 0.0
    %2532 = vmatprep.subr.mxu0 0.0
    %2533 = vmatpush2.msra.mxu0 0.0
    %2534 = vmatprep.subr.mxu0 0.0
    %2535 = vmatpush2.msra.mxu0 0.0
    %2536 = vmatprep.subr.mxu0 0.0
    %2537 = vmatpush2.msra.mxu0 0.0
    %2538 = vmatprep.subr.mxu0 0.0
    %2539 = vmatpush2.msra.mxu0 0.0
    %2540 = vmatprep.subr.mxu0 0.0
    %2541 = vmatpush2.msra.mxu0 0.0
    %2542 = vmatprep.subr.mxu0 0.0
    %2543 = vmatpush2.msra.mxu0 0.0
    %2544 = vmatprep.subr.mxu0 0.0
    %2545 = vmatpush2.msra.mxu0 0.0
    %2546 = vmatprep.mubr.f32.mxu0 0.0
    %2547 = vmatmul.mubr.f32.gmra.mxu0 %v2480
    %v2548 = vpop.f32.mrf.mxu0
    %v2549 = vadd.f32 0.0, %v2548
    %v2550 = vpop.f32.mrf.mxu0
    %v2551 = vadd.f32 0.0, %v2550
    %2552 = vdwg.mxu0
    %v2553 = vsel %vm546, %v2549, %v2551
    %v2554 = vadd.f32 %v2479, %v2553
    %v2555 = vsub.f32 0.0, %v2554
    %v2556 = vmul.f32 %v2555, 1.442695
    %v2557 = vpow.pop %v2556
    %v2558 = vadd.f32 %v2557, 1.0
    %v2559 = vrcp.pop %v2558
    %v2560 = vtanh.pop %v2554
    %v2561 = vmul.f32 %v2559, %v2458
    %2563 = vrot.lane.b32.xlu0 %v2560, 64
    %v2564 = vpop.permute.xlu0 %2563
    %v2566 = vmul.f32 %v2559, %v2564
    %2568 = vrot.lane.b32.xlu0 %v2566, 32
    %v2569 = vpop.permute.xlu0 %2568
    %v2571 = vadd.f32 %v2561, %v2569
    %v2572 = vtanh.pop %v2571
    %2574 = vrot.lane.b32.xlu0 %v2572, 64
    %v2575 = vpop.permute.xlu0 %2574
    %v2577 = vmul.f32 %v2559, %v2575
    %2579 = vrot.lane.b32.xlu0 %v2577, 32
    %v2580 = vpop.permute.xlu0 %2579
    %2582 = vst.msk [vmem:[%s14 + $0x6] sm:$0x1] %vm664, %v2580
    %2583 = vst.msk [vmem:[%s15] sm:$0x2] %vm666, %v2580
    %v2584 = vlaneseq
    %v2585 = vshrl.u32 %v2584, 7
    %v2586 = vsub.s32 7, %v2585
    %v2587 = vrot.slane %v1626, %v2586
    %v2588 = vlaneseq
    %v2589 = vshrl.u32 %v2588, 7
    %v2590 = vsub.s32 0, %v2589
    %v2591 = vrot.slane %v1779, %v2590
    %v2592 = vsel %vm546, %v2587, %v2591
    %v2593 = vsel %vm556, %v2580, 0
    %2595 = vmatprep.subr.mxu0 0.0
    %2596 = vmatpush1.msra.mxu0 0.0
    %2597 = vmatprep.subr.mxu0 0.0
    %2598 = vmatpush1.msra.mxu0 0.0
    %2599 = vmatprep.subr.mxu0 0.0
    %2600 = vmatpush1.msra.mxu0 0.0
    %2601 = vmatprep.subr.mxu0 0.0
    %2602 = vmatpush1.msra.mxu0 0.0
    %2603 = vmatprep.subr.mxu0 0.0
    %2604 = vmatpush1.msra.mxu0 0.0
    %2605 = vmatprep.subr.mxu0 0.0
    %2606 = vmatpush1.msra.mxu0 0.0
    %2607 = vmatprep.subr.mxu0 0.0
    %2608 = vmatpush1.msra.mxu0 0.0
    %2609 = vmatprep.subr.mxu0 0.0
    %2610 = vmatpush1.msra.mxu0 0.0
    %2611 = vmatprep.subr.mxu0 0.0
    %2612 = vmatpush1.msra.mxu0 0.0
    %2613 = vmatprep.subr.mxu0 0.0
    %2614 = vmatpush1.msra.mxu0 0.0
    %2615 = vmatprep.subr.mxu0 0.0
    %2616 = vmatpush1.msra.mxu0 0.0
    %2617 = vmatprep.subr.mxu0 0.0
    %2618 = vmatpush1.msra.mxu0 0.0
    %2619 = vmatprep.subr.mxu0 %v1787
    %2620 = vmatpush1.msra.mxu0 %v1786
    %2621 = vmatprep.subr.mxu0 %v1785
    %2622 = vmatpush1.msra.mxu0 %v1784
    %2623 = vmatprep.subr.mxu0 %v1783
    %2624 = vmatpush1.msra.mxu0 %v1782
    %2625 = vmatprep.subr.mxu0 %v1781
    %2626 = vmatpush1.msra.mxu0 %v1780
    %2627 = vmatprep.subr.mxu0 0.0
    %2628 = vmatpush2.msra.mxu0 0.0
    %2629 = vmatprep.subr.mxu0 0.0
    %2630 = vmatpush2.msra.mxu0 0.0
    %2631 = vmatprep.subr.mxu0 0.0
    %2632 = vmatpush2.msra.mxu0 0.0
    %2633 = vmatprep.subr.mxu0 0.0
    %2634 = vmatpush2.msra.mxu0 0.0
    %2635 = vmatprep.subr.mxu0 0.0
    %2636 = vmatpush2.msra.mxu0 0.0
    %2637 = vmatprep.subr.mxu0 0.0
    %2638 = vmatpush2.msra.mxu0 0.0
    %2639 = vmatprep.subr.mxu0 0.0
    %2640 = vmatpush2.msra.mxu0 0.0
    %2641 = vmatprep.subr.mxu0 0.0
    %2642 = vmatpush2.msra.mxu0 0.0
    %2643 = vmatprep.subr.mxu0 0.0
    %2644 = vmatpush2.msra.mxu0 0.0
    %2645 = vmatprep.subr.mxu0 0.0
    %2646 = vmatpush2.msra.mxu0 0.0
    %2647 = vmatprep.subr.mxu0 0.0
    %2648 = vmatpush2.msra.mxu0 0.0
    %2649 = vmatprep.subr.mxu0 0.0
    %2650 = vmatpush2.msra.mxu0 0.0
    %2651 = vmatprep.subr.mxu0 0.0
    %2652 = vmatpush2.msra.mxu0 0.0
    %2653 = vmatprep.subr.mxu0 0.0
    %2654 = vmatpush2.msra.mxu0 0.0
    %2655 = vmatprep.subr.mxu0 0.0
    %2656 = vmatpush2.msra.mxu0 0.0
    %2657 = vmatprep.subr.mxu0 0.0
    %2658 = vmatpush2.msra.mxu0 0.0
    %2659 = vmatprep.mubr.f32.mxu0 0.0
    %2660 = vmatmul.mubr.f32.gmra.mxu0 %v2593
    %v2661 = vpop.f32.mrf.mxu0
    %v2662 = vadd.f32 0.0, %v2661
    %v2663 = vpop.f32.mrf.mxu0
    %v2664 = vadd.f32 0.0, %v2663
    %2665 = vdwg.mxu0
    %v2666 = vsel %vm546, %v2662, %v2664
    %v2667 = vadd.f32 %v2592, %v2666
    %v2668 = vsub.f32 0.0, %v2667
    %v2669 = vmul.f32 %v2668, 1.442695
    %v2670 = vpow.pop %v2669
    %v2671 = vadd.f32 %v2670, 1.0
    %v2672 = vrcp.pop %v2671
    %v2673 = vtanh.pop %v2667
    %v2674 = vmul.f32 %v2672, %v2571
    %2676 = vrot.lane.b32.xlu0 %v2673, 64
    %v2677 = vpop.permute.xlu0 %2676
    %v2679 = vmul.f32 %v2672, %v2677
    %2681 = vrot.lane.b32.xlu0 %v2679, 32
    %v2682 = vpop.permute.xlu0 %2681
    %v2684 = vadd.f32 %v2674, %v2682
    %v2685 = vtanh.pop %v2684
    %2687 = vrot.lane.b32.xlu0 %v2685, 64
    %v2688 = vpop.permute.xlu0 %2687
    %v2690 = vmul.f32 %v2672, %v2688
    %2692 = vrot.lane.b32.xlu0 %v2690, 32
    %v2693 = vpop.permute.xlu0 %2692
    %2695 = vst.msk [vmem:[%s14 + $0x7] sm:$0x1] %vm664, %v2693
    %2696 = vst.msk [vmem:[%s15 - $0x1] sm:$0x2] %vm666, %v2693
    %2697 = vst.msk [vmem:[#allocation18 + $0x2] sm:$0x3] %vm1459, %v2693
    %2699 = vrot.lane.b32.xlu0 %v2684, 96
    %v2700 = vpop.permute.xlu0 %2699
    %2702 = vst.msk [vmem:[#allocation19 + $0x2] sm:$0x3] %vm1459, %v2700
    // Predicated region
    $region90: #{bilstm_parser_forward.1} parent=1 // pred_check
      _
    $region91: #{bilstm_parser_forward.1} parent=1 // pred_check_branch
      %2704 = sbr.rel (0) target = $region93
    $region92: #{bilstm_parser_forward.1} parent=1 // pred_region
      _
    $region93: #{bilstm_parser_forward.1} parent=1 // pred_fallthru
      _
    // Predicated region
    $region94: #{bilstm_parser_forward.1} parent=1 // pred_check
      _
    $region95: #{bilstm_parser_forward.1} parent=1 // pred_check_branch
      %2706 = sbr.rel (0) target = $region97
    $region96: #{bilstm_parser_forward.1} parent=1 // pred_region
      _
    $region97: #{bilstm_parser_forward.1} parent=1 // pred_fallthru
      _
    // Predicated region
    $region98: #{bilstm_parser_forward.1} parent=1 // pred_check
      _
    $region99: #{bilstm_parser_forward.1} parent=1 // pred_check_branch
      %2708 = sbr.rel (0) target = $region101
    $region100: #{bilstm_parser_forward.1} parent=1 // pred_region
      %s2710 = ssub.s32 64, 64
      %2711 = vsyncadd [#allocation6], %s2710
      %s2713 = sshll.u32 [#allocation18], 4
      %s2714 = int_to_ptr.vmem [resolvable:$true] %s2713
      %2716 = dma.vmem_to_hbm [thread:$0]  %s2714, 64, %s16, [#allocation6]
    $region101: #{bilstm_parser_forward.1} parent=1 // pred_fallthru
      _
    // Predicated region
    $region102: #{bilstm_parser_forward.1} parent=1 // pred_check
      _
    $region103: #{bilstm_parser_forward.1} parent=1 // pred_check_branch
      %2718 = sbr.rel (0) target = $region105
    $region104: #{bilstm_parser_forward.1} parent=1 // pred_region
      %s2720 = ssub.s32 64, 64
      %2721 = vsyncadd [#allocation20], %s2720
      %s2723 = sshll.u32 [#allocation19], 4
      %s2724 = int_to_ptr.vmem [resolvable:$true] %s2723
      %2726 = dma.vmem_to_hbm [thread:$0]  %s2724, 64, %s17, [#allocation20]
    $region105: #{bilstm_parser_forward.1} parent=1 // pred_fallthru
      _
    // Predicated region
    $region106: #{bilstm_parser_forward.1} parent=1 // pred_check
      _
    $region107: #{bilstm_parser_forward.1} parent=1 // pred_check_branch
      %2728 = sbr.rel (0) target = $region109
    $region108: #{bilstm_parser_forward.1} parent=1 // pred_region
      _
    $region109: #{bilstm_parser_forward.1} parent=1 // pred_fallthru
      _
    // Predicated region
    $region110: #{bilstm_parser_forward.1} parent=1 // pred_check
      _
    $region111: #{bilstm_parser_forward.1} parent=1 // pred_check_branch
      %2730 = sbr.rel (0) target = $region113
    $region112: #{bilstm_parser_forward.1} parent=1 // pred_region
      _
    $region113: #{bilstm_parser_forward.1} parent=1 // pred_fallthru
      _
    // Predicated region
    $region114: #{bilstm_parser_forward.1} parent=1 // pred_check
      _
    $region115: #{bilstm_parser_forward.1} parent=1 // pred_check_branch
      %2732 = sbr.rel (0) target = $region117
    $region116: #{bilstm_parser_forward.1} parent=1 // pred_region
      %2733 = dma.done [#allocation6], 64
    $region117: #{bilstm_parser_forward.1} parent=1 // pred_fallthru
      _
    // Predicated region
    $region118: #{bilstm_parser_forward.1} parent=1 // pred_check
      _
    $region119: #{bilstm_parser_forward.1} parent=1 // pred_check_branch
      %2735 = sbr.rel (0) target = $region121
    $region120: #{bilstm_parser_forward.1} parent=1 // pred_region
      %2736 = dma.done [#allocation20], 64
    $region121: #{bilstm_parser_forward.1} parent=1 // pred_fallthru
      _
    %2737 = vsyncpa [#allocation5], 1
    %2738 = vsyncpa [#allocation8], 1
    %2739 = vsyncpa [#allocation11], 1
    %2740 = vsyncpa [#allocation14], 1
    %2741 = vsyncpa [#allocation17], 1
    %2742 = vsyncpa [#allocation6], 1
    %2743 = vsyncpa [#allocation20], 1

</llo_original>
